<compile_context>
chip_gen: v7x
topology: tpu7x:2x2x1
jax: 0.10.0
libtpu: 0.0.40
codegen_flags: <defaults>
</compile_context>

<pallas_src>
import functools

import jax
import jax.numpy as jnp
import numpy as np
from jax import lax
from jax.experimental import pallas as pl
from jax.experimental.pallas import tpu as pltpu


# ----------------------------- in-kernel helpers -----------------------------

def _roll_wrap(x, shift, axis):
    """torch.roll / jnp.roll semantics with a static shift (slice + concat)."""
    n = x.shape[axis]
    s = shift % n
    if s == 0:
        return x
    lo = lax.slice_in_dim(x, n - s, n, axis=axis)
    hi = lax.slice_in_dim(x, 0, n - s, axis=axis)
    return jnp.concatenate([lo, hi], axis=axis)


def _erf(x):
    # Abramowitz-Stegun 7.1.26 polynomial (|err| < 1.5e-7), matching torch's
    # exact (erf-based) GELU.  Exact divide (not the approx EUP reciprocal) so
    # the polynomial accuracy is not swamped by ~1e-3 reciprocal error.
    a1, a2, a3, a4, a5 = 0.254829592, -0.284496736, 1.421413741, -1.453152027, 1.061405429
    p = 0.3275911
    ax = jnp.abs(x)
    t = 1.0 / (1.0 + p * ax)
    poly = ((((a5 * t + a4) * t + a3) * t + a2) * t + a1) * t
    y = 1.0 - poly * jnp.exp(-ax * ax)
    return jnp.where(x >= 0.0, y, -y)


def _gelu_exact(x):
    return 0.5 * x * (1.0 + _erf(x * 0.7071067811865476))


# --------------------------------- kernel ------------------------------------

def _mix_shift_kernel(x_ref, wlr_ref, blr_ref, wtd_ref, btd_ref,
                      w1_ref, b1_ref, w2_ref, b2_ref, gamma_ref,
                      o_ref, pad_lr, pad_td,
                      *, H, W, C, C_PAD, KMAX, eps, chunks, rows_per_tile):
    p = KMAX // 2
    Hp, Wp = H + 2 * p, W + 2 * p

    x = x_ref[0]                                        # (H, W, C_PAD) f32

    # ---- per-chunk torch.roll fused in-kernel (lane-masked where-select) ----
    ch_ids = lax.broadcasted_iota(jnp.int32, (1, 1, C_PAD), 2)

    def rolled_mix(axis):
        out = jnp.zeros((H, W, C_PAD), jnp.float32)
        for c0, cs, s in chunks:
            m = jnp.logical_and(ch_ids >= c0, ch_ids < c0 + cs)
            out = jnp.where(m, _roll_wrap(x, s, axis=axis), out)
        return out

    # ---- zero-haloed VMEM scratch per branch; taps become static ref views ---
    def fill(pad_ref, rolled):
        if p > 0:
            zrow = jnp.zeros((p, Wp, C_PAD), jnp.float32)
            zcol = jnp.zeros((Hp, p, C_PAD), jnp.float32)
            pad_ref[pl.ds(0, p), :, :] = zrow
            pad_ref[pl.ds(H + p, p), :, :] = zrow
            pad_ref[:, pl.ds(0, p), :] = zcol
            pad_ref[:, pl.ds(W + p, p), :] = zcol
        pad_ref[pl.ds(p, H), pl.ds(p, W), :] = rolled

    fill(pad_lr, rolled_mix(axis=1))                    # roll along W (left/right)
    fill(pad_td, rolled_mix(axis=0))                    # roll along H (top/down)

    # ---- weights (small; loaded once, live across the tile loop) ------------
    wlr = wlr_ref[...]                                  # (KMAX, KMAX, C_PAD) f32
    wtd = wtd_ref[...]
    bias = (blr_ref[...] + btd_ref[...]).reshape(1, 1, C_PAD)

    w1 = w1_ref[...]        # (C_PAD, HID_PAD) bf16, LayerNorm weight pre-folded
    b1 = b1_ref[...]        # (1, HID_PAD)     f32,  LayerNorm bias pre-folded
    w2 = w2_ref[...]        # (HID_PAD, C_PAD) bf16
    b2 = b2_ref[...]        # (1, C_PAD)       f32
    gamma = gamma_ref[...]  # (1, C_PAD)       f32

    R = rows_per_tile                                   # image rows per tile
    T = R * W                                           # tokens per tile
    n_tiles = H // R
    inv_c = 1.0 / C

    # Hoisted broadcasts (JAX does not CSE broadcast_in_dim inside the loop).
    bias_tile = jnp.broadcast_to(bias, (R, W, C_PAD)).astype(jnp.float32)
    if C_PAD != C:
        lane_ids = lax.broadcasted_iota(jnp.int32, (1, C_PAD), 1)
        cmask = lane_ids < C
    else:
        cmask = None

    # ---- fused per-tile pipeline: conv taps -> LN -> MLP -> residual store ---
    def tile_body(t, carry):
        r0 = pl.multiple_of(t * R, R)

        # depthwise mix-shift conv for this row tile; both branches in one acc
        acc = bias_tile
        for kh in range(KMAX):
            for kw in range(KMAX):
                lr_tap = pad_lr[pl.ds(r0 + kh, R), pl.ds(kw, W), :]
                td_tap = pad_td[pl.ds(r0 + kh, R), pl.ds(kw, W), :]
                acc = acc + wlr[kh, kw] * lr_tap + wtd[kh, kw] * td_tap
        y = acc.reshape(T, C_PAD)                       # padded lanes are exactly 0

        # LayerNorm over the true C channels (affine folded into w1/b1 offline)
        mu = jnp.sum(y, axis=-1, keepdims=True) * inv_c
        d = y - mu
        if cmask is not None:
            d = jnp.where(cmask, d, 0.0)
        var = jnp.sum(d * d, axis=-1, keepdims=True) * inv_c
        ln = (d * lax.rsqrt(var + eps)).astype(jnp.bfloat16)

        # pointwise MLP on the MXU (bf16 operands, f32 accumulation)
        h = jnp.dot(ln, w1, preferred_element_type=jnp.float32) + b1
        h = _gelu_exact(h)
        h = jnp.dot(h.astype(jnp.bfloat16), w2,
                    preferred_element_type=jnp.float32) + b2
        h = h * gamma

        res = x_ref[0, pl.ds(r0, R), :, :]              # residual (R, W, C_PAD)
        o_ref[0, pl.ds(r0, R), :, :] = res + h.reshape(R, W, C_PAD)
        return carry

    lax.fori_loop(0, n_tiles, tile_body, 0, unroll=min(2, n_tiles))


# --------------------------------- wrapper -----------------------------------

def _round_up(n, m):
    return ((n + m - 1) // m) * m


def _pick_rows_per_tile(H, W, target_tokens=256):
    """MLP/conv row-tile size in tokens: ~256 fills the 2x256 MXU on v6e/v7x.
    Use target_tokens=128-256 on v5e (4x128 MXU); larger only adds VMEM pressure."""
    best = 1
    for r in range(1, H + 1):
        if H % r == 0 and r * W <= target_tokens:
            best = r
    return best


def _pad_axis(a, axis, new):
    pad = new - a.shape[axis]
    if pad == 0:
        return a
    widths = [(0, 0)] * a.ndim
    widths[axis] = (0, pad)
    return jnp.pad(a, widths)


def mix_shift_block_nhwc(x, params, cfg):
    """NHWC core: x is (B, H, W, C).  Call this directly in a multi-block model
    to avoid per-block NCHW<->NHWC transposes (each is an HBM round trip)."""
    B, H, W, C = x.shape
    kmax = cfg["kmax"]
    p = kmax // 2
    Hp, Wp = H + 2 * p, W + 2 * p

    chunks, c0 = [], 0
    for cs, s in zip(cfg["chunk_size"], cfg["shift_dist"]):
        chunks.append((c0, int(cs), int(s)))
        c0 += cs
    chunks = tuple(chunks)

    hid = params["w1"].shape[1]
    C_PAD = _round_up(C, 128)
    HID_PAD = _round_up(hid, 128)

    # Fold LayerNorm affine into pwconv1 (offline); cast MXU operands to bf16.
    w1_eff = params["ln_w"].reshape(-1, 1) * params["w1"]
    b1_eff = (params["ln_b"] @ params["w1"] + params["b1"]).astype(jnp.float32)

    # Lane-pad channels / hidden to multiples of 128 (lane-dense stores, full MXU
    # K/N).  Padded lanes get zero weights & biases so they stay exactly 0.
    x_p = _pad_axis(x.astype(jnp.float32), 3, C_PAD)
    w_lr = _pad_axis(params["w_lr"], 2, C_PAD)
    w_td = _pad_axis(params["w_td"], 2, C_PAD)
    b_lr = _pad_axis(params["b_lr"], 1, C_PAD)
    b_td = _pad_axis(params["b_td"], 1, C_PAD)
    w1_p = _pad_axis(_pad_axis(w1_eff, 0, C_PAD), 1, HID_PAD).astype(jnp.bfloat16)
    b1_p = _pad_axis(b1_eff, 1, HID_PAD)
    w2_p = _pad_axis(_pad_axis(params["w2"], 0, HID_PAD), 1, C_PAD).astype(jnp.bfloat16)
    b2_p = _pad_axis(params["b2"], 1, C_PAD)
    gamma_p = _pad_axis(params["gamma"], 1, C_PAD)

    rows_per_tile = _pick_rows_per_tile(H, W)
    T = rows_per_tile * W

    kernel = functools.partial(
        _mix_shift_kernel, H=H, W=W, C=C, C_PAD=C_PAD, KMAX=kmax, eps=1e-6,
        chunks=chunks, rows_per_tile=rows_per_tile)

    weights = [w_lr, b_lr, w_td, b_td, w1_p, b1_p, w2_p, b2_p, gamma_p]

    def full_spec(a):
        nd = a.ndim
        # TODO(synk): pipeline_mode=pl.Buffered(1) here (constant block index
        # across the B grid => double-buffering only doubles weight VMEM).
        return pl.BlockSpec(tuple(a.shape), lambda b: (0,) * nd)

    # VMEM budget: double-buffered in/out image blocks + the two padded conv
    # scratches + weights + per-tile temporaries (cap at v7x's 64 MiB physical).
    img_bytes = H * W * C_PAD * 4
    pad_bytes = Hp * Wp * C_PAD * 4
    w_bytes = sum(int(np.prod(a.shape)) * a.dtype.itemsize for a in weights)
    tile_bytes = 8 * T * max(C_PAD, HID_PAD) * 4
    vmem_need = 2 * 2 * img_bytes + 2 * pad_bytes + 2 * w_bytes + tile_bytes + (4 << 20)
    vmem_limit = int(min(max(vmem_need, 8 << 20), 64 << 20))

    out = pl.pallas_call(
        kernel,
        out_shape=jax.ShapeDtypeStruct((B, H, W, C_PAD), jnp.float32),
        grid=(B,),
        in_specs=[pl.BlockSpec((1, H, W, C_PAD), lambda b: (b, 0, 0, 0))]
                + [full_spec(a) for a in weights],
        out_specs=pl.BlockSpec((1, H, W, C_PAD), lambda b: (b, 0, 0, 0)),
        scratch_shapes=[pltpu.VMEM((Hp, Wp, C_PAD), jnp.float32),
                        pltpu.VMEM((Hp, Wp, C_PAD), jnp.float32)],
        compiler_params=pltpu.CompilerParams(
            dimension_semantics=("parallel",),
            vmem_limit_bytes=vmem_limit),
    )(x_p, *weights)

    return out[..., :C] if C_PAD != C else out


def mix_shift_block(x_nchw, params, cfg):
    """PyTorch-layout adapter: (B, C, H, W) in / out (single-block demo)."""
    x = jnp.transpose(x_nchw, (0, 2, 3, 1))
    y = mix_shift_block_nhwc(x, params, cfg)
    return jnp.transpose(y, (0, 3, 1, 2))


# ----------------------------- parameter setup --------------------------------

def init_params(key, dim, chunk_size, mix_size, kmax, mlp_ratio, gamma_init):
    hid = int(mlp_ratio * dim)
    n_chunks = len(chunk_size)
    keys = jax.random.split(key, 6 + 2 * n_chunks)

    dw_lr, dw_td = [], []                                   # per-chunk (cs, K, K) for the reference
    w_lr_packed = np.zeros((kmax, kmax, dim), np.float32)   # packed, zero-padded & centered
    w_td_packed = np.zeros((kmax, kmax, dim), np.float32)
    c0 = 0
    for i, (cs, K) in enumerate(zip(chunk_size, mix_size)):
        wl = np.asarray(jax.random.normal(keys[2 * i], (cs, K, K), jnp.float32)) * 0.2
        wt = np.asarray(jax.random.normal(keys[2 * i + 1], (cs, K, K), jnp.float32)) * 0.2
        dw_lr.append(jnp.asarray(wl))
        dw_td.append(jnp.asarray(wt))
        off = (kmax - K) // 2
        w_lr_packed[off:off + K, off:off + K, c0:c0 + cs] = np.transpose(wl, (1, 2, 0))
        w_td_packed[off:off + K, off:off + K, c0:c0 + cs] = np.transpose(wt, (1, 2, 0))
        c0 += cs

    k = 2 * n_chunks
    params = dict(
        w_lr=jnp.asarray(w_lr_packed),
        w_td=jnp.asarray(w_td_packed),
        b_lr=jax.random.normal(keys[k + 0], (1, dim), jnp.float32) * 0.1,
        b_td=jax.random.normal(keys[k + 1], (1, dim), jnp.float32) * 0.1,
        ln_w=jnp.ones((1, dim), jnp.float32),
        ln_b=jnp.zeros((1, dim), jnp.float32),
        w1=jax.random.normal(keys[k + 2], (dim, hid), jnp.float32) / np.sqrt(dim),
        b1=jax.random.normal(keys[k + 3], (1, hid), jnp.float32) * 0.05,
        w2=jax.random.normal(keys[k + 4], (hid, dim), jnp.float32) / np.sqrt(hid),
        b2=jax.random.normal(keys[k + 5], (1, dim), jnp.float32) * 0.05,
        gamma=jnp.full((1, dim), gamma_init, jnp.float32),
        dw_lr=dw_lr,
        dw_td=dw_td,
    )
    return params


# ------------------------------ pure-JAX reference ----------------------------

def reference(x, params, cfg):
    parts_lr, parts_td = [], []
    c0 = 0
    for i, cs in enumerate(cfg["chunk_size"]):
        xc = x[:, c0:c0 + cs]
        shift = cfg["shift_dist"][i]
        K = cfg["mix_size"][i]
        pad = K // 2
        xlr = jnp.roll(xc, shift, axis=3)
        xtd = jnp.roll(xc, shift, axis=2)
        wl = params["dw_lr"][i][:, None, :, :]   # (cs, 1, K, K)
        wt = params["dw_td"][i][:, None, :, :]
        ylr = jax.lax.conv_general_dilated(
            xlr, wl, (1, 1), [(pad, pad), (pad, pad)],
            feature_group_count=cs, dimension_numbers=("NCHW", "OIHW", "NCHW"))
        ytd = jax.lax.conv_general_dilated(
            xtd, wt, (1, 1), [(pad, pad), (pad, pad)],
            feature_group_count=cs, dimension_numbers=("NCHW", "OIHW", "NCHW"))
        ylr = ylr + params["b_lr"][0, c0:c0 + cs][None, :, None, None]
        ytd = ytd + params["b_td"][0, c0:c0 + cs][None, :, None, None]
        parts_lr.append(ylr)
        parts_td.append(ytd)
        c0 += cs
    y = jnp.concatenate(parts_lr, 1) + jnp.concatenate(parts_td, 1)
    y = jnp.transpose(y, (0, 2, 3, 1))
    mu = y.mean(-1, keepdims=True)
    var = ((y - mu) ** 2).mean(-1, keepdims=True)
    ln = (y - mu) / jnp.sqrt(var + 1e-6) * params["ln_w"][0] + params["ln_b"][0]
    h = ln @ params["w1"] + params["b1"][0]
    h = jax.nn.gelu(h, approximate=False)
    h = h @ params["w2"] + params["b2"][0]
    h = h * params["gamma"][0]
    return x + jnp.transpose(h, (0, 3, 1, 2))


# ----------------------------------- main --------------------------------------

if __name__ == "__main__":
    B, dim, H, W = 2, 4, 16, 16
    shift_size = 2
    shift_dist = [-1, 1]
    mix_size = [1, 3]
    mlp_ratio = 4

    # chunk sizes exactly as torch.chunk(torch.zeros(dim), shift_size)
    base = -(-dim // shift_size)
    chunk_size, rem = [], dim
    while rem > 0:
        c = min(base, rem)
        chunk_size.append(c)
        rem -= c

    kmax = max(mix_size)  # odd
    cfg = dict(chunk_size=chunk_size, shift_dist=shift_dist, mix_size=mix_size, kmax=kmax)

    key = jax.random.PRNGKey(0)
    kx, kp = jax.random.split(key)
    x = jax.random.normal(kx, (B, dim, H, W), jnp.float32)
    # layer_scale_init_value chosen as 0.1 (constructor arg) so the MLP branch
    # contributes visibly; the module default is 1e-6.
    params = init_params(kp, dim, chunk_size, mix_size, kmax, mlp_ratio, gamma_init=0.1)

    out = mix_shift_block(x, params, cfg)
    out = jax.block_until_ready(out)

    ref = reference(x, params, cfg)
    # bf16 MXU operands (with f32 accumulation) introduce ~1e-3..1e-2 relative
    # error on the MLP branch; conv / LayerNorm / GELU and the residual stay f32.
    np.testing.assert_allclose(np.asarray(out), np.asarray(ref), rtol=1e-2, atol=1e-2)
    print("KERNEL_OK")
</pallas_src>

<mosaic_0001>
module attributes {stable_mosaic.version = 11 : i64} {
  func.func @_mix_shift_kernel(%arg0: i32, %arg1: memref<1x16x16x128xf32, #tpu.memory_space<vmem>>, %arg2: memref<3x3x128xf32, #tpu.memory_space<vmem>>, %arg3: memref<1x128xf32, #tpu.memory_space<vmem>>, %arg4: memref<3x3x128xf32, #tpu.memory_space<vmem>>, %arg5: memref<1x128xf32, #tpu.memory_space<vmem>>, %arg6: memref<128x128xbf16, #tpu.memory_space<vmem>>, %arg7: memref<1x128xf32, #tpu.memory_space<vmem>>, %arg8: memref<128x128xbf16, #tpu.memory_space<vmem>>, %arg9: memref<1x128xf32, #tpu.memory_space<vmem>>, %arg10: memref<1x128xf32, #tpu.memory_space<vmem>>, %arg11: memref<1x16x16x128xf32, #tpu.memory_space<vmem>>, %arg12: memref<18x18x128xf32, #tpu.memory_space<vmem>>, %arg13: memref<18x18x128xf32, #tpu.memory_space<vmem>>) attributes {dimension_semantics = [#tpu.dimension_semantics<parallel>], iteration_bounds = array<i64: 2>, scalar_prefetch = 0 : i64, scratch_operands = 2 : i64, tpu.core_type = #tpu.core_type<tc>, window_params = [{transform_indices = @transform_0, window_bounds = array<i64: 1, 16, 16, 128>}, {pipeline_mode = #tpu.pipeline_mode<synchronous>, transform_indices = @transform_1, window_bounds = array<i64: 3, 3, 128>}, {pipeline_mode = #tpu.pipeline_mode<synchronous>, transform_indices = @transform_2, window_bounds = array<i64: 1, 128>}, {pipeline_mode = #tpu.pipeline_mode<synchronous>, transform_indices = @transform_3, window_bounds = array<i64: 3, 3, 128>}, {pipeline_mode = #tpu.pipeline_mode<synchronous>, transform_indices = @transform_4, window_bounds = array<i64: 1, 128>}, {pipeline_mode = #tpu.pipeline_mode<synchronous>, transform_indices = @transform_5, window_bounds = array<i64: 128, 128>}, {pipeline_mode = #tpu.pipeline_mode<synchronous>, transform_indices = @transform_6, window_bounds = array<i64: 1, 128>}, {pipeline_mode = #tpu.pipeline_mode<synchronous>, transform_indices = @transform_7, window_bounds = array<i64: 128, 128>}, {pipeline_mode = #tpu.pipeline_mode<synchronous>, transform_indices = @transform_8, window_bounds = array<i64: 1, 128>}, {pipeline_mode = #tpu.pipeline_mode<synchronous>, transform_indices = @transform_9, window_bounds = array<i64: 1, 128>}, {transform_indices = @transform_10, window_bounds = array<i64: 1, 16, 16, 128>}]} {
    %c0 = arith.constant 0 : index
    %c0_0 = arith.constant 0 : index
    %c0_1 = arith.constant 0 : index
    %c0_2 = arith.constant 0 : index
    %0 = vector.load %arg1[%c0, %c0_0, %c0_1, %c0_2] : memref<1x16x16x128xf32, #tpu.memory_space<vmem>>, vector<1x16x16x128xf32>
    %1 = vector.shape_cast %0 : vector<1x16x16x128xf32> to vector<16x16x128xf32>
    %2 = tpu.iota {dimensions = array<i32: 2>} : vector<1x1x128xi32>
    %cst = arith.constant 0.000000e+00 : f32
    %3 = vector.broadcast %cst : f32 to vector<16x16x128xf32>
    %c0_i32 = arith.constant 0 : i32
    %4 = vector.broadcast %c0_i32 : i32 to vector<1x1x128xi32>
    %5 = arith.cmpi sge, %2, %4 : vector<1x1x128xi32>
    %c2_i32 = arith.constant 2 : i32
    %6 = vector.broadcast %c2_i32 : i32 to vector<1x1x128xi32>
    %7 = arith.cmpi slt, %2, %6 : vector<1x1x128xi32>
    %8 = arith.andi %5, %7 : vector<1x1x128xi1>
    %9 = vector.extract_strided_slice %1 {offsets = [0, 1, 0], sizes = [16, 15, 128], strides = [1, 1, 1]} : vector<16x16x128xf32> to vector<16x15x128xf32>
    %10 = vector.extract_strided_slice %1 {offsets = [0, 0, 0], sizes = [16, 1, 128], strides = [1, 1, 1]} : vector<16x16x128xf32> to vector<16x1x128xf32>
    %11 = tpu.concatenate %9, %10 in 1 : vector<16x15x128xf32>, vector<16x1x128xf32> -> vector<16x16x128xf32>
    %12 = vector.shape_cast %8 : vector<1x1x128xi1> to vector<1x1x128xi1>
    %13 = vector.broadcast %12 : vector<1x1x128xi1> to vector<16x16x128xi1>
    %14 = arith.select %13, %11, %3 : vector<16x16x128xi1>, vector<16x16x128xf32>
    %c2_i32_3 = arith.constant 2 : i32
    %15 = vector.broadcast %c2_i32_3 : i32 to vector<1x1x128xi32>
    %16 = arith.cmpi sge, %2, %15 : vector<1x1x128xi32>
    %c4_i32 = arith.constant 4 : i32
    %17 = vector.broadcast %c4_i32 : i32 to vector<1x1x128xi32>
    %18 = arith.cmpi slt, %2, %17 : vector<1x1x128xi32>
    %19 = arith.andi %16, %18 : vector<1x1x128xi1>
    %20 = vector.extract_strided_slice %1 {offsets = [0, 15, 0], sizes = [16, 1, 128], strides = [1, 1, 1]} : vector<16x16x128xf32> to vector<16x1x128xf32>
    %21 = vector.extract_strided_slice %1 {offsets = [0, 0, 0], sizes = [16, 15, 128], strides = [1, 1, 1]} : vector<16x16x128xf32> to vector<16x15x128xf32>
    %22 = tpu.concatenate %20, %21 in 1 : vector<16x1x128xf32>, vector<16x15x128xf32> -> vector<16x16x128xf32>
    %23 = vector.shape_cast %19 : vector<1x1x128xi1> to vector<1x1x128xi1>
    %24 = vector.broadcast %23 : vector<1x1x128xi1> to vector<16x16x128xi1>
    %25 = arith.select %24, %22, %14 : vector<16x16x128xi1>, vector<16x16x128xf32>
    %cst_4 = arith.constant 0.000000e+00 : f32
    %26 = vector.broadcast %cst_4 : f32 to vector<1x18x128xf32>
    %cst_5 = arith.constant 0.000000e+00 : f32
    %27 = vector.broadcast %cst_5 : f32 to vector<18x1x128xf32>
    %c0_6 = arith.constant 0 : index
    %c0_7 = arith.constant 0 : index
    %c0_8 = arith.constant 0 : index
    %28 = vector.load %arg12[%c0_6, %c0_7, %c0_8] : memref<18x18x128xf32, #tpu.memory_space<vmem>>, vector<1x18x128xf32>
    tpu.vector_store %arg12[%c0_6, %c0_7, %c0_8], %26 {strides = array<i32>} : memref<18x18x128xf32, #tpu.memory_space<vmem>>, vector<1x18x128xf32>,
    %c17 = arith.constant 17 : index
    %c0_9 = arith.constant 0 : index
    %c0_10 = arith.constant 0 : index
    %29 = vector.load %arg12[%c17, %c0_9, %c0_10] : memref<18x18x128xf32, #tpu.memory_space<vmem>>, vector<1x18x128xf32>
    tpu.vector_store %arg12[%c17, %c0_9, %c0_10], %26 {strides = array<i32>} : memref<18x18x128xf32, #tpu.memory_space<vmem>>, vector<1x18x128xf32>,
    %c0_11 = arith.constant 0 : index
    %c0_12 = arith.constant 0 : index
    %c0_13 = arith.constant 0 : index
    %30 = vector.load %arg12[%c0_11, %c0_12, %c0_13] : memref<18x18x128xf32, #tpu.memory_space<vmem>>, vector<18x1x128xf32>
    tpu.vector_store %arg12[%c0_11, %c0_12, %c0_13], %27 {strides = array<i32>} : memref<18x18x128xf32, #tpu.memory_space<vmem>>, vector<18x1x128xf32>,
    %c0_14 = arith.constant 0 : index
    %c17_15 = arith.constant 17 : index
    %c0_16 = arith.constant 0 : index
    %31 = vector.load %arg12[%c0_14, %c17_15, %c0_16] : memref<18x18x128xf32, #tpu.memory_space<vmem>>, vector<18x1x128xf32>
    tpu.vector_store %arg12[%c0_14, %c17_15, %c0_16], %27 {strides = array<i32>} : memref<18x18x128xf32, #tpu.memory_space<vmem>>, vector<18x1x128xf32>,
    %c1 = arith.constant 1 : index
    %c1_17 = arith.constant 1 : index
    %c0_18 = arith.constant 0 : index
    %32 = vector.load %arg12[%c1, %c1_17, %c0_18] : memref<18x18x128xf32, #tpu.memory_space<vmem>>, vector<16x16x128xf32>
    tpu.vector_store %arg12[%c1, %c1_17, %c0_18], %25 {strides = array<i32>} : memref<18x18x128xf32, #tpu.memory_space<vmem>>, vector<16x16x128xf32>,
    %cst_19 = arith.constant 0.000000e+00 : f32
    %33 = vector.broadcast %cst_19 : f32 to vector<16x16x128xf32>
    %c0_i32_20 = arith.constant 0 : i32
    %34 = vector.broadcast %c0_i32_20 : i32 to vector<1x1x128xi32>
    %35 = arith.cmpi sge, %2, %34 : vector<1x1x128xi32>
    %c2_i32_21 = arith.constant 2 : i32
    %36 = vector.broadcast %c2_i32_21 : i32 to vector<1x1x128xi32>
    %37 = arith.cmpi slt, %2, %36 : vector<1x1x128xi32>
    %38 = arith.andi %35, %37 : vector<1x1x128xi1>
    %39 = vector.extract_strided_slice %1 {offsets = [1, 0, 0], sizes = [15, 16, 128], strides = [1, 1, 1]} : vector<16x16x128xf32> to vector<15x16x128xf32>
    %40 = vector.extract_strided_slice %1 {offsets = [0, 0, 0], sizes = [1, 16, 128], strides = [1, 1, 1]} : vector<16x16x128xf32> to vector<1x16x128xf32>
    %41 = tpu.concatenate %39, %40 in 0 : vector<15x16x128xf32>, vector<1x16x128xf32> -> vector<16x16x128xf32>
    %42 = vector.shape_cast %38 : vector<1x1x128xi1> to vector<1x1x128xi1>
    %43 = vector.broadcast %42 : vector<1x1x128xi1> to vector<16x16x128xi1>
    %44 = arith.select %43, %41, %33 : vector<16x16x128xi1>, vector<16x16x128xf32>
    %c2_i32_22 = arith.constant 2 : i32
    %45 = vector.broadcast %c2_i32_22 : i32 to vector<1x1x128xi32>
    %46 = arith.cmpi sge, %2, %45 : vector<1x1x128xi32>
    %c4_i32_23 = arith.constant 4 : i32
    %47 = vector.broadcast %c4_i32_23 : i32 to vector<1x1x128xi32>
    %48 = arith.cmpi slt, %2, %47 : vector<1x1x128xi32>
    %49 = arith.andi %46, %48 : vector<1x1x128xi1>
    %50 = vector.extract_strided_slice %1 {offsets = [15, 0, 0], sizes = [1, 16, 128], strides = [1, 1, 1]} : vector<16x16x128xf32> to vector<1x16x128xf32>
    %51 = vector.extract_strided_slice %1 {offsets = [0, 0, 0], sizes = [15, 16, 128], strides = [1, 1, 1]} : vector<16x16x128xf32> to vector<15x16x128xf32>
    %52 = tpu.concatenate %50, %51 in 0 : vector<1x16x128xf32>, vector<15x16x128xf32> -> vector<16x16x128xf32>
    %53 = vector.shape_cast %49 : vector<1x1x128xi1> to vector<1x1x128xi1>
    %54 = vector.broadcast %53 : vector<1x1x128xi1> to vector<16x16x128xi1>
    %55 = arith.select %54, %52, %44 : vector<16x16x128xi1>, vector<16x16x128xf32>
    %cst_24 = arith.constant 0.000000e+00 : f32
    %56 = vector.broadcast %cst_24 : f32 to vector<1x18x128xf32>
    %cst_25 = arith.constant 0.000000e+00 : f32
    %57 = vector.broadcast %cst_25 : f32 to vector<18x1x128xf32>
    %c0_26 = arith.constant 0 : index
    %c0_27 = arith.constant 0 : index
    %c0_28 = arith.constant 0 : index
    %58 = vector.load %arg13[%c0_26, %c0_27, %c0_28] : memref<18x18x128xf32, #tpu.memory_space<vmem>>, vector<1x18x128xf32>
    tpu.vector_store %arg13[%c0_26, %c0_27, %c0_28], %56 {strides = array<i32>} : memref<18x18x128xf32, #tpu.memory_space<vmem>>, vector<1x18x128xf32>,
    %c17_29 = arith.constant 17 : index
    %c0_30 = arith.constant 0 : index
    %c0_31 = arith.constant 0 : index
    %59 = vector.load %arg13[%c17_29, %c0_30, %c0_31] : memref<18x18x128xf32, #tpu.memory_space<vmem>>, vector<1x18x128xf32>
    tpu.vector_store %arg13[%c17_29, %c0_30, %c0_31], %56 {strides = array<i32>} : memref<18x18x128xf32, #tpu.memory_space<vmem>>, vector<1x18x128xf32>,
    %c0_32 = arith.constant 0 : index
    %c0_33 = arith.constant 0 : index
    %c0_34 = arith.constant 0 : index
    %60 = vector.load %arg13[%c0_32, %c0_33, %c0_34] : memref<18x18x128xf32, #tpu.memory_space<vmem>>, vector<18x1x128xf32>
    tpu.vector_store %arg13[%c0_32, %c0_33, %c0_34], %57 {strides = array<i32>} : memref<18x18x128xf32, #tpu.memory_space<vmem>>, vector<18x1x128xf32>,
    %c0_35 = arith.constant 0 : index
    %c17_36 = arith.constant 17 : index
    %c0_37 = arith.constant 0 : index
    %61 = vector.load %arg13[%c0_35, %c17_36, %c0_37] : memref<18x18x128xf32, #tpu.memory_space<vmem>>, vector<18x1x128xf32>
    tpu.vector_store %arg13[%c0_35, %c17_36, %c0_37], %57 {strides = array<i32>} : memref<18x18x128xf32, #tpu.memory_space<vmem>>, vector<18x1x128xf32>,
    %c1_38 = arith.constant 1 : index
    %c1_39 = arith.constant 1 : index
    %c0_40 = arith.constant 0 : index
    %62 = vector.load %arg13[%c1_38, %c1_39, %c0_40] : memref<18x18x128xf32, #tpu.memory_space<vmem>>, vector<16x16x128xf32>
    tpu.vector_store %arg13[%c1_38, %c1_39, %c0_40], %55 {strides = array<i32>} : memref<18x18x128xf32, #tpu.memory_space<vmem>>, vector<16x16x128xf32>,
    %c0_41 = arith.constant 0 : index
    %c0_42 = arith.constant 0 : index
    %c0_43 = arith.constant 0 : index
    %63 = vector.load %arg2[%c0_41, %c0_42, %c0_43] : memref<3x3x128xf32, #tpu.memory_space<vmem>>, vector<3x3x128xf32>
    %c0_44 = arith.constant 0 : index
    %c0_45 = arith.constant 0 : index
    %c0_46 = arith.constant 0 : index
    %64 = vector.load %arg4[%c0_44, %c0_45, %c0_46] : memref<3x3x128xf32, #tpu.memory_space<vmem>>, vector<3x3x128xf32>
    %c0_47 = arith.constant 0 : index
    %c0_48 = arith.constant 0 : index
    %65 = vector.load %arg3[%c0_47, %c0_48] : memref<1x128xf32, #tpu.memory_space<vmem>>, vector<1x128xf32>
    %c0_49 = arith.constant 0 : index
    %c0_50 = arith.constant 0 : index
    %66 = vector.load %arg5[%c0_49, %c0_50] : memref<1x128xf32, #tpu.memory_space<vmem>>, vector<1x128xf32>
    %67 = arith.addf %65, %66 : vector<1x128xf32>
    %68 = vector.shape_cast %67 : vector<1x128xf32> to vector<1x1x128xf32>
    %c0_51 = arith.constant 0 : index
    %c0_52 = arith.constant 0 : index
    %69 = vector.load %arg6[%c0_51, %c0_52] : memref<128x128xbf16, #tpu.memory_space<vmem>>, vector<128x128xbf16>
    %c0_53 = arith.constant 0 : index
    %c0_54 = arith.constant 0 : index
    %70 = vector.load %arg7[%c0_53, %c0_54] : memref<1x128xf32, #tpu.memory_space<vmem>>, vector<1x128xf32>
    %c0_55 = arith.constant 0 : index
    %c0_56 = arith.constant 0 : index
    %71 = vector.load %arg8[%c0_55, %c0_56] : memref<128x128xbf16, #tpu.memory_space<vmem>>, vector<128x128xbf16>
    %c0_57 = arith.constant 0 : index
    %c0_58 = arith.constant 0 : index
    %72 = vector.load %arg9[%c0_57, %c0_58] : memref<1x128xf32, #tpu.memory_space<vmem>>, vector<1x128xf32>
    %c0_59 = arith.constant 0 : index
    %c0_60 = arith.constant 0 : index
    %73 = vector.load %arg10[%c0_59, %c0_60] : memref<1x128xf32, #tpu.memory_space<vmem>>, vector<1x128xf32>
    %74 = vector.shape_cast %68 : vector<1x1x128xf32> to vector<1x1x128xf32>
    %75 = vector.broadcast %74 : vector<1x1x128xf32> to vector<16x16x128xf32>
    %76 = tpu.iota {dimensions = array<i32: 1>} : vector<1x128xi32>
    %c4_i32_61 = arith.constant 4 : i32
    %77 = vector.broadcast %c4_i32_61 : i32 to vector<1x128xi32>
    %78 = arith.cmpi slt, %76, %77 : vector<1x128xi32>
    %c0_i32_62 = arith.constant 0 : i32
    %c16_i32 = arith.constant 16 : i32
    %79 = arith.muli %c0_i32_62, %c16_i32 : i32
    %80 = tpu.assume_multiple %79, 16 : i32
    %c0_i32_63 = arith.constant 0 : i32
    %81 = arith.addi %80, %c0_i32_63 : i32
    %82 = arith.index_cast %81 : i32 to index
    %c0_64 = arith.constant 0 : index
    %c0_65 = arith.constant 0 : index
    %83 = vector.load %arg12[%82, %c0_64, %c0_65] : memref<18x18x128xf32, #tpu.memory_space<vmem>>, vector<16x16x128xf32>
    %c0_i32_66 = arith.constant 0 : i32
    %84 = arith.addi %80, %c0_i32_66 : i32
    %85 = arith.index_cast %84 : i32 to index
    %c0_67 = arith.constant 0 : index
    %c0_68 = arith.constant 0 : index
    %86 = vector.load %arg13[%85, %c0_67, %c0_68] : memref<18x18x128xf32, #tpu.memory_space<vmem>>, vector<16x16x128xf32>
    %87 = vector.extract_strided_slice %63 {offsets = [0, 0, 0], sizes = [1, 1, 128], strides = [1, 1, 1]} : vector<3x3x128xf32> to vector<1x1x128xf32>
    %88 = vector.shape_cast %87 : vector<1x1x128xf32> to vector<128xf32>
    %89 = vector.shape_cast %88 : vector<128xf32> to vector<1x1x128xf32>
    %90 = vector.broadcast %89 : vector<1x1x128xf32> to vector<16x16x128xf32>
    %91 = arith.mulf %90, %83 : vector<16x16x128xf32>
    %92 = arith.addf %75, %91 : vector<16x16x128xf32>
    %93 = vector.extract_strided_slice %64 {offsets = [0, 0, 0], sizes = [1, 1, 128], strides = [1, 1, 1]} : vector<3x3x128xf32> to vector<1x1x128xf32>
    %94 = vector.shape_cast %93 : vector<1x1x128xf32> to vector<128xf32>
    %95 = vector.shape_cast %94 : vector<128xf32> to vector<1x1x128xf32>
    %96 = vector.broadcast %95 : vector<1x1x128xf32> to vector<16x16x128xf32>
    %97 = arith.mulf %96, %86 : vector<16x16x128xf32>
    %98 = arith.addf %92, %97 : vector<16x16x128xf32>
    %c0_i32_69 = arith.constant 0 : i32
    %99 = arith.addi %80, %c0_i32_69 : i32
    %100 = arith.index_cast %99 : i32 to index
    %c1_70 = arith.constant 1 : index
    %c0_71 = arith.constant 0 : index
    %101 = vector.load %arg12[%100, %c1_70, %c0_71] : memref<18x18x128xf32, #tpu.memory_space<vmem>>, vector<16x16x128xf32>
    %c0_i32_72 = arith.constant 0 : i32
    %102 = arith.addi %80, %c0_i32_72 : i32
    %103 = arith.index_cast %102 : i32 to index
    %c1_73 = arith.constant 1 : index
    %c0_74 = arith.constant 0 : index
    %104 = vector.load %arg13[%103, %c1_73, %c0_74] : memref<18x18x128xf32, #tpu.memory_space<vmem>>, vector<16x16x128xf32>
    %105 = vector.extract_strided_slice %63 {offsets = [0, 1, 0], sizes = [1, 1, 128], strides = [1, 1, 1]} : vector<3x3x128xf32> to vector<1x1x128xf32>
    %106 = vector.shape_cast %105 : vector<1x1x128xf32> to vector<128xf32>
    %107 = vector.shape_cast %106 : vector<128xf32> to vector<1x1x128xf32>
    %108 = vector.broadcast %107 : vector<1x1x128xf32> to vector<16x16x128xf32>
    %109 = arith.mulf %108, %101 : vector<16x16x128xf32>
    %110 = arith.addf %98, %109 : vector<16x16x128xf32>
    %111 = vector.extract_strided_slice %64 {offsets = [0, 1, 0], sizes = [1, 1, 128], strides = [1, 1, 1]} : vector<3x3x128xf32> to vector<1x1x128xf32>
    %112 = vector.shape_cast %111 : vector<1x1x128xf32> to vector<128xf32>
    %113 = vector.shape_cast %112 : vector<128xf32> to vector<1x1x128xf32>
    %114 = vector.broadcast %113 : vector<1x1x128xf32> to vector<16x16x128xf32>
    %115 = arith.mulf %114, %104 : vector<16x16x128xf32>
    %116 = arith.addf %110, %115 : vector<16x16x128xf32>
    %c0_i32_75 = arith.constant 0 : i32
    %117 = arith.addi %80, %c0_i32_75 : i32
    %118 = arith.index_cast %117 : i32 to index
    %c2 = arith.constant 2 : index
    %c0_76 = arith.constant 0 : index
    %119 = vector.load %arg12[%118, %c2, %c0_76] : memref<18x18x128xf32, #tpu.memory_space<vmem>>, vector<16x16x128xf32>
    %c0_i32_77 = arith.constant 0 : i32
    %120 = arith.addi %80, %c0_i32_77 : i32
    %121 = arith.index_cast %120 : i32 to index
    %c2_78 = arith.constant 2 : index
    %c0_79 = arith.constant 0 : index
    %122 = vector.load %arg13[%121, %c2_78, %c0_79] : memref<18x18x128xf32, #tpu.memory_space<vmem>>, vector<16x16x128xf32>
    %123 = vector.extract_strided_slice %63 {offsets = [0, 2, 0], sizes = [1, 1, 128], strides = [1, 1, 1]} : vector<3x3x128xf32> to vector<1x1x128xf32>
    %124 = vector.shape_cast %123 : vector<1x1x128xf32> to vector<128xf32>
    %125 = vector.shape_cast %124 : vector<128xf32> to vector<1x1x128xf32>
    %126 = vector.broadcast %125 : vector<1x1x128xf32> to vector<16x16x128xf32>
    %127 = arith.mulf %126, %119 : vector<16x16x128xf32>
    %128 = arith.addf %116, %127 : vector<16x16x128xf32>
    %129 = vector.extract_strided_slice %64 {offsets = [0, 2, 0], sizes = [1, 1, 128], strides = [1, 1, 1]} : vector<3x3x128xf32> to vector<1x1x128xf32>
    %130 = vector.shape_cast %129 : vector<1x1x128xf32> to vector<128xf32>
    %131 = vector.shape_cast %130 : vector<128xf32> to vector<1x1x128xf32>
    %132 = vector.broadcast %131 : vector<1x1x128xf32> to vector<16x16x128xf32>
    %133 = arith.mulf %132, %122 : vector<16x16x128xf32>
    %134 = arith.addf %128, %133 : vector<16x16x128xf32>
    %c1_i32 = arith.constant 1 : i32
    %135 = arith.addi %80, %c1_i32 : i32
    %136 = arith.index_cast %135 : i32 to index
    %c0_80 = arith.constant 0 : index
    %c0_81 = arith.constant 0 : index
    %137 = vector.load %arg12[%136, %c0_80, %c0_81] : memref<18x18x128xf32, #tpu.memory_space<vmem>>, vector<16x16x128xf32>
    %c1_i32_82 = arith.constant 1 : i32
    %138 = arith.addi %80, %c1_i32_82 : i32
    %139 = arith.index_cast %138 : i32 to index
    %c0_83 = arith.constant 0 : index
    %c0_84 = arith.constant 0 : index
    %140 = vector.load %arg13[%139, %c0_83, %c0_84] : memref<18x18x128xf32, #tpu.memory_space<vmem>>, vector<16x16x128xf32>
    %141 = vector.extract_strided_slice %63 {offsets = [1, 0, 0], sizes = [1, 1, 128], strides = [1, 1, 1]} : vector<3x3x128xf32> to vector<1x1x128xf32>
    %142 = vector.shape_cast %141 : vector<1x1x128xf32> to vector<128xf32>
    %143 = vector.shape_cast %142 : vector<128xf32> to vector<1x1x128xf32>
    %144 = vector.broadcast %143 : vector<1x1x128xf32> to vector<16x16x128xf32>
    %145 = arith.mulf %144, %137 : vector<16x16x128xf32>
    %146 = arith.addf %134, %145 : vector<16x16x128xf32>
    %147 = vector.extract_strided_slice %64 {offsets = [1, 0, 0], sizes = [1, 1, 128], strides = [1, 1, 1]} : vector<3x3x128xf32> to vector<1x1x128xf32>
    %148 = vector.shape_cast %147 : vector<1x1x128xf32> to vector<128xf32>
    %149 = vector.shape_cast %148 : vector<128xf32> to vector<1x1x128xf32>
    %150 = vector.broadcast %149 : vector<1x1x128xf32> to vector<16x16x128xf32>
    %151 = arith.mulf %150, %140 : vector<16x16x128xf32>
    %152 = arith.addf %146, %151 : vector<16x16x128xf32>
    %c1_i32_85 = arith.constant 1 : i32
    %153 = arith.addi %80, %c1_i32_85 : i32
    %154 = arith.index_cast %153 : i32 to index
    %c1_86 = arith.constant 1 : index
    %c0_87 = arith.constant 0 : index
    %155 = vector.load %arg12[%154, %c1_86, %c0_87] : memref<18x18x128xf32, #tpu.memory_space<vmem>>, vector<16x16x128xf32>
    %c1_i32_88 = arith.constant 1 : i32
    %156 = arith.addi %80, %c1_i32_88 : i32
    %157 = arith.index_cast %156 : i32 to index
    %c1_89 = arith.constant 1 : index
    %c0_90 = arith.constant 0 : index
    %158 = vector.load %arg13[%157, %c1_89, %c0_90] : memref<18x18x128xf32, #tpu.memory_space<vmem>>, vector<16x16x128xf32>
    %159 = vector.extract_strided_slice %63 {offsets = [1, 1, 0], sizes = [1, 1, 128], strides = [1, 1, 1]} : vector<3x3x128xf32> to vector<1x1x128xf32>
    %160 = vector.shape_cast %159 : vector<1x1x128xf32> to vector<128xf32>
    %161 = vector.shape_cast %160 : vector<128xf32> to vector<1x1x128xf32>
    %162 = vector.broadcast %161 : vector<1x1x128xf32> to vector<16x16x128xf32>
    %163 = arith.mulf %162, %155 : vector<16x16x128xf32>
    %164 = arith.addf %152, %163 : vector<16x16x128xf32>
    %165 = vector.extract_strided_slice %64 {offsets = [1, 1, 0], sizes = [1, 1, 128], strides = [1, 1, 1]} : vector<3x3x128xf32> to vector<1x1x128xf32>
    %166 = vector.shape_cast %165 : vector<1x1x128xf32> to vector<128xf32>
    %167 = vector.shape_cast %166 : vector<128xf32> to vector<1x1x128xf32>
    %168 = vector.broadcast %167 : vector<1x1x128xf32> to vector<16x16x128xf32>
    %169 = arith.mulf %168, %158 : vector<16x16x128xf32>
    %170 = arith.addf %164, %169 : vector<16x16x128xf32>
    %c1_i32_91 = arith.constant 1 : i32
    %171 = arith.addi %80, %c1_i32_91 : i32
    %172 = arith.index_cast %171 : i32 to index
    %c2_92 = arith.constant 2 : index
    %c0_93 = arith.constant 0 : index
    %173 = vector.load %arg12[%172, %c2_92, %c0_93] : memref<18x18x128xf32, #tpu.memory_space<vmem>>, vector<16x16x128xf32>
    %c1_i32_94 = arith.constant 1 : i32
    %174 = arith.addi %80, %c1_i32_94 : i32
    %175 = arith.index_cast %174 : i32 to index
    %c2_95 = arith.constant 2 : index
    %c0_96 = arith.constant 0 : index
    %176 = vector.load %arg13[%175, %c2_95, %c0_96] : memref<18x18x128xf32, #tpu.memory_space<vmem>>, vector<16x16x128xf32>
    %177 = vector.extract_strided_slice %63 {offsets = [1, 2, 0], sizes = [1, 1, 128], strides = [1, 1, 1]} : vector<3x3x128xf32> to vector<1x1x128xf32>
    %178 = vector.shape_cast %177 : vector<1x1x128xf32> to vector<128xf32>
    %179 = vector.shape_cast %178 : vector<128xf32> to vector<1x1x128xf32>
    %180 = vector.broadcast %179 : vector<1x1x128xf32> to vector<16x16x128xf32>
    %181 = arith.mulf %180, %173 : vector<16x16x128xf32>
    %182 = arith.addf %170, %181 : vector<16x16x128xf32>
    %183 = vector.extract_strided_slice %64 {offsets = [1, 2, 0], sizes = [1, 1, 128], strides = [1, 1, 1]} : vector<3x3x128xf32> to vector<1x1x128xf32>
    %184 = vector.shape_cast %183 : vector<1x1x128xf32> to vector<128xf32>
    %185 = vector.shape_cast %184 : vector<128xf32> to vector<1x1x128xf32>
    %186 = vector.broadcast %185 : vector<1x1x128xf32> to vector<16x16x128xf32>
    %187 = arith.mulf %186, %176 : vector<16x16x128xf32>
    %188 = arith.addf %182, %187 : vector<16x16x128xf32>
    %c2_i32_97 = arith.constant 2 : i32
    %189 = arith.addi %80, %c2_i32_97 : i32
    %190 = arith.index_cast %189 : i32 to index
    %c0_98 = arith.constant 0 : index
    %c0_99 = arith.constant 0 : index
    %191 = vector.load %arg12[%190, %c0_98, %c0_99] : memref<18x18x128xf32, #tpu.memory_space<vmem>>, vector<16x16x128xf32>
    %c2_i32_100 = arith.constant 2 : i32
    %192 = arith.addi %80, %c2_i32_100 : i32
    %193 = arith.index_cast %192 : i32 to index
    %c0_101 = arith.constant 0 : index
    %c0_102 = arith.constant 0 : index
    %194 = vector.load %arg13[%193, %c0_101, %c0_102] : memref<18x18x128xf32, #tpu.memory_space<vmem>>, vector<16x16x128xf32>
    %195 = vector.extract_strided_slice %63 {offsets = [2, 0, 0], sizes = [1, 1, 128], strides = [1, 1, 1]} : vector<3x3x128xf32> to vector<1x1x128xf32>
    %196 = vector.shape_cast %195 : vector<1x1x128xf32> to vector<128xf32>
    %197 = vector.shape_cast %196 : vector<128xf32> to vector<1x1x128xf32>
    %198 = vector.broadcast %197 : vector<1x1x128xf32> to vector<16x16x128xf32>
    %199 = arith.mulf %198, %191 : vector<16x16x128xf32>
    %200 = arith.addf %188, %199 : vector<16x16x128xf32>
    %201 = vector.extract_strided_slice %64 {offsets = [2, 0, 0], sizes = [1, 1, 128], strides = [1, 1, 1]} : vector<3x3x128xf32> to vector<1x1x128xf32>
    %202 = vector.shape_cast %201 : vector<1x1x128xf32> to vector<128xf32>
    %203 = vector.shape_cast %202 : vector<128xf32> to vector<1x1x128xf32>
    %204 = vector.broadcast %203 : vector<1x1x128xf32> to vector<16x16x128xf32>
    %205 = arith.mulf %204, %194 : vector<16x16x128xf32>
    %206 = arith.addf %200, %205 : vector<16x16x128xf32>
    %c2_i32_103 = arith.constant 2 : i32
    %207 = arith.addi %80, %c2_i32_103 : i32
    %208 = arith.index_cast %207 : i32 to index
    %c1_104 = arith.constant 1 : index
    %c0_105 = arith.constant 0 : index
    %209 = vector.load %arg12[%208, %c1_104, %c0_105] : memref<18x18x128xf32, #tpu.memory_space<vmem>>, vector<16x16x128xf32>
    %c2_i32_106 = arith.constant 2 : i32
    %210 = arith.addi %80, %c2_i32_106 : i32
    %211 = arith.index_cast %210 : i32 to index
    %c1_107 = arith.constant 1 : index
    %c0_108 = arith.constant 0 : index
    %212 = vector.load %arg13[%211, %c1_107, %c0_108] : memref<18x18x128xf32, #tpu.memory_space<vmem>>, vector<16x16x128xf32>
    %213 = vector.extract_strided_slice %63 {offsets = [2, 1, 0], sizes = [1, 1, 128], strides = [1, 1, 1]} : vector<3x3x128xf32> to vector<1x1x128xf32>
    %214 = vector.shape_cast %213 : vector<1x1x128xf32> to vector<128xf32>
    %215 = vector.shape_cast %214 : vector<128xf32> to vector<1x1x128xf32>
    %216 = vector.broadcast %215 : vector<1x1x128xf32> to vector<16x16x128xf32>
    %217 = arith.mulf %216, %209 : vector<16x16x128xf32>
    %218 = arith.addf %206, %217 : vector<16x16x128xf32>
    %219 = vector.extract_strided_slice %64 {offsets = [2, 1, 0], sizes = [1, 1, 128], strides = [1, 1, 1]} : vector<3x3x128xf32> to vector<1x1x128xf32>
    %220 = vector.shape_cast %219 : vector<1x1x128xf32> to vector<128xf32>
    %221 = vector.shape_cast %220 : vector<128xf32> to vector<1x1x128xf32>
    %222 = vector.broadcast %221 : vector<1x1x128xf32> to vector<16x16x128xf32>
    %223 = arith.mulf %222, %212 : vector<16x16x128xf32>
    %224 = arith.addf %218, %223 : vector<16x16x128xf32>
    %c2_i32_109 = arith.constant 2 : i32
    %225 = arith.addi %80, %c2_i32_109 : i32
    %226 = arith.index_cast %225 : i32 to index
    %c2_110 = arith.constant 2 : index
    %c0_111 = arith.constant 0 : index
    %227 = vector.load %arg12[%226, %c2_110, %c0_111] : memref<18x18x128xf32, #tpu.memory_space<vmem>>, vector<16x16x128xf32>
    %c2_i32_112 = arith.constant 2 : i32
    %228 = arith.addi %80, %c2_i32_112 : i32
    %229 = arith.index_cast %228 : i32 to index
    %c2_113 = arith.constant 2 : index
    %c0_114 = arith.constant 0 : index
    %230 = vector.load %arg13[%229, %c2_113, %c0_114] : memref<18x18x128xf32, #tpu.memory_space<vmem>>, vector<16x16x128xf32>
    %231 = vector.extract_strided_slice %63 {offsets = [2, 2, 0], sizes = [1, 1, 128], strides = [1, 1, 1]} : vector<3x3x128xf32> to vector<1x1x128xf32>
    %232 = vector.shape_cast %231 : vector<1x1x128xf32> to vector<128xf32>
    %233 = vector.shape_cast %232 : vector<128xf32> to vector<1x1x128xf32>
    %234 = vector.broadcast %233 : vector<1x1x128xf32> to vector<16x16x128xf32>
    %235 = arith.mulf %234, %227 : vector<16x16x128xf32>
    %236 = arith.addf %224, %235 : vector<16x16x128xf32>
    %237 = vector.extract_strided_slice %64 {offsets = [2, 2, 0], sizes = [1, 1, 128], strides = [1, 1, 1]} : vector<3x3x128xf32> to vector<1x1x128xf32>
    %238 = vector.shape_cast %237 : vector<1x1x128xf32> to vector<128xf32>
    %239 = vector.shape_cast %238 : vector<128xf32> to vector<1x1x128xf32>
    %240 = vector.broadcast %239 : vector<1x1x128xf32> to vector<16x16x128xf32>
    %241 = arith.mulf %240, %230 : vector<16x16x128xf32>
    %242 = arith.addf %236, %241 : vector<16x16x128xf32>
    %243 = vector.shape_cast %242 : vector<16x16x128xf32> to vector<256x128xf32>
    %cst_115 = arith.constant dense<0.000000e+00> : vector<256xf32>
    %244 = vector.multi_reduction <add>, %243, %cst_115 [1] : vector<256x128xf32> to vector<256xf32>
    %245 = vector.shape_cast %244 : vector<256xf32> to vector<256x1xf32>
    %cst_116 = arith.constant 2.500000e-01 : f32
    %246 = vector.broadcast %cst_116 : f32 to vector<256x1xf32>
    %247 = arith.mulf %245, %246 : vector<256x1xf32>
    %248 = vector.broadcast %247 : vector<256x1xf32> to vector<256x128xf32>
    %249 = arith.subf %243, %248 : vector<256x128xf32>
    %cst_117 = arith.constant 0.000000e+00 : f32
    %250 = vector.shape_cast %78 : vector<1x128xi1> to vector<1x128xi1>
    %251 = vector.broadcast %250 : vector<1x128xi1> to vector<256x128xi1>
    %252 = vector.broadcast %cst_117 : f32 to vector<256x128xf32>
    %253 = arith.select %251, %249, %252 : vector<256x128xi1>, vector<256x128xf32>
    %254 = arith.mulf %253, %253 : vector<256x128xf32>
    %cst_118 = arith.constant dense<0.000000e+00> : vector<256xf32>
    %255 = vector.multi_reduction <add>, %254, %cst_118 [1] : vector<256x128xf32> to vector<256xf32>
    %256 = vector.shape_cast %255 : vector<256xf32> to vector<256x1xf32>
    %cst_119 = arith.constant 2.500000e-01 : f32
    %257 = vector.broadcast %cst_119 : f32 to vector<256x1xf32>
    %258 = arith.mulf %256, %257 : vector<256x1xf32>
    %cst_120 = arith.constant 9.99999997E-7 : f32
    %259 = vector.broadcast %cst_120 : f32 to vector<256x1xf32>
    %260 = arith.addf %258, %259 : vector<256x1xf32>
    %261 = math.rsqrt %260 : vector<256x1xf32>
    %262 = vector.broadcast %261 : vector<256x1xf32> to vector<256x128xf32>
    %263 = arith.mulf %253, %262 : vector<256x128xf32>
    %264 = arith.truncf %263 : vector<256x128xf32> to vector<256x128xbf16>
    %cst_121 = arith.constant dense<0.000000e+00> : vector<256x128xf32>
    %265 = tpu.matmul %264, %69, %cst_121 {dimension_numbers = #tpu.dot_dimension_numbers<[1], [0], [0], [1], [0, 0, 1, 1], [], []>} : vector<256x128xbf16>, vector<128x128xbf16>, vector<256x128xf32> -> vector<256x128xf32>
    %266 = vector.broadcast %70 : vector<1x128xf32> to vector<256x128xf32>
    %267 = arith.addf %265, %266 : vector<256x128xf32>
    %cst_122 = arith.constant 5.000000e-01 : f32
    %268 = vector.broadcast %cst_122 : f32 to vector<256x128xf32>
    %269 = arith.mulf %268, %267 : vector<256x128xf32>
    %cst_123 = arith.constant 0.707106769 : f32
    %270 = vector.broadcast %cst_123 : f32 to vector<256x128xf32>
    %271 = arith.mulf %267, %270 : vector<256x128xf32>
    %272 = math.absf %271 : vector<256x128xf32>
    %cst_124 = arith.constant 0.327591091 : f32
    %273 = vector.broadcast %cst_124 : f32 to vector<256x128xf32>
    %274 = arith.mulf %273, %272 : vector<256x128xf32>
    %cst_125 = arith.constant 1.000000e+00 : f32
    %275 = vector.broadcast %cst_125 : f32 to vector<256x128xf32>
    %276 = arith.addf %275, %274 : vector<256x128xf32>
    %cst_126 = arith.constant 1.000000e+00 : f32
    %277 = vector.broadcast %cst_126 : f32 to vector<256x128xf32>
    %278 = arith.divf %277, %276 : vector<256x128xf32>
    %cst_127 = arith.constant 1.06140542 : f32
    %279 = vector.broadcast %cst_127 : f32 to vector<256x128xf32>
    %280 = arith.mulf %279, %278 : vector<256x128xf32>
    %cst_128 = arith.constant -1.45315206 : f32
    %281 = vector.broadcast %cst_128 : f32 to vector<256x128xf32>
    %282 = arith.addf %280, %281 : vector<256x128xf32>
    %283 = arith.mulf %282, %278 : vector<256x128xf32>
    %cst_129 = arith.constant 1.42141378 : f32
    %284 = vector.broadcast %cst_129 : f32 to vector<256x128xf32>
    %285 = arith.addf %283, %284 : vector<256x128xf32>
    %286 = arith.mulf %285, %278 : vector<256x128xf32>
    %cst_130 = arith.constant -0.284496725 : f32
    %287 = vector.broadcast %cst_130 : f32 to vector<256x128xf32>
    %288 = arith.addf %286, %287 : vector<256x128xf32>
    %289 = arith.mulf %288, %278 : vector<256x128xf32>
    %cst_131 = arith.constant 0.254829586 : f32
    %290 = vector.broadcast %cst_131 : f32 to vector<256x128xf32>
    %291 = arith.addf %289, %290 : vector<256x128xf32>
    %292 = arith.mulf %291, %278 : vector<256x128xf32>
    %cst_132 = arith.constant 0.000000e+00 : f32
    %293 = vector.broadcast %cst_132 : f32 to vector<256x128xf32>
    %294 = arith.subf %293, %272 : vector<256x128xf32>
    %295 = arith.mulf %294, %272 : vector<256x128xf32>
    %296 = math.exp %295 : vector<256x128xf32>
    %297 = arith.mulf %292, %296 : vector<256x128xf32>
    %cst_133 = arith.constant 1.000000e+00 : f32
    %298 = vector.broadcast %cst_133 : f32 to vector<256x128xf32>
    %299 = arith.subf %298, %297 : vector<256x128xf32>
    %cst_134 = arith.constant 0.000000e+00 : f32
    %300 = vector.broadcast %cst_134 : f32 to vector<256x128xf32>
    %301 = arith.cmpf oge, %271, %300 : vector<256x128xf32>
    %cst_135 = arith.constant 0.000000e+00 : f32
    %302 = vector.broadcast %cst_135 : f32 to vector<256x128xf32>
    %303 = arith.subf %302, %299 : vector<256x128xf32>
    %304 = arith.select %301, %299, %303 : vector<256x128xi1>, vector<256x128xf32>
    %cst_136 = arith.constant 1.000000e+00 : f32
    %305 = vector.broadcast %cst_136 : f32 to vector<256x128xf32>
    %306 = arith.addf %305, %304 : vector<256x128xf32>
    %307 = arith.mulf %269, %306 : vector<256x128xf32>
    %308 = arith.truncf %307 : vector<256x128xf32> to vector<256x128xbf16>
    %cst_137 = arith.constant dense<0.000000e+00> : vector<256x128xf32>
    %309 = tpu.matmul %308, %71, %cst_137 {dimension_numbers = #tpu.dot_dimension_numbers<[1], [0], [0], [1], [0, 0, 1, 1], [], []>} : vector<256x128xbf16>, vector<128x128xbf16>, vector<256x128xf32> -> vector<256x128xf32>
    %310 = vector.broadcast %72 : vector<1x128xf32> to vector<256x128xf32>
    %311 = arith.addf %309, %310 : vector<256x128xf32>
    %312 = vector.broadcast %73 : vector<1x128xf32> to vector<256x128xf32>
    %313 = arith.mulf %311, %312 : vector<256x128xf32>
    %c0_138 = arith.constant 0 : index
    %314 = arith.index_cast %80 : i32 to index
    %c0_139 = arith.constant 0 : index
    %c0_140 = arith.constant 0 : index
    %315 = vector.load %arg1[%c0_138, %314, %c0_139, %c0_140] : memref<1x16x16x128xf32, #tpu.memory_space<vmem>>, vector<1x16x16x128xf32>
    %316 = vector.shape_cast %315 : vector<1x16x16x128xf32> to vector<16x16x128xf32>
    %317 = vector.shape_cast %313 : vector<256x128xf32> to vector<16x16x128xf32>
    %318 = arith.addf %316, %317 : vector<16x16x128xf32>
    %c0_141 = arith.constant 0 : index
    %319 = arith.index_cast %80 : i32 to index
    %c0_142 = arith.constant 0 : index
    %c0_143 = arith.constant 0 : index
    %320 = vector.load %arg11[%c0_141, %319, %c0_142, %c0_143] : memref<1x16x16x128xf32, #tpu.memory_space<vmem>>, vector<1x16x16x128xf32>
    %321 = vector.shape_cast %320 : vector<1x16x16x128xf32> to vector<16x16x128xf32>
    %322 = vector.shape_cast %318 : vector<16x16x128xf32> to vector<1x16x16x128xf32>
    tpu.vector_store %arg11[%c0_141, %319, %c0_142, %c0_143], %322 {strides = array<i32>} : memref<1x16x16x128xf32, #tpu.memory_space<vmem>>, vector<1x16x16x128xf32>,
    %c1_i32_144 = arith.constant 1 : i32
    return
  }
  func.func @transform_0(%arg0: i32) -> (i32, i32, i32, i32) {
    %c0_i32 = arith.constant 0 : i32
    %c0_i32_0 = arith.constant 0 : i32
    %c0_i32_1 = arith.constant 0 : i32
    %c0_i32_2 = arith.constant 0 : i32
    return %arg0, %c0_i32, %c0_i32_0, %c0_i32_1 : i32, i32, i32, i32
  }
  func.func @transform_1(%arg0: i32) -> (i32, i32, i32) {
    %c0_i32 = arith.constant 0 : i32
    %c0_i32_0 = arith.constant 0 : i32
    %c0_i32_1 = arith.constant 0 : i32
    %c0_i32_2 = arith.constant 0 : i32
    return %c0_i32, %c0_i32_0, %c0_i32_1 : i32, i32, i32
  }
  func.func @transform_2(%arg0: i32) -> (i32, i32) {
    %c0_i32 = arith.constant 0 : i32
    %c0_i32_0 = arith.constant 0 : i32
    %c0_i32_1 = arith.constant 0 : i32
    return %c0_i32, %c0_i32_0 : i32, i32
  }
  func.func @transform_3(%arg0: i32) -> (i32, i32, i32) {
    %c0_i32 = arith.constant 0 : i32
    %c0_i32_0 = arith.constant 0 : i32
    %c0_i32_1 = arith.constant 0 : i32
    %c0_i32_2 = arith.constant 0 : i32
    return %c0_i32, %c0_i32_0, %c0_i32_1 : i32, i32, i32
  }
  func.func @transform_4(%arg0: i32) -> (i32, i32) {
    %c0_i32 = arith.constant 0 : i32
    %c0_i32_0 = arith.constant 0 : i32
    %c0_i32_1 = arith.constant 0 : i32
    return %c0_i32, %c0_i32_0 : i32, i32
  }
  func.func @transform_5(%arg0: i32) -> (i32, i32) {
    %c0_i32 = arith.constant 0 : i32
    %c0_i32_0 = arith.constant 0 : i32
    %c0_i32_1 = arith.constant 0 : i32
    return %c0_i32, %c0_i32_0 : i32, i32
  }
  func.func @transform_6(%arg0: i32) -> (i32, i32) {
    %c0_i32 = arith.constant 0 : i32
    %c0_i32_0 = arith.constant 0 : i32
    %c0_i32_1 = arith.constant 0 : i32
    return %c0_i32, %c0_i32_0 : i32, i32
  }
  func.func @transform_7(%arg0: i32) -> (i32, i32) {
    %c0_i32 = arith.constant 0 : i32
    %c0_i32_0 = arith.constant 0 : i32
    %c0_i32_1 = arith.constant 0 : i32
    return %c0_i32, %c0_i32_0 : i32, i32
  }
  func.func @transform_8(%arg0: i32) -> (i32, i32) {
    %c0_i32 = arith.constant 0 : i32
    %c0_i32_0 = arith.constant 0 : i32
    %c0_i32_1 = arith.constant 0 : i32
    return %c0_i32, %c0_i32_0 : i32, i32
  }
  func.func @transform_9(%arg0: i32) -> (i32, i32) {
    %c0_i32 = arith.constant 0 : i32
    %c0_i32_0 = arith.constant 0 : i32
    %c0_i32_1 = arith.constant 0 : i32
    return %c0_i32, %c0_i32_0 : i32, i32
  }
  func.func @transform_10(%arg0: i32) -> (i32, i32, i32, i32) {
    %c0_i32 = arith.constant 0 : i32
    %c0_i32_0 = arith.constant 0 : i32
    %c0_i32_1 = arith.constant 0 : i32
    %c0_i32_2 = arith.constant 0 : i32
    return %arg0, %c0_i32, %c0_i32_0, %c0_i32_1 : i32, i32, i32, i32
  }
}

</mosaic_0001>

<llo_original>
// kernel: tpu_custom_call.1
$region0: #{tpu_custom_call.1}
  #allocation0 [shape = 'u32[]', space=smem, size = 0x4, offset = 0x4, fixed_abs, tag = 'smem constant byte address 0x4 - core index']
  #allocation1 [shape = 'u32[144,128]{1,0:T(1,128)}', space=vmem, size = 0x12000, scoped, tag = 'internal scratch']
  #allocation2 [shape = 'f32[18,18,128]{2,1,0:T(8,128)}', space=vmem, size = 0x36000, scoped, tag = 'scratch operand']
  #allocation3 [shape = 'f32[18,18,128]{2,1,0:T(8,128)}', space=vmem, size = 0x36000, scoped, tag = 'scratch operand']
  %s0 = inlined_call_operand.hbm [shape: f32[2,16,16,128], index: 0, kind: input, shape index: {}]
  %s1 = inlined_call_operand.hbm [shape: f32[3,3,128], index: 1, kind: input, shape index: {}]
  %s2 = inlined_call_operand.vmem [shape: f32[1,128], index: 2, kind: input, shape index: {}]
  %s3 = inlined_call_operand.hbm [shape: f32[3,3,128], index: 3, kind: input, shape index: {}]
  %s4 = inlined_call_operand.vmem [shape: f32[1,128], index: 4, kind: input, shape index: {}]
  %s5 = inlined_call_operand.hbm [shape: bf16[128,128], index: 5, kind: input, shape index: {}]
  %s6 = inlined_call_operand.vmem [shape: f32[1,128], index: 6, kind: input, shape index: {}]
  %s7 = inlined_call_operand.hbm [shape: bf16[128,128], index: 7, kind: input, shape index: {}]
  %s8 = inlined_call_operand.vmem [shape: f32[1,128], index: 8, kind: input, shape index: {}]
  %s9 = inlined_call_operand.vmem [shape: f32[1,128], index: 9, kind: input, shape index: {}]
  %s10 = inlined_call_operand.hbm [shape: f32[2,16,16,128], index: 10, kind: output, shape index: {}]
  %s11 = sld [smem:[#allocation0]]
  $region93: #{tpu_custom_call.1} parent=0
    _
  %s13 = ssub.s32 1, %s11
  %s14 = scalar_select 0, %s13, %s11
  $region1: #{tpu_custom_call.1} parent=0
    #allocation4 [shape = 'u8[262144]{0}', space=vmem, size = 0x40000, scoped, tag = 'input window, operand 0']
    #allocation5 [shape = 's32[2]{0}', space=sflag, size = 0x8, scoped, tag = 'scoped memory for tpu_custom_call.1']
    #allocation6 [shape = 's32[2]{0}', space=sflag, size = 0x8, scoped, tag = 'scoped memory for tpu_custom_call.1']
    #allocation7 [shape = 'u8[6144]{0}', space=vmem, size = 0x1800, scoped, tag = 'input window, operand 1, single buffered']
    #allocation8 [shape = 's32[1]{0}', space=sflag, size = 0x4, scoped, tag = 'scoped memory for tpu_custom_call.1']
    #allocation9 [shape = 'u8[6144]{0}', space=vmem, size = 0x1800, scoped, tag = 'input window, operand 3, single buffered']
    #allocation10 [shape = 'u8[32768]{0}', space=vmem, size = 0x8000, scoped, tag = 'input window, operand 5, single buffered']
    #allocation11 [shape = 's32[1]{0}', space=sflag, size = 0x4, scoped, tag = 'scoped memory for tpu_custom_call.1']
    #allocation12 [shape = 'u8[32768]{0}', space=vmem, size = 0x8000, scoped, tag = 'input window, operand 7, single buffered']
    #allocation13 [shape = 'u8[262144]{0}', space=vmem, size = 0x40000, scoped, tag = 'output window, operand 0']
    %15 = vsyncpa [#allocation5], 0
    %s16 = scalar_lea.sflag [#allocation5], 1
    %17 = vsyncpa %s16, 0
    %18 = vsyncpa [#allocation8], 0
    %19 = vsyncpa [#allocation11], 0
    %20 = vsyncpa [#allocation6], 0
    %s21 = scalar_lea.sflag [#allocation6], 1
    %22 = vsyncpa %s21, 0
    loop: start=0, step=1, limit=4
    $region2: #{tpu_custom_call.1} parent=1 // loop_pre_header
      _
    $region3: #{tpu_custom_call.1} parent=1 // loop_header
      %s24 = sphi 0, %s28
      %p25 = scmp.ge.s32.totalorder %s24, 4
      %s34 = sphi 0, %s36
      %s37 = sphi 0, %s34
      %s38 = sphi 0, %s37
      %s54 = sphi 0, %s38
      %s58 = sphi 0, %s58
      %s60 = sphi 0, %s58
      %s61 = sphi 0, %s60
      %s75 = sphi 0, %s61
      %s79 = sphi 0, %s79
      %s81 = sphi 0, %s79
      %s82 = sphi 0, %s81
      %s96 = sphi 0, %s82
      %s100 = sphi 0, %s100
      %s102 = sphi 0, %s100
      %s103 = sphi 0, %s102
      %s117 = sphi 0, %s103
      %s121 = sphi 0, %s121
      %s123 = sphi 0, %s121
      %s124 = sphi 0, %s123
      %s138 = sphi 0, %s124
      %s142 = sphi 0, %s142
      %s144 = sphi 0, %s142
      %s145 = sphi 0, %s144
      %s159 = sphi 0, %s145
      %s163 = sphi 0, %s163
      %s165 = sphi 0, %s163
      %s166 = sphi 0, %s165
      %s180 = sphi 0, %s166
      %s184 = sphi 0, %s184
      %s186 = sphi 0, %s184
      %s187 = sphi 0, %s186
      %s201 = sphi 0, %s187
      %s205 = sphi 0, %s205
      %s207 = sphi 0, %s205
      %s208 = sphi 0, %s207
      %s222 = sphi 0, %s208
      %s226 = sphi 0, %s226
      %s228 = sphi 0, %s226
      %s229 = sphi 0, %s228
      %s243 = sphi 0, %s229
      %s249 = sphi 0, %s251
      %s252 = sphi 0, %s249
      %s253 = sphi 0, %s252
      %s269 = sphi 0, %s253
    $region4: #{tpu_custom_call.1} parent=1 // loop_header_branch
      %27 = sbr.rel (%p25) target = $region8
    $region5: #{tpu_custom_call.1} parent=1 // loop_body
      %s29 = ssub.s32 %s24, 1
      %s30 = ssub.s32 %s24, 2
      %s31 = sadd.s32 %s24, 1
      %s32 = ssub.s32 %s24, %s31
      %p33 = scmp.eq.s32.totalorder %s32, 0
      %s35 = sadd.s32 %s34, 1
      %s36 = scalar_select %p33, %s34, %s35
      %p39 = pneg %p33
      %p40 = scmp.eq.s32.totalorder %s24, 1
      %p41 = por %p39, %p40
      %p42 = scmp.ne.s32.totalorder %s34, %s37
      %p43 = scmp.eq.s32.totalorder %s24, 0
      %p44 = por %p42, %p43
      %p45 = scmp.ne.s32.totalorder %s34, %s37
      %p46 = scmp.eq.s32.totalorder %s29, 1
      %p47 = por %p45, %p46
      %p48 = scmp.ne.s32.totalorder %s37, %s38
      %p49 = scmp.eq.s32.totalorder %s29, 0
      %p50 = por %p48, %p49
      %p51 = scmp.ne.s32.totalorder %s37, %s38
      %p52 = scmp.eq.s32.totalorder %s30, 1
      %p53 = por %p51, %p52
      %p55 = scmp.ne.s32.totalorder %s38, %s54
      %p56 = scmp.eq.s32.totalorder %s30, 0
      %p57 = por %p55, %p56
      %s59 = sadd.s32 %s58, 1
      %p62 = scmp.eq.s32.totalorder %s24, 1
      %p63 = scmp.ne.s32.totalorder %s58, %s60
      %p64 = scmp.eq.s32.totalorder %s24, 0
      %p65 = por %p63, %p64
      %p66 = scmp.ne.s32.totalorder %s58, %s60
      %p67 = scmp.eq.s32.totalorder %s29, 1
      %p68 = por %p66, %p67
      %p69 = scmp.ne.s32.totalorder %s60, %s61
      %p70 = scmp.eq.s32.totalorder %s29, 0
      %p71 = por %p69, %p70
      %p72 = scmp.ne.s32.totalorder %s60, %s61
      %p73 = scmp.eq.s32.totalorder %s30, 1
      %p74 = por %p72, %p73
      %p76 = scmp.ne.s32.totalorder %s61, %s75
      %p77 = scmp.eq.s32.totalorder %s30, 0
      %p78 = por %p76, %p77
      %s80 = sadd.s32 %s79, 1
      %p83 = scmp.eq.s32.totalorder %s24, 1
      %p84 = scmp.ne.s32.totalorder %s79, %s81
      %p85 = scmp.eq.s32.totalorder %s24, 0
      %p86 = por %p84, %p85
      %p87 = scmp.ne.s32.totalorder %s79, %s81
      %p88 = scmp.eq.s32.totalorder %s29, 1
      %p89 = por %p87, %p88
      %p90 = scmp.ne.s32.totalorder %s81, %s82
      %p91 = scmp.eq.s32.totalorder %s29, 0
      %p92 = por %p90, %p91
      %p93 = scmp.ne.s32.totalorder %s81, %s82
      %p94 = scmp.eq.s32.totalorder %s30, 1
      %p95 = por %p93, %p94
      %p97 = scmp.ne.s32.totalorder %s82, %s96
      %p98 = scmp.eq.s32.totalorder %s30, 0
      %p99 = por %p97, %p98
      %s101 = sadd.s32 %s100, 1
      %p104 = scmp.eq.s32.totalorder %s24, 1
      %p105 = scmp.ne.s32.totalorder %s100, %s102
      %p106 = scmp.eq.s32.totalorder %s24, 0
      %p107 = por %p105, %p106
      %p108 = scmp.ne.s32.totalorder %s100, %s102
      %p109 = scmp.eq.s32.totalorder %s29, 1
      %p110 = por %p108, %p109
      %p111 = scmp.ne.s32.totalorder %s102, %s103
      %p112 = scmp.eq.s32.totalorder %s29, 0
      %p113 = por %p111, %p112
      %p114 = scmp.ne.s32.totalorder %s102, %s103
      %p115 = scmp.eq.s32.totalorder %s30, 1
      %p116 = por %p114, %p115
      %p118 = scmp.ne.s32.totalorder %s103, %s117
      %p119 = scmp.eq.s32.totalorder %s30, 0
      %p120 = por %p118, %p119
      %s122 = sadd.s32 %s121, 1
      %p125 = scmp.eq.s32.totalorder %s24, 1
      %p126 = scmp.ne.s32.totalorder %s121, %s123
      %p127 = scmp.eq.s32.totalorder %s24, 0
      %p128 = por %p126, %p127
      %p129 = scmp.ne.s32.totalorder %s121, %s123
      %p130 = scmp.eq.s32.totalorder %s29, 1
      %p131 = por %p129, %p130
      %p132 = scmp.ne.s32.totalorder %s123, %s124
      %p133 = scmp.eq.s32.totalorder %s29, 0
      %p134 = por %p132, %p133
      %p135 = scmp.ne.s32.totalorder %s123, %s124
      %p136 = scmp.eq.s32.totalorder %s30, 1
      %p137 = por %p135, %p136
      %p139 = scmp.ne.s32.totalorder %s124, %s138
      %p140 = scmp.eq.s32.totalorder %s30, 0
      %p141 = por %p139, %p140
      %s143 = sadd.s32 %s142, 1
      %p146 = scmp.eq.s32.totalorder %s24, 1
      %p147 = scmp.ne.s32.totalorder %s142, %s144
      %p148 = scmp.eq.s32.totalorder %s24, 0
      %p149 = por %p147, %p148
      %p150 = scmp.ne.s32.totalorder %s142, %s144
      %p151 = scmp.eq.s32.totalorder %s29, 1
      %p152 = por %p150, %p151
      %p153 = scmp.ne.s32.totalorder %s144, %s145
      %p154 = scmp.eq.s32.totalorder %s29, 0
      %p155 = por %p153, %p154
      %p156 = scmp.ne.s32.totalorder %s144, %s145
      %p157 = scmp.eq.s32.totalorder %s30, 1
      %p158 = por %p156, %p157
      %p160 = scmp.ne.s32.totalorder %s145, %s159
      %p161 = scmp.eq.s32.totalorder %s30, 0
      %p162 = por %p160, %p161
      %s164 = sadd.s32 %s163, 1
      %p167 = scmp.eq.s32.totalorder %s24, 1
      %p168 = scmp.ne.s32.totalorder %s163, %s165
      %p169 = scmp.eq.s32.totalorder %s24, 0
      %p170 = por %p168, %p169
      %p171 = scmp.ne.s32.totalorder %s163, %s165
      %p172 = scmp.eq.s32.totalorder %s29, 1
      %p173 = por %p171, %p172
      %p174 = scmp.ne.s32.totalorder %s165, %s166
      %p175 = scmp.eq.s32.totalorder %s29, 0
      %p176 = por %p174, %p175
      %p177 = scmp.ne.s32.totalorder %s165, %s166
      %p178 = scmp.eq.s32.totalorder %s30, 1
      %p179 = por %p177, %p178
      %p181 = scmp.ne.s32.totalorder %s166, %s180
      %p182 = scmp.eq.s32.totalorder %s30, 0
      %p183 = por %p181, %p182
      %s185 = sadd.s32 %s184, 1
      %p188 = scmp.eq.s32.totalorder %s24, 1
      %p189 = scmp.ne.s32.totalorder %s184, %s186
      %p190 = scmp.eq.s32.totalorder %s24, 0
      %p191 = por %p189, %p190
      %p192 = scmp.ne.s32.totalorder %s184, %s186
      %p193 = scmp.eq.s32.totalorder %s29, 1
      %p194 = por %p192, %p193
      %p195 = scmp.ne.s32.totalorder %s186, %s187
      %p196 = scmp.eq.s32.totalorder %s29, 0
      %p197 = por %p195, %p196
      %p198 = scmp.ne.s32.totalorder %s186, %s187
      %p199 = scmp.eq.s32.totalorder %s30, 1
      %p200 = por %p198, %p199
      %p202 = scmp.ne.s32.totalorder %s187, %s201
      %p203 = scmp.eq.s32.totalorder %s30, 0
      %p204 = por %p202, %p203
      %s206 = sadd.s32 %s205, 1
      %p209 = scmp.eq.s32.totalorder %s24, 1
      %p210 = scmp.ne.s32.totalorder %s205, %s207
      %p211 = scmp.eq.s32.totalorder %s24, 0
      %p212 = por %p210, %p211
      %p213 = scmp.ne.s32.totalorder %s205, %s207
      %p214 = scmp.eq.s32.totalorder %s29, 1
      %p215 = por %p213, %p214
      %p216 = scmp.ne.s32.totalorder %s207, %s208
      %p217 = scmp.eq.s32.totalorder %s29, 0
      %p218 = por %p216, %p217
      %p219 = scmp.ne.s32.totalorder %s207, %s208
      %p220 = scmp.eq.s32.totalorder %s30, 1
      %p221 = por %p219, %p220
      %p223 = scmp.ne.s32.totalorder %s208, %s222
      %p224 = scmp.eq.s32.totalorder %s30, 0
      %p225 = por %p223, %p224
      %s227 = sadd.s32 %s226, 1
      %p230 = scmp.eq.s32.totalorder %s24, 1
      %p231 = scmp.ne.s32.totalorder %s226, %s228
      %p232 = scmp.eq.s32.totalorder %s24, 0
      %p233 = por %p231, %p232
      %p234 = scmp.ne.s32.totalorder %s226, %s228
      %p235 = scmp.eq.s32.totalorder %s29, 1
      %p236 = por %p234, %p235
      %p237 = scmp.ne.s32.totalorder %s228, %s229
      %p238 = scmp.eq.s32.totalorder %s29, 0
      %p239 = por %p237, %p238
      %p240 = scmp.ne.s32.totalorder %s228, %s229
      %p241 = scmp.eq.s32.totalorder %s30, 1
      %p242 = por %p240, %p241
      %p244 = scmp.ne.s32.totalorder %s229, %s243
      %p245 = scmp.eq.s32.totalorder %s30, 0
      %p246 = por %p244, %p245
      %s247 = ssub.s32 %s24, %s31
      %p248 = scmp.eq.s32.totalorder %s247, 0
      %s250 = sadd.s32 %s249, 1
      %s251 = scalar_select %p248, %s249, %s250
      %p254 = pneg %p248
      %p255 = scmp.eq.s32.totalorder %s24, 1
      %p256 = por %p254, %p255
      %p257 = scmp.ne.s32.totalorder %s249, %s252
      %p258 = scmp.eq.s32.totalorder %s24, 0
      %p259 = por %p257, %p258
      %p260 = scmp.ne.s32.totalorder %s249, %s252
      %p261 = scmp.eq.s32.totalorder %s29, 1
      %p262 = por %p260, %p261
      %p263 = scmp.ne.s32.totalorder %s252, %s253
      %p264 = scmp.eq.s32.totalorder %s29, 0
      %p265 = por %p263, %p264
      %p266 = scmp.ne.s32.totalorder %s252, %s253
      %p267 = scmp.eq.s32.totalorder %s30, 1
      %p268 = por %p266, %p267
      %p270 = scmp.ne.s32.totalorder %s253, %s269
      %p271 = scmp.eq.s32.totalorder %s30, 0
      %p272 = por %p270, %p271
      %p273 = scmp.le.s32.totalorder 1, %s24
      %p274 = scmp.lt.s32.totalorder %s24, 3
      %p275 = pnand %p273, %p274
      %p276 = pneg %p275
      // Predicated region
      $region9: #{tpu_custom_call.1} parent=5 // pred_check
        _
      $region10: #{tpu_custom_call.1} parent=5 // pred_check_branch
        %278 = sbr.rel (%p275) target = $region12
      $region11: #{tpu_custom_call.1} parent=5 // pred_region
        %s279 = ssub.s32 %s24, 1
        // Predicated region
        $region13: #{tpu_custom_call.1} parent=11 // pred_check
          %p280 = pneg %p71
        $region14: #{tpu_custom_call.1} parent=11 // pred_check_branch
          %282 = sbr.rel (%p280) target = $region16
        $region15: #{tpu_custom_call.1} parent=11 // pred_region
          %s284 = ssub.s32 192, 192
          %285 = vsyncadd [#allocation8], %s284
          %s286 = sshll.u32 [#allocation7], 4
          %s287 = int_to_ptr.vmem [resolvable:$true] %s286
          %292 = dma.hbm_to_vmem [thread:$0]  %s1, 192, %s287, [#allocation8], 64, 64, 4
        $region16: #{tpu_custom_call.1} parent=11 // pred_fallthru
          _
        // Predicated region
        $region17: #{tpu_custom_call.1} parent=11 // pred_check
          %p293 = pneg %p92
        $region18: #{tpu_custom_call.1} parent=11 // pred_check_branch
          %295 = sbr.rel (%p293) target = $region20
        $region19: #{tpu_custom_call.1} parent=11 // pred_region
          _
        $region20: #{tpu_custom_call.1} parent=11 // pred_fallthru
          _
        // Predicated region
        $region21: #{tpu_custom_call.1} parent=11 // pred_check
          %p296 = pneg %p113
        $region22: #{tpu_custom_call.1} parent=11 // pred_check_branch
          %298 = sbr.rel (%p296) target = $region24
        $region23: #{tpu_custom_call.1} parent=11 // pred_region
          %s300 = ssub.s32 192, 192
          %301 = vsyncadd [#allocation8], %s300
          %s302 = sshll.u32 [#allocation9], 4
          %s303 = int_to_ptr.vmem [resolvable:$true] %s302
          %308 = dma.hbm_to_vmem [thread:$0]  %s3, 192, %s303, [#allocation8], 64, 64, 4
        $region24: #{tpu_custom_call.1} parent=11 // pred_fallthru
          _
        // Predicated region
        $region25: #{tpu_custom_call.1} parent=11 // pred_check
          %p309 = pneg %p134
        $region26: #{tpu_custom_call.1} parent=11 // pred_check_branch
          %311 = sbr.rel (%p309) target = $region28
        $region27: #{tpu_custom_call.1} parent=11 // pred_region
          _
        $region28: #{tpu_custom_call.1} parent=11 // pred_fallthru
          _
        // Predicated region
        $region29: #{tpu_custom_call.1} parent=11 // pred_check
          %p312 = pneg %p155
        $region30: #{tpu_custom_call.1} parent=11 // pred_check_branch
          %314 = sbr.rel (%p312) target = $region32
        $region31: #{tpu_custom_call.1} parent=11 // pred_region
          %s316 = ssub.s32 1024, 1024
          %317 = vsyncadd [#allocation11], %s316
          %s318 = sshll.u32 [#allocation10], 4
          %s319 = int_to_ptr.vmem [resolvable:$true] %s318
          %324 = dma.hbm_to_vmem [thread:$0]  %s5, 1024, %s319, [#allocation11], 64, 64, 4
        $region32: #{tpu_custom_call.1} parent=11 // pred_fallthru
          _
        // Predicated region
        $region33: #{tpu_custom_call.1} parent=11 // pred_check
          %p325 = pneg %p176
        $region34: #{tpu_custom_call.1} parent=11 // pred_check_branch
          %327 = sbr.rel (%p325) target = $region36
        $region35: #{tpu_custom_call.1} parent=11 // pred_region
          _
        $region36: #{tpu_custom_call.1} parent=11 // pred_fallthru
          _
        // Predicated region
        $region37: #{tpu_custom_call.1} parent=11 // pred_check
          %p328 = pneg %p197
        $region38: #{tpu_custom_call.1} parent=11 // pred_check_branch
          %330 = sbr.rel (%p328) target = $region40
        $region39: #{tpu_custom_call.1} parent=11 // pred_region
          %s332 = ssub.s32 1024, 1024
          %333 = vsyncadd [#allocation11], %s332
          %s334 = sshll.u32 [#allocation12], 4
          %s335 = int_to_ptr.vmem [resolvable:$true] %s334
          %340 = dma.hbm_to_vmem [thread:$0]  %s7, 1024, %s335, [#allocation11], 64, 64, 4
        $region40: #{tpu_custom_call.1} parent=11 // pred_fallthru
          _
        // Predicated region
        $region41: #{tpu_custom_call.1} parent=11 // pred_check
          %p341 = pneg %p218
        $region42: #{tpu_custom_call.1} parent=11 // pred_check_branch
          %343 = sbr.rel (%p341) target = $region44
        $region43: #{tpu_custom_call.1} parent=11 // pred_region
          _
        $region44: #{tpu_custom_call.1} parent=11 // pred_fallthru
          _
        // Predicated region
        $region45: #{tpu_custom_call.1} parent=11 // pred_check
          %p344 = pneg %p239
        $region46: #{tpu_custom_call.1} parent=11 // pred_check_branch
          %346 = sbr.rel (%p344) target = $region48
        $region47: #{tpu_custom_call.1} parent=11 // pred_region
          _
        $region48: #{tpu_custom_call.1} parent=11 // pred_fallthru
          _
      $region12: #{tpu_custom_call.1} parent=5 // pred_fallthru
        _
      %p347 = scmp.lt.s32.totalorder %s24, 2
      // Predicated region
      $region49: #{tpu_custom_call.1} parent=5 // pred_check
        %p348 = pneg %p347
      $region50: #{tpu_custom_call.1} parent=5 // pred_check_branch
        %350 = sbr.rel (%p348) target = $region52
      $region51: #{tpu_custom_call.1} parent=5 // pred_region
        // Predicated region
        $region53: #{tpu_custom_call.1} parent=51 // pred_check
          %p351 = pneg %p44
        $region54: #{tpu_custom_call.1} parent=51 // pred_check_branch
          %353 = sbr.rel (%p351) target = $region56
        $region55: #{tpu_custom_call.1} parent=51 // pred_region
          %s354 = sand.u32 %s34, 1
          %s355 = scalar_lea.sflag [#allocation5], %s354
          %s356 = sand.u32 %s34, 1
          %s357 = smul.addr %s356, 256
          %s358 = scalar_lea.vmem [#allocation4], %s357
          %s360 = ssub.s32 4096, 4096
          %361 = vsyncadd %s355, %s360
          %s362 = smul.addr %s24, 32
          %s363 = smul.addr %s362, 128
          %s364 = scalar_lea.hbm %s0, %s363
          %s365 = sshll.u32 %s358, 4
          %s366 = int_to_ptr.vmem [resolvable:$true] %s365
          %371 = dma.hbm_to_vmem [thread:$0]  %s364, 4096, %s366, %s355, 128, 128, 8
        $region56: #{tpu_custom_call.1} parent=51 // pred_fallthru
          _
      $region52: #{tpu_custom_call.1} parent=5 // pred_fallthru
        _
      %p372 = scmp.le.s32.totalorder 1, %s24
      %p373 = scmp.lt.s32.totalorder %s24, 3
      %p374 = pnand %p372, %p373
      %p375 = pneg %p374
      // Predicated region
      $region57: #{tpu_custom_call.1} parent=5 // pred_check
        _
      $region58: #{tpu_custom_call.1} parent=5 // pred_check_branch
        %377 = sbr.rel (%p374) target = $region60
      $region59: #{tpu_custom_call.1} parent=5 // pred_region
        %s378 = ssub.s32 %s24, 1
        %s379 = sand.u32 %s37, 1
        %s380 = scalar_lea.sflag [#allocation5], %s379
        %s381 = sand.u32 %s37, 1
        %s382 = smul.addr %s381, 256
        %s383 = scalar_lea.vmem [#allocation4], %s382
        // Predicated region
        $region61: #{tpu_custom_call.1} parent=59 // pred_check
          %p384 = pneg %p50
        $region62: #{tpu_custom_call.1} parent=59 // pred_check_branch
          %386 = sbr.rel (%p384) target = $region64
        $region63: #{tpu_custom_call.1} parent=59 // pred_region
          %387 = dma.done %s380, 4096
        $region64: #{tpu_custom_call.1} parent=59 // pred_fallthru
          _
        // Predicated region
        $region65: #{tpu_custom_call.1} parent=59 // pred_check
          %p388 = pneg %p71
        $region66: #{tpu_custom_call.1} parent=59 // pred_check_branch
          %390 = sbr.rel (%p388) target = $region68
        $region67: #{tpu_custom_call.1} parent=59 // pred_region
          %391 = dma.done [#allocation8], 192
        $region68: #{tpu_custom_call.1} parent=59 // pred_fallthru
          _
        // Predicated region
        $region69: #{tpu_custom_call.1} parent=59 // pred_check
          %p392 = pneg %p113
        $region70: #{tpu_custom_call.1} parent=59 // pred_check_branch
          %394 = sbr.rel (%p392) target = $region72
        $region71: #{tpu_custom_call.1} parent=59 // pred_region
          %395 = dma.done [#allocation8], 192
        $region72: #{tpu_custom_call.1} parent=59 // pred_fallthru
          _
        // Predicated region
        $region73: #{tpu_custom_call.1} parent=59 // pred_check
          %p396 = pneg %p155
        $region74: #{tpu_custom_call.1} parent=59 // pred_check_branch
          %398 = sbr.rel (%p396) target = $region76
        $region75: #{tpu_custom_call.1} parent=59 // pred_region
          %399 = dma.done [#allocation11], 1024
        $region76: #{tpu_custom_call.1} parent=59 // pred_fallthru
          _
        // Predicated region
        $region77: #{tpu_custom_call.1} parent=59 // pred_check
          %p400 = pneg %p197
        $region78: #{tpu_custom_call.1} parent=59 // pred_check_branch
          %402 = sbr.rel (%p400) target = $region80
        $region79: #{tpu_custom_call.1} parent=59 // pred_region
          %403 = dma.done [#allocation11], 1024
        $region80: #{tpu_custom_call.1} parent=59 // pred_fallthru
          _
        %s404 = sand.u32 %s37, 1
        %s405 = scalar_lea.sflag [#allocation5], %s404
        %s406 = sand.u32 %s37, 1
        %s407 = smul.addr %s406, 256
        %s408 = scalar_lea.vmem [#allocation4], %s407
        %p409 = pneg %p50
        %p410 = pneg %p47
        %p411 = pneg %p71
        %p412 = pneg %p68
        %p413 = pneg %p92
        %p414 = pneg %p89
        %p415 = pneg %p113
        %p416 = pneg %p110
        %p417 = pneg %p134
        %p418 = pneg %p131
        %p419 = pneg %p155
        %p420 = pneg %p152
        %p421 = pneg %p176
        %p422 = pneg %p173
        %p423 = pneg %p197
        %p424 = pneg %p194
        %p425 = pneg %p218
        %p426 = pneg %p215
        %p427 = pneg %p239
        %p428 = pneg %p236
        %p429 = pneg %p265
        %p430 = pneg %p262
        %s431 = sand.u32 %s252, 1
        %s432 = scalar_lea.sflag [#allocation6], %s431
        %s433 = sand.u32 %s252, 1
        %s434 = smul.addr %s433, 256
        %s435 = scalar_lea.vmem [#allocation13], %s434
        %v437 = vld [vmem:[%s383] sm:$0xff]
        %v438 = vld [vmem:[%s383 + $0x8] sm:$0xff]
        %v439 = vld [vmem:[%s383 + $0x10] sm:$0xff]
        %v440 = vld [vmem:[%s383 + $0x18] sm:$0xff]
        %v441 = vld [vmem:[%s383 + $0x20] sm:$0xff]
        %v442 = vld [vmem:[%s383 + $0x28] sm:$0xff]
        %v443 = vld [vmem:[%s383 + $0x30] sm:$0xff]
        %v444 = vld [vmem:[%s383 + $0x38] sm:$0xff]
        %v445 = vld [vmem:[%s383 + $0x40] sm:$0xff]
        %v446 = vld [vmem:[%s383 + $0x48] sm:$0xff]
        %v447 = vld [vmem:[%s383 + $0x50] sm:$0xff]
        %v448 = vld [vmem:[%s383 + $0x58] sm:$0xff]
        %v449 = vld [vmem:[%s383 + $0x60] sm:$0xff]
        %v450 = vld [vmem:[%s383 + $0x68] sm:$0xff]
        %v451 = vld [vmem:[%s383 + $0x70] sm:$0xff]
        %v452 = vld [vmem:[%s383 + $0x78] sm:$0xff]
        %v453 = vld [vmem:[%s383 + $0x80] sm:$0xff]
        %v454 = vld [vmem:[%s383 + $0x88] sm:$0xff]
        %v455 = vld [vmem:[%s383 + $0x90] sm:$0xff]
        %v456 = vld [vmem:[%s383 + $0x98] sm:$0xff]
        %v457 = vld [vmem:[%s383 + $0xa0] sm:$0xff]
        %v458 = vld [vmem:[%s383 + $0xa8] sm:$0xff]
        %v459 = vld [vmem:[%s383 + $0xb0] sm:$0xff]
        %v460 = vld [vmem:[%s383 + $0xb8] sm:$0xff]
        %v461 = vld [vmem:[%s383 + $0xc0] sm:$0xff]
        %v462 = vld [vmem:[%s383 + $0xc8] sm:$0xff]
        %v463 = vld [vmem:[%s383 + $0xd0] sm:$0xff]
        %v464 = vld [vmem:[%s383 + $0xd8] sm:$0xff]
        %v465 = vld [vmem:[%s383 + $0xe0] sm:$0xff]
        %v466 = vld [vmem:[%s383 + $0xe8] sm:$0xff]
        %v467 = vld [vmem:[%s383 + $0xf0] sm:$0xff]
        %v468 = vld [vmem:[%s383 + $0xf8] sm:$0xff]
        %v469 = vlaneseq
        %v470 = vand.u32 %v469, 127
        %vm471 = vcmp.ge.s32.totalorder %v470, 0
        %vm472 = vcmp.lt.s32.totalorder %v470, 2
        %vm473 = vmand %vm471, %vm472
        %vm506 = vcmask 1046528
        %v507 = vrot.slane %v437, 1
        %v508 = vrot.slane %v438, 1
        %v509 = vsel %vm506, %v507, %v508
        %v510 = vrot.slane %v439, 1
        %v511 = vrot.slane %v440, 1
        %v512 = vsel %vm506, %v510, %v511
        %v513 = vrot.slane %v441, 1
        %v514 = vrot.slane %v442, 1
        %v515 = vsel %vm506, %v513, %v514
        %v516 = vrot.slane %v443, 1
        %v517 = vrot.slane %v444, 1
        %v518 = vsel %vm506, %v516, %v517
        %v519 = vrot.slane %v445, 1
        %v520 = vrot.slane %v446, 1
        %v521 = vsel %vm506, %v519, %v520
        %v522 = vrot.slane %v447, 1
        %v523 = vrot.slane %v448, 1
        %v524 = vsel %vm506, %v522, %v523
        %v525 = vrot.slane %v449, 1
        %v526 = vrot.slane %v450, 1
        %v527 = vsel %vm506, %v525, %v526
        %v528 = vrot.slane %v451, 1
        %v529 = vrot.slane %v452, 1
        %v530 = vsel %vm506, %v528, %v529
        %v531 = vrot.slane %v453, 1
        %v532 = vrot.slane %v454, 1
        %v533 = vsel %vm506, %v531, %v532
        %v534 = vrot.slane %v455, 1
        %v535 = vrot.slane %v456, 1
        %v536 = vsel %vm506, %v534, %v535
        %v537 = vrot.slane %v457, 1
        %v538 = vrot.slane %v458, 1
        %v539 = vsel %vm506, %v537, %v538
        %v540 = vrot.slane %v459, 1
        %v541 = vrot.slane %v460, 1
        %v542 = vsel %vm506, %v540, %v541
        %v543 = vrot.slane %v461, 1
        %v544 = vrot.slane %v462, 1
        %v545 = vsel %vm506, %v543, %v544
        %v546 = vrot.slane %v463, 1
        %v547 = vrot.slane %v464, 1
        %v548 = vsel %vm506, %v546, %v547
        %v549 = vrot.slane %v465, 1
        %v550 = vrot.slane %v466, 1
        %v551 = vsel %vm506, %v549, %v550
        %v552 = vrot.slane %v467, 1
        %v553 = vrot.slane %v468, 1
        %v554 = vsel %vm506, %v552, %v553
        %v603 = vsel %vm506, %v508, %v507
        %v604 = vsel %vm506, %v511, %v510
        %v605 = vsel %vm506, %v514, %v513
        %v606 = vsel %vm506, %v517, %v516
        %v607 = vsel %vm506, %v520, %v519
        %v608 = vsel %vm506, %v523, %v522
        %v609 = vsel %vm506, %v526, %v525
        %v610 = vsel %vm506, %v529, %v528
        %v611 = vsel %vm506, %v532, %v531
        %v612 = vsel %vm506, %v535, %v534
        %v613 = vsel %vm506, %v538, %v537
        %v614 = vsel %vm506, %v541, %v540
        %v615 = vsel %vm506, %v544, %v543
        %v616 = vsel %vm506, %v547, %v546
        %v617 = vsel %vm506, %v550, %v549
        %v618 = vsel %vm506, %v553, %v552
        %v619 = vsel %vm473, 1, 0
        %vm620 = vcmp.eq.s32.totalorder %v619, 1
        %v621 = vsel %vm620, %v509, 0.0
        %v622 = vsel %vm620, %v603, 0.0
        %v623 = vsel %vm620, %v512, 0.0
        %v624 = vsel %vm620, %v604, 0.0
        %v625 = vsel %vm620, %v515, 0.0
        %v626 = vsel %vm620, %v605, 0.0
        %v627 = vsel %vm620, %v518, 0.0
        %v628 = vsel %vm620, %v606, 0.0
        %v629 = vsel %vm620, %v521, 0.0
        %v630 = vsel %vm620, %v607, 0.0
        %v631 = vsel %vm620, %v524, 0.0
        %v632 = vsel %vm620, %v608, 0.0
        %v633 = vsel %vm620, %v527, 0.0
        %v634 = vsel %vm620, %v609, 0.0
        %v635 = vsel %vm620, %v530, 0.0
        %v636 = vsel %vm620, %v610, 0.0
        %v637 = vsel %vm620, %v533, 0.0
        %v638 = vsel %vm620, %v611, 0.0
        %v639 = vsel %vm620, %v536, 0.0
        %v640 = vsel %vm620, %v612, 0.0
        %v641 = vsel %vm620, %v539, 0.0
        %v642 = vsel %vm620, %v613, 0.0
        %v643 = vsel %vm620, %v542, 0.0
        %v644 = vsel %vm620, %v614, 0.0
        %v645 = vsel %vm620, %v545, 0.0
        %v646 = vsel %vm620, %v615, 0.0
        %v647 = vsel %vm620, %v548, 0.0
        %v648 = vsel %vm620, %v616, 0.0
        %v649 = vsel %vm620, %v551, 0.0
        %v650 = vsel %vm620, %v617, 0.0
        %v651 = vsel %vm620, %v554, 0.0
        %v652 = vsel %vm620, %v618, 0.0
        %vm653 = vcmp.ge.s32.totalorder %v470, 2
        %vm654 = vcmp.lt.s32.totalorder %v470, 4
        %vm655 = vmand %vm653, %vm654
        %v656 = vrot.slane %v438, 7
        %v657 = vrot.slane %v440, 7
        %v658 = vrot.slane %v442, 7
        %v659 = vrot.slane %v444, 7
        %v660 = vrot.slane %v446, 7
        %v661 = vrot.slane %v448, 7
        %v662 = vrot.slane %v450, 7
        %v663 = vrot.slane %v452, 7
        %v664 = vrot.slane %v454, 7
        %v665 = vrot.slane %v456, 7
        %v666 = vrot.slane %v458, 7
        %v667 = vrot.slane %v460, 7
        %v668 = vrot.slane %v462, 7
        %v669 = vrot.slane %v464, 7
        %v670 = vrot.slane %v466, 7
        %v671 = vrot.slane %v468, 7
        %vm688 = vcmask 1040384
        %v689 = vrot.slane %v437, 7
        %v690 = vsel %vm688, %v689, %v656
        %v691 = vrot.slane %v439, 7
        %v692 = vsel %vm688, %v691, %v657
        %v693 = vrot.slane %v441, 7
        %v694 = vsel %vm688, %v693, %v658
        %v695 = vrot.slane %v443, 7
        %v696 = vsel %vm688, %v695, %v659
        %v697 = vrot.slane %v445, 7
        %v698 = vsel %vm688, %v697, %v660
        %v699 = vrot.slane %v447, 7
        %v700 = vsel %vm688, %v699, %v661
        %v701 = vrot.slane %v449, 7
        %v702 = vsel %vm688, %v701, %v662
        %v703 = vrot.slane %v451, 7
        %v704 = vsel %vm688, %v703, %v663
        %v705 = vrot.slane %v453, 7
        %v706 = vsel %vm688, %v705, %v664
        %v707 = vrot.slane %v455, 7
        %v708 = vsel %vm688, %v707, %v665
        %v709 = vrot.slane %v457, 7
        %v710 = vsel %vm688, %v709, %v666
        %v711 = vrot.slane %v459, 7
        %v712 = vsel %vm688, %v711, %v667
        %v713 = vrot.slane %v461, 7
        %v714 = vsel %vm688, %v713, %v668
        %v715 = vrot.slane %v463, 7
        %v716 = vsel %vm688, %v715, %v669
        %v717 = vrot.slane %v465, 7
        %v718 = vsel %vm688, %v717, %v670
        %v719 = vrot.slane %v467, 7
        %v720 = vsel %vm688, %v719, %v671
        %v753 = vsel %vm688, %v656, %v689
        %v754 = vsel %vm688, %v657, %v691
        %v755 = vsel %vm688, %v658, %v693
        %v756 = vsel %vm688, %v659, %v695
        %v757 = vsel %vm688, %v660, %v697
        %v758 = vsel %vm688, %v661, %v699
        %v759 = vsel %vm688, %v662, %v701
        %v760 = vsel %vm688, %v663, %v703
        %v761 = vsel %vm688, %v664, %v705
        %v762 = vsel %vm688, %v665, %v707
        %v763 = vsel %vm688, %v666, %v709
        %v764 = vsel %vm688, %v667, %v711
        %v765 = vsel %vm688, %v668, %v713
        %v766 = vsel %vm688, %v669, %v715
        %v767 = vsel %vm688, %v670, %v717
        %v768 = vsel %vm688, %v671, %v719
        %v769 = vsel %vm655, 1, 0
        %vm770 = vcmp.eq.s32.totalorder %v769, 1
        %v771 = vsel %vm770, %v753, %v621
        %v772 = vsel %vm770, %v690, %v622
        %v773 = vsel %vm770, %v754, %v623
        %v774 = vsel %vm770, %v692, %v624
        %v775 = vsel %vm770, %v755, %v625
        %v776 = vsel %vm770, %v694, %v626
        %v777 = vsel %vm770, %v756, %v627
        %v778 = vsel %vm770, %v696, %v628
        %v779 = vsel %vm770, %v757, %v629
        %v780 = vsel %vm770, %v698, %v630
        %v781 = vsel %vm770, %v758, %v631
        %v782 = vsel %vm770, %v700, %v632
        %v783 = vsel %vm770, %v759, %v633
        %v784 = vsel %vm770, %v702, %v634
        %v785 = vsel %vm770, %v760, %v635
        %v786 = vsel %vm770, %v704, %v636
        %v787 = vsel %vm770, %v761, %v637
        %v788 = vsel %vm770, %v706, %v638
        %v789 = vsel %vm770, %v762, %v639
        %v790 = vsel %vm770, %v708, %v640
        %v791 = vsel %vm770, %v763, %v641
        %v792 = vsel %vm770, %v710, %v642
        %v793 = vsel %vm770, %v764, %v643
        %v794 = vsel %vm770, %v712, %v644
        %v795 = vsel %vm770, %v765, %v645
        %v796 = vsel %vm770, %v714, %v646
        %v797 = vsel %vm770, %v766, %v647
        %v798 = vsel %vm770, %v716, %v648
        %v799 = vsel %vm770, %v767, %v649
        %v800 = vsel %vm770, %v718, %v650
        %v801 = vsel %vm770, %v768, %v651
        %v802 = vsel %vm770, %v720, %v652
        %803 = vst [vmem:[#allocation2] sm:$0xff] 0.0
        %804 = vst [vmem:[#allocation2 + $0x8] sm:$0xff] 0.0
        %805 = vst [vmem:[#allocation2 + $0x10] sm:$0x3] 0.0
        %s806 = scalar_lea.vmem [#allocation2], 408
        %807 = vst [vmem:[%s806] sm:$0xff] 0.0
        %808 = vst [vmem:[%s806 + $0x8] sm:$0xff] 0.0
        %809 = vst [vmem:[%s806 + $0x10] sm:$0x3] 0.0
        %810 = vst [vmem:[#allocation2] sm:$0x1] 0.0
        %811 = vst [vmem:[#allocation2 + $0x18] sm:$0x1] 0.0
        %812 = vst [vmem:[#allocation2 + $0x30] sm:$0x1] 0.0
        %813 = vst [vmem:[#allocation2 + $0x48] sm:$0x1] 0.0
        %814 = vst [vmem:[#allocation2 + $0x60] sm:$0x1] 0.0
        %815 = vst [vmem:[#allocation2 + $0x78] sm:$0x1] 0.0
        %816 = vst [vmem:[#allocation2 + $0x90] sm:$0x1] 0.0
        %817 = vst [vmem:[#allocation2 + $0xa8] sm:$0x1] 0.0
        %818 = vst [vmem:[#allocation2 + $0xc0] sm:$0x1] 0.0
        %819 = vst [vmem:[#allocation2 + $0xd8] sm:$0x1] 0.0
        %820 = vst [vmem:[#allocation2 + $0xf0] sm:$0x1] 0.0
        %821 = vst [vmem:[#allocation2 + $0x108] sm:$0x1] 0.0
        %822 = vst [vmem:[#allocation2 + $0x120] sm:$0x1] 0.0
        %823 = vst [vmem:[#allocation2 + $0x138] sm:$0x1] 0.0
        %824 = vst [vmem:[#allocation2 + $0x150] sm:$0x1] 0.0
        %825 = vst [vmem:[#allocation2 + $0x168] sm:$0x1] 0.0
        %826 = vst [vmem:[#allocation2 + $0x180] sm:$0x1] 0.0
        %827 = vst [vmem:[#allocation2 + $0x198] sm:$0x1] 0.0
        %828 = vst [vmem:[#allocation2 + $0x11] sm:$0x1] 0.0
        %829 = vst [vmem:[#allocation2 + $0x29] sm:$0x1] 0.0
        %830 = vst [vmem:[#allocation2 + $0x41] sm:$0x1] 0.0
        %831 = vst [vmem:[#allocation2 + $0x59] sm:$0x1] 0.0
        %832 = vst [vmem:[#allocation2 + $0x71] sm:$0x1] 0.0
        %833 = vst [vmem:[#allocation2 + $0x89] sm:$0x1] 0.0
        %834 = vst [vmem:[#allocation2 + $0xa1] sm:$0x1] 0.0
        %835 = vst [vmem:[#allocation2 + $0xb9] sm:$0x1] 0.0
        %836 = vst [vmem:[#allocation2 + $0xd1] sm:$0x1] 0.0
        %837 = vst [vmem:[#allocation2 + $0xe9] sm:$0x1] 0.0
        %838 = vst [vmem:[#allocation2 + $0x101] sm:$0x1] 0.0
        %839 = vst [vmem:[#allocation2 + $0x119] sm:$0x1] 0.0
        %840 = vst [vmem:[#allocation2 + $0x131] sm:$0x1] 0.0
        %841 = vst [vmem:[#allocation2 + $0x149] sm:$0x1] 0.0
        %842 = vst [vmem:[#allocation2 + $0x161] sm:$0x1] 0.0
        %843 = vst [vmem:[#allocation2 + $0x179] sm:$0x1] 0.0
        %844 = vst [vmem:[#allocation2 + $0x191] sm:$0x1] 0.0
        %845 = vst [vmem:[#allocation2 + $0x1a9] sm:$0x1] 0.0
        %s846 = scalar_lea.vmem [#allocation2], 24
        %847 = vst [vmem:[%s846 + $0x1] sm:$0xff] %v771
        %848 = vst [vmem:[%s846 + $0x9] sm:$0xff] %v772
        %849 = vst [vmem:[%s846 + $0x19] sm:$0xff] %v773
        %850 = vst [vmem:[%s846 + $0x21] sm:$0xff] %v774
        %851 = vst [vmem:[%s846 + $0x31] sm:$0xff] %v775
        %852 = vst [vmem:[%s846 + $0x39] sm:$0xff] %v776
        %853 = vst [vmem:[%s846 + $0x49] sm:$0xff] %v777
        %854 = vst [vmem:[%s846 + $0x51] sm:$0xff] %v778
        %855 = vst [vmem:[%s846 + $0x61] sm:$0xff] %v779
        %856 = vst [vmem:[%s846 + $0x69] sm:$0xff] %v780
        %857 = vst [vmem:[%s846 + $0x79] sm:$0xff] %v781
        %858 = vst [vmem:[%s846 + $0x81] sm:$0xff] %v782
        %859 = vst [vmem:[%s846 + $0x91] sm:$0xff] %v783
        %860 = vst [vmem:[%s846 + $0x99] sm:$0xff] %v784
        %861 = vst [vmem:[%s846 + $0xa9] sm:$0xff] %v785
        %862 = vst [vmem:[%s846 + $0xb1] sm:$0xff] %v786
        %863 = vst [vmem:[%s846 + $0xc1] sm:$0xff] %v787
        %864 = vst [vmem:[%s846 + $0xc9] sm:$0xff] %v788
        %865 = vst [vmem:[%s846 + $0xd9] sm:$0xff] %v789
        %866 = vst [vmem:[%s846 + $0xe1] sm:$0xff] %v790
        %867 = vst [vmem:[%s846 + $0xf1] sm:$0xff] %v791
        %868 = vst [vmem:[%s846 + $0xf9] sm:$0xff] %v792
        %869 = vst [vmem:[%s846 + $0x109] sm:$0xff] %v793
        %870 = vst [vmem:[%s846 + $0x111] sm:$0xff] %v794
        %871 = vst [vmem:[%s846 + $0x121] sm:$0xff] %v795
        %872 = vst [vmem:[%s846 + $0x129] sm:$0xff] %v796
        %873 = vst [vmem:[%s846 + $0x139] sm:$0xff] %v797
        %874 = vst [vmem:[%s846 + $0x141] sm:$0xff] %v798
        %875 = vst [vmem:[%s846 + $0x151] sm:$0xff] %v799
        %876 = vst [vmem:[%s846 + $0x159] sm:$0xff] %v800
        %877 = vst [vmem:[%s846 + $0x169] sm:$0xff] %v801
        %878 = vst [vmem:[%s846 + $0x171] sm:$0xff] %v802
        %v879 = vsel %vm620, %v439, 0.0
        %v880 = vsel %vm620, %v440, 0.0
        %v881 = vsel %vm620, %v441, 0.0
        %v882 = vsel %vm620, %v442, 0.0
        %v883 = vsel %vm620, %v443, 0.0
        %v884 = vsel %vm620, %v444, 0.0
        %v885 = vsel %vm620, %v445, 0.0
        %v886 = vsel %vm620, %v446, 0.0
        %v887 = vsel %vm620, %v447, 0.0
        %v888 = vsel %vm620, %v448, 0.0
        %v889 = vsel %vm620, %v449, 0.0
        %v890 = vsel %vm620, %v450, 0.0
        %v891 = vsel %vm620, %v451, 0.0
        %v892 = vsel %vm620, %v452, 0.0
        %v893 = vsel %vm620, %v453, 0.0
        %v894 = vsel %vm620, %v454, 0.0
        %v895 = vsel %vm620, %v455, 0.0
        %v896 = vsel %vm620, %v456, 0.0
        %v897 = vsel %vm620, %v457, 0.0
        %v898 = vsel %vm620, %v458, 0.0
        %v899 = vsel %vm620, %v459, 0.0
        %v900 = vsel %vm620, %v460, 0.0
        %v901 = vsel %vm620, %v461, 0.0
        %v902 = vsel %vm620, %v462, 0.0
        %v903 = vsel %vm620, %v463, 0.0
        %v904 = vsel %vm620, %v464, 0.0
        %v905 = vsel %vm620, %v465, 0.0
        %v906 = vsel %vm620, %v466, 0.0
        %v907 = vsel %vm620, %v467, 0.0
        %v908 = vsel %vm620, %v468, 0.0
        %v909 = vsel %vm620, %v437, 0.0
        %v910 = vsel %vm620, %v438, 0.0
        %v911 = vsel %vm770, %v467, %v879
        %v912 = vsel %vm770, %v468, %v880
        %v913 = vsel %vm770, %v437, %v881
        %v914 = vsel %vm770, %v438, %v882
        %v915 = vsel %vm770, %v439, %v883
        %v916 = vsel %vm770, %v440, %v884
        %v917 = vsel %vm770, %v441, %v885
        %v918 = vsel %vm770, %v442, %v886
        %v919 = vsel %vm770, %v443, %v887
        %v920 = vsel %vm770, %v444, %v888
        %v921 = vsel %vm770, %v445, %v889
        %v922 = vsel %vm770, %v446, %v890
        %v923 = vsel %vm770, %v447, %v891
        %v924 = vsel %vm770, %v448, %v892
        %v925 = vsel %vm770, %v449, %v893
        %v926 = vsel %vm770, %v450, %v894
        %v927 = vsel %vm770, %v451, %v895
        %v928 = vsel %vm770, %v452, %v896
        %v929 = vsel %vm770, %v453, %v897
        %v930 = vsel %vm770, %v454, %v898
        %v931 = vsel %vm770, %v455, %v899
        %v932 = vsel %vm770, %v456, %v900
        %v933 = vsel %vm770, %v457, %v901
        %v934 = vsel %vm770, %v458, %v902
        %v935 = vsel %vm770, %v459, %v903
        %v936 = vsel %vm770, %v460, %v904
        %v937 = vsel %vm770, %v461, %v905
        %v938 = vsel %vm770, %v462, %v906
        %v939 = vsel %vm770, %v463, %v907
        %v940 = vsel %vm770, %v464, %v908
        %v941 = vsel %vm770, %v465, %v909
        %v942 = vsel %vm770, %v466, %v910
        %943 = vst [vmem:[#allocation3] sm:$0xff] 0.0
        %944 = vst [vmem:[#allocation3 + $0x8] sm:$0xff] 0.0
        %945 = vst [vmem:[#allocation3 + $0x10] sm:$0x3] 0.0
        %s946 = scalar_lea.vmem [#allocation3], 408
        %947 = vst [vmem:[%s946] sm:$0xff] 0.0
        %948 = vst [vmem:[%s946 + $0x8] sm:$0xff] 0.0
        %949 = vst [vmem:[%s946 + $0x10] sm:$0x3] 0.0
        %950 = vst [vmem:[#allocation3] sm:$0x1] 0.0
        %951 = vst [vmem:[#allocation3 + $0x18] sm:$0x1] 0.0
        %952 = vst [vmem:[#allocation3 + $0x30] sm:$0x1] 0.0
        %953 = vst [vmem:[#allocation3 + $0x48] sm:$0x1] 0.0
        %954 = vst [vmem:[#allocation3 + $0x60] sm:$0x1] 0.0
        %955 = vst [vmem:[#allocation3 + $0x78] sm:$0x1] 0.0
        %956 = vst [vmem:[#allocation3 + $0x90] sm:$0x1] 0.0
        %957 = vst [vmem:[#allocation3 + $0xa8] sm:$0x1] 0.0
        %958 = vst [vmem:[#allocation3 + $0xc0] sm:$0x1] 0.0
        %959 = vst [vmem:[#allocation3 + $0xd8] sm:$0x1] 0.0
        %960 = vst [vmem:[#allocation3 + $0xf0] sm:$0x1] 0.0
        %961 = vst [vmem:[#allocation3 + $0x108] sm:$0x1] 0.0
        %962 = vst [vmem:[#allocation3 + $0x120] sm:$0x1] 0.0
        %963 = vst [vmem:[#allocation3 + $0x138] sm:$0x1] 0.0
        %964 = vst [vmem:[#allocation3 + $0x150] sm:$0x1] 0.0
        %965 = vst [vmem:[#allocation3 + $0x168] sm:$0x1] 0.0
        %966 = vst [vmem:[#allocation3 + $0x180] sm:$0x1] 0.0
        %967 = vst [vmem:[#allocation3 + $0x198] sm:$0x1] 0.0
        %968 = vst [vmem:[#allocation3 + $0x11] sm:$0x1] 0.0
        %969 = vst [vmem:[#allocation3 + $0x29] sm:$0x1] 0.0
        %970 = vst [vmem:[#allocation3 + $0x41] sm:$0x1] 0.0
        %971 = vst [vmem:[#allocation3 + $0x59] sm:$0x1] 0.0
        %972 = vst [vmem:[#allocation3 + $0x71] sm:$0x1] 0.0
        %973 = vst [vmem:[#allocation3 + $0x89] sm:$0x1] 0.0
        %974 = vst [vmem:[#allocation3 + $0xa1] sm:$0x1] 0.0
        %975 = vst [vmem:[#allocation3 + $0xb9] sm:$0x1] 0.0
        %976 = vst [vmem:[#allocation3 + $0xd1] sm:$0x1] 0.0
        %977 = vst [vmem:[#allocation3 + $0xe9] sm:$0x1] 0.0
        %978 = vst [vmem:[#allocation3 + $0x101] sm:$0x1] 0.0
        %979 = vst [vmem:[#allocation3 + $0x119] sm:$0x1] 0.0
        %980 = vst [vmem:[#allocation3 + $0x131] sm:$0x1] 0.0
        %981 = vst [vmem:[#allocation3 + $0x149] sm:$0x1] 0.0
        %982 = vst [vmem:[#allocation3 + $0x161] sm:$0x1] 0.0
        %983 = vst [vmem:[#allocation3 + $0x179] sm:$0x1] 0.0
        %984 = vst [vmem:[#allocation3 + $0x191] sm:$0x1] 0.0
        %985 = vst [vmem:[#allocation3 + $0x1a9] sm:$0x1] 0.0
        %s986 = scalar_lea.vmem [#allocation3], 24
        %987 = vst [vmem:[%s986 + $0x1] sm:$0xff] %v911
        %988 = vst [vmem:[%s986 + $0x9] sm:$0xff] %v912
        %989 = vst [vmem:[%s986 + $0x19] sm:$0xff] %v913
        %990 = vst [vmem:[%s986 + $0x21] sm:$0xff] %v914
        %991 = vst [vmem:[%s986 + $0x31] sm:$0xff] %v915
        %992 = vst [vmem:[%s986 + $0x39] sm:$0xff] %v916
        %993 = vst [vmem:[%s986 + $0x49] sm:$0xff] %v917
        %994 = vst [vmem:[%s986 + $0x51] sm:$0xff] %v918
        %995 = vst [vmem:[%s986 + $0x61] sm:$0xff] %v919
        %996 = vst [vmem:[%s986 + $0x69] sm:$0xff] %v920
        %997 = vst [vmem:[%s986 + $0x79] sm:$0xff] %v921
        %998 = vst [vmem:[%s986 + $0x81] sm:$0xff] %v922
        %999 = vst [vmem:[%s986 + $0x91] sm:$0xff] %v923
        %1000 = vst [vmem:[%s986 + $0x99] sm:$0xff] %v924
        %1001 = vst [vmem:[%s986 + $0xa9] sm:$0xff] %v925
        %1002 = vst [vmem:[%s986 + $0xb1] sm:$0xff] %v926
        %1003 = vst [vmem:[%s986 + $0xc1] sm:$0xff] %v927
        %1004 = vst [vmem:[%s986 + $0xc9] sm:$0xff] %v928
        %1005 = vst [vmem:[%s986 + $0xd9] sm:$0xff] %v929
        %1006 = vst [vmem:[%s986 + $0xe1] sm:$0xff] %v930
        %1007 = vst [vmem:[%s986 + $0xf1] sm:$0xff] %v931
        %1008 = vst [vmem:[%s986 + $0xf9] sm:$0xff] %v932
        %1009 = vst [vmem:[%s986 + $0x109] sm:$0xff] %v933
        %1010 = vst [vmem:[%s986 + $0x111] sm:$0xff] %v934
        %1011 = vst [vmem:[%s986 + $0x121] sm:$0xff] %v935
        %1012 = vst [vmem:[%s986 + $0x129] sm:$0xff] %v936
        %1013 = vst [vmem:[%s986 + $0x139] sm:$0xff] %v937
        %1014 = vst [vmem:[%s986 + $0x141] sm:$0xff] %v938
        %1015 = vst [vmem:[%s986 + $0x151] sm:$0xff] %v939
        %1016 = vst [vmem:[%s986 + $0x159] sm:$0xff] %v940
        %1017 = vst [vmem:[%s986 + $0x169] sm:$0xff] %v941
        %1018 = vst [vmem:[%s986 + $0x171] sm:$0xff] %v942
        %v1019 = vld [vmem:[#allocation7] sm:$0x7]
        %v1020 = vld [vmem:[#allocation7 + $0x4] sm:$0x7]
        %v1021 = vld [vmem:[#allocation7 + $0x8] sm:$0x7]
        %v1022 = vld [vmem:[#allocation9] sm:$0x7]
        %v1023 = vld [vmem:[#allocation9 + $0x4] sm:$0x7]
        %v1024 = vld [vmem:[#allocation9 + $0x8] sm:$0x7]
        %v1025 = vld [vmem:[%s2] sm:$0x1]
        %v1026 = vld [vmem:[%s4] sm:$0x1]
        %v1027 = vadd.f32 %v1025, %v1026
        %v1028 = vld [vmem:[#allocation10] sm:$0xf]
        %v1029 = vld [vmem:[#allocation10 + $0x4] sm:$0xf]
        %v1030 = vld [vmem:[#allocation10 + $0x8] sm:$0xf]
        %v1031 = vld [vmem:[#allocation10 + $0xc] sm:$0xf]
        %v1032 = vld [vmem:[#allocation10 + $0x10] sm:$0xf]
        %v1033 = vld [vmem:[#allocation10 + $0x14] sm:$0xf]
        %v1034 = vld [vmem:[#allocation10 + $0x18] sm:$0xf]
        %v1035 = vld [vmem:[#allocation10 + $0x1c] sm:$0xf]
        %v1036 = vld [vmem:[#allocation10 + $0x20] sm:$0xf]
        %v1037 = vld [vmem:[#allocation10 + $0x24] sm:$0xf]
        %v1038 = vld [vmem:[#allocation10 + $0x28] sm:$0xf]
        %v1039 = vld [vmem:[#allocation10 + $0x2c] sm:$0xf]
        %v1040 = vld [vmem:[#allocation10 + $0x30] sm:$0xf]
        %v1041 = vld [vmem:[#allocation10 + $0x34] sm:$0xf]
        %v1042 = vld [vmem:[#allocation10 + $0x38] sm:$0xf]
        %v1043 = vld [vmem:[#allocation10 + $0x3c] sm:$0xf]
        %v1044 = vld [vmem:[%s6] sm:$0x1]
        %v1045 = vld [vmem:[#allocation12] sm:$0xf]
        %v1046 = vld [vmem:[#allocation12 + $0x4] sm:$0xf]
        %v1047 = vld [vmem:[#allocation12 + $0x8] sm:$0xf]
        %v1048 = vld [vmem:[#allocation12 + $0xc] sm:$0xf]
        %v1049 = vld [vmem:[#allocation12 + $0x10] sm:$0xf]
        %v1050 = vld [vmem:[#allocation12 + $0x14] sm:$0xf]
        %v1051 = vld [vmem:[#allocation12 + $0x18] sm:$0xf]
        %v1052 = vld [vmem:[#allocation12 + $0x1c] sm:$0xf]
        %v1053 = vld [vmem:[#allocation12 + $0x20] sm:$0xf]
        %v1054 = vld [vmem:[#allocation12 + $0x24] sm:$0xf]
        %v1055 = vld [vmem:[#allocation12 + $0x28] sm:$0xf]
        %v1056 = vld [vmem:[#allocation12 + $0x2c] sm:$0xf]
        %v1057 = vld [vmem:[#allocation12 + $0x30] sm:$0xf]
        %v1058 = vld [vmem:[#allocation12 + $0x34] sm:$0xf]
        %v1059 = vld [vmem:[#allocation12 + $0x38] sm:$0xf]
        %v1060 = vld [vmem:[#allocation12 + $0x3c] sm:$0xf]
        %v1061 = vld [vmem:[%s8] sm:$0x1]
        %v1062 = vld [vmem:[%s9] sm:$0x1]
        %v1064 = vlaneseq
        %v1065 = vshrl.u32 %v1064, 7
        %v1066 = vsub.s32 0, %v1065
        %v1067 = vrot.slane %v1027, %v1066
        %s1069 = smul.u32 0, 24
        %s1070 = scalar_lea.vmem [#allocation2], %s1069
        %v1071 = vld [vmem:[%s1070] sm:$0xff]
        %v1072 = vld [vmem:[%s1070 + $0x8] sm:$0xff]
        %v1073 = vld [vmem:[%s1070 + $0x18] sm:$0xff]
        %v1074 = vld [vmem:[%s1070 + $0x20] sm:$0xff]
        %v1075 = vld [vmem:[%s1070 + $0x30] sm:$0xff]
        %v1076 = vld [vmem:[%s1070 + $0x38] sm:$0xff]
        %v1077 = vld [vmem:[%s1070 + $0x48] sm:$0xff]
        %v1078 = vld [vmem:[%s1070 + $0x50] sm:$0xff]
        %v1079 = vld [vmem:[%s1070 + $0x60] sm:$0xff]
        %v1080 = vld [vmem:[%s1070 + $0x68] sm:$0xff]
        %v1081 = vld [vmem:[%s1070 + $0x78] sm:$0xff]
        %v1082 = vld [vmem:[%s1070 + $0x80] sm:$0xff]
        %v1083 = vld [vmem:[%s1070 + $0x90] sm:$0xff]
        %v1084 = vld [vmem:[%s1070 + $0x98] sm:$0xff]
        %v1085 = vld [vmem:[%s1070 + $0xa8] sm:$0xff]
        %v1086 = vld [vmem:[%s1070 + $0xb0] sm:$0xff]
        %v1087 = vld [vmem:[%s1070 + $0xc0] sm:$0xff]
        %v1088 = vld [vmem:[%s1070 + $0xc8] sm:$0xff]
        %v1089 = vld [vmem:[%s1070 + $0xd8] sm:$0xff]
        %v1090 = vld [vmem:[%s1070 + $0xe0] sm:$0xff]
        %v1091 = vld [vmem:[%s1070 + $0xf0] sm:$0xff]
        %v1092 = vld [vmem:[%s1070 + $0xf8] sm:$0xff]
        %v1093 = vld [vmem:[%s1070 + $0x108] sm:$0xff]
        %v1094 = vld [vmem:[%s1070 + $0x110] sm:$0xff]
        %v1095 = vld [vmem:[%s1070 + $0x120] sm:$0xff]
        %v1096 = vld [vmem:[%s1070 + $0x128] sm:$0xff]
        %v1097 = vld [vmem:[%s1070 + $0x138] sm:$0xff]
        %v1098 = vld [vmem:[%s1070 + $0x140] sm:$0xff]
        %v1099 = vld [vmem:[%s1070 + $0x150] sm:$0xff]
        %v1100 = vld [vmem:[%s1070 + $0x158] sm:$0xff]
        %v1101 = vld [vmem:[%s1070 + $0x168] sm:$0xff]
        %v1102 = vld [vmem:[%s1070 + $0x170] sm:$0xff]
        %s1103 = scalar_lea.vmem [#allocation3], %s1069
        %v1104 = vld [vmem:[%s1103] sm:$0xff]
        %v1105 = vld [vmem:[%s1103 + $0x8] sm:$0xff]
        %v1106 = vld [vmem:[%s1103 + $0x18] sm:$0xff]
        %v1107 = vld [vmem:[%s1103 + $0x20] sm:$0xff]
        %v1108 = vld [vmem:[%s1103 + $0x30] sm:$0xff]
        %v1109 = vld [vmem:[%s1103 + $0x38] sm:$0xff]
        %v1110 = vld [vmem:[%s1103 + $0x48] sm:$0xff]
        %v1111 = vld [vmem:[%s1103 + $0x50] sm:$0xff]
        %v1112 = vld [vmem:[%s1103 + $0x60] sm:$0xff]
        %v1113 = vld [vmem:[%s1103 + $0x68] sm:$0xff]
        %v1114 = vld [vmem:[%s1103 + $0x78] sm:$0xff]
        %v1115 = vld [vmem:[%s1103 + $0x80] sm:$0xff]
        %v1116 = vld [vmem:[%s1103 + $0x90] sm:$0xff]
        %v1117 = vld [vmem:[%s1103 + $0x98] sm:$0xff]
        %v1118 = vld [vmem:[%s1103 + $0xa8] sm:$0xff]
        %v1119 = vld [vmem:[%s1103 + $0xb0] sm:$0xff]
        %v1120 = vld [vmem:[%s1103 + $0xc0] sm:$0xff]
        %v1121 = vld [vmem:[%s1103 + $0xc8] sm:$0xff]
        %v1122 = vld [vmem:[%s1103 + $0xd8] sm:$0xff]
        %v1123 = vld [vmem:[%s1103 + $0xe0] sm:$0xff]
        %v1124 = vld [vmem:[%s1103 + $0xf0] sm:$0xff]
        %v1125 = vld [vmem:[%s1103 + $0xf8] sm:$0xff]
        %v1126 = vld [vmem:[%s1103 + $0x108] sm:$0xff]
        %v1127 = vld [vmem:[%s1103 + $0x110] sm:$0xff]
        %v1128 = vld [vmem:[%s1103 + $0x120] sm:$0xff]
        %v1129 = vld [vmem:[%s1103 + $0x128] sm:$0xff]
        %v1130 = vld [vmem:[%s1103 + $0x138] sm:$0xff]
        %v1131 = vld [vmem:[%s1103 + $0x140] sm:$0xff]
        %v1132 = vld [vmem:[%s1103 + $0x150] sm:$0xff]
        %v1133 = vld [vmem:[%s1103 + $0x158] sm:$0xff]
        %v1134 = vld [vmem:[%s1103 + $0x168] sm:$0xff]
        %v1135 = vld [vmem:[%s1103 + $0x170] sm:$0xff]
        %v1136 = vlaneseq
        %v1137 = vshrl.u32 %v1136, 7
        %v1138 = vsub.s32 0, %v1137
        %v1139 = vrot.slane %v1019, %v1138
        %v1140 = vmul.f32 %v1139, %v1071
        %v1141 = vmul.f32 %v1139, %v1072
        %v1142 = vmul.f32 %v1139, %v1073
        %v1143 = vmul.f32 %v1139, %v1074
        %v1144 = vmul.f32 %v1139, %v1075
        %v1145 = vmul.f32 %v1139, %v1076
        %v1146 = vmul.f32 %v1139, %v1077
        %v1147 = vmul.f32 %v1139, %v1078
        %v1148 = vmul.f32 %v1139, %v1079
        %v1149 = vmul.f32 %v1139, %v1080
        %v1150 = vmul.f32 %v1139, %v1081
        %v1151 = vmul.f32 %v1139, %v1082
        %v1152 = vmul.f32 %v1139, %v1083
        %v1153 = vmul.f32 %v1139, %v1084
        %v1154 = vmul.f32 %v1139, %v1085
        %v1155 = vmul.f32 %v1139, %v1086
        %v1156 = vmul.f32 %v1139, %v1087
        %v1157 = vmul.f32 %v1139, %v1088
        %v1158 = vmul.f32 %v1139, %v1089
        %v1159 = vmul.f32 %v1139, %v1090
        %v1160 = vmul.f32 %v1139, %v1091
        %v1161 = vmul.f32 %v1139, %v1092
        %v1162 = vmul.f32 %v1139, %v1093
        %v1163 = vmul.f32 %v1139, %v1094
        %v1164 = vmul.f32 %v1139, %v1095
        %v1165 = vmul.f32 %v1139, %v1096
        %v1166 = vmul.f32 %v1139, %v1097
        %v1167 = vmul.f32 %v1139, %v1098
        %v1168 = vmul.f32 %v1139, %v1099
        %v1169 = vmul.f32 %v1139, %v1100
        %v1170 = vmul.f32 %v1139, %v1101
        %v1171 = vmul.f32 %v1139, %v1102
        %v1172 = vadd.f32 %v1067, %v1140
        %v1173 = vadd.f32 %v1067, %v1141
        %v1174 = vadd.f32 %v1067, %v1142
        %v1175 = vadd.f32 %v1067, %v1143
        %v1176 = vadd.f32 %v1067, %v1144
        %v1177 = vadd.f32 %v1067, %v1145
        %v1178 = vadd.f32 %v1067, %v1146
        %v1179 = vadd.f32 %v1067, %v1147
        %v1180 = vadd.f32 %v1067, %v1148
        %v1181 = vadd.f32 %v1067, %v1149
        %v1182 = vadd.f32 %v1067, %v1150
        %v1183 = vadd.f32 %v1067, %v1151
        %v1184 = vadd.f32 %v1067, %v1152
        %v1185 = vadd.f32 %v1067, %v1153
        %v1186 = vadd.f32 %v1067, %v1154
        %v1187 = vadd.f32 %v1067, %v1155
        %v1188 = vadd.f32 %v1067, %v1156
        %v1189 = vadd.f32 %v1067, %v1157
        %v1190 = vadd.f32 %v1067, %v1158
        %v1191 = vadd.f32 %v1067, %v1159
        %v1192 = vadd.f32 %v1067, %v1160
        %v1193 = vadd.f32 %v1067, %v1161
        %v1194 = vadd.f32 %v1067, %v1162
        %v1195 = vadd.f32 %v1067, %v1163
        %v1196 = vadd.f32 %v1067, %v1164
        %v1197 = vadd.f32 %v1067, %v1165
        %v1198 = vadd.f32 %v1067, %v1166
        %v1199 = vadd.f32 %v1067, %v1167
        %v1200 = vadd.f32 %v1067, %v1168
        %v1201 = vadd.f32 %v1067, %v1169
        %v1202 = vadd.f32 %v1067, %v1170
        %v1203 = vadd.f32 %v1067, %v1171
        %v1204 = vlaneseq
        %v1205 = vshrl.u32 %v1204, 7
        %v1206 = vsub.s32 0, %v1205
        %v1207 = vrot.slane %v1022, %v1206
        %v1208 = vmul.f32 %v1207, %v1104
        %v1209 = vmul.f32 %v1207, %v1105
        %v1210 = vmul.f32 %v1207, %v1106
        %v1211 = vmul.f32 %v1207, %v1107
        %v1212 = vmul.f32 %v1207, %v1108
        %v1213 = vmul.f32 %v1207, %v1109
        %v1214 = vmul.f32 %v1207, %v1110
        %v1215 = vmul.f32 %v1207, %v1111
        %v1216 = vmul.f32 %v1207, %v1112
        %v1217 = vmul.f32 %v1207, %v1113
        %v1218 = vmul.f32 %v1207, %v1114
        %v1219 = vmul.f32 %v1207, %v1115
        %v1220 = vmul.f32 %v1207, %v1116
        %v1221 = vmul.f32 %v1207, %v1117
        %v1222 = vmul.f32 %v1207, %v1118
        %v1223 = vmul.f32 %v1207, %v1119
        %v1224 = vmul.f32 %v1207, %v1120
        %v1225 = vmul.f32 %v1207, %v1121
        %v1226 = vmul.f32 %v1207, %v1122
        %v1227 = vmul.f32 %v1207, %v1123
        %v1228 = vmul.f32 %v1207, %v1124
        %v1229 = vmul.f32 %v1207, %v1125
        %v1230 = vmul.f32 %v1207, %v1126
        %v1231 = vmul.f32 %v1207, %v1127
        %v1232 = vmul.f32 %v1207, %v1128
        %v1233 = vmul.f32 %v1207, %v1129
        %v1234 = vmul.f32 %v1207, %v1130
        %v1235 = vmul.f32 %v1207, %v1131
        %v1236 = vmul.f32 %v1207, %v1132
        %v1237 = vmul.f32 %v1207, %v1133
        %v1238 = vmul.f32 %v1207, %v1134
        %v1239 = vmul.f32 %v1207, %v1135
        %v1240 = vadd.f32 %v1172, %v1208
        %v1241 = vadd.f32 %v1173, %v1209
        %v1242 = vadd.f32 %v1174, %v1210
        %v1243 = vadd.f32 %v1175, %v1211
        %v1244 = vadd.f32 %v1176, %v1212
        %v1245 = vadd.f32 %v1177, %v1213
        %v1246 = vadd.f32 %v1178, %v1214
        %v1247 = vadd.f32 %v1179, %v1215
        %v1248 = vadd.f32 %v1180, %v1216
        %v1249 = vadd.f32 %v1181, %v1217
        %v1250 = vadd.f32 %v1182, %v1218
        %v1251 = vadd.f32 %v1183, %v1219
        %v1252 = vadd.f32 %v1184, %v1220
        %v1253 = vadd.f32 %v1185, %v1221
        %v1254 = vadd.f32 %v1186, %v1222
        %v1255 = vadd.f32 %v1187, %v1223
        %v1256 = vadd.f32 %v1188, %v1224
        %v1257 = vadd.f32 %v1189, %v1225
        %v1258 = vadd.f32 %v1190, %v1226
        %v1259 = vadd.f32 %v1191, %v1227
        %v1260 = vadd.f32 %v1192, %v1228
        %v1261 = vadd.f32 %v1193, %v1229
        %v1262 = vadd.f32 %v1194, %v1230
        %v1263 = vadd.f32 %v1195, %v1231
        %v1264 = vadd.f32 %v1196, %v1232
        %v1265 = vadd.f32 %v1197, %v1233
        %v1266 = vadd.f32 %v1198, %v1234
        %v1267 = vadd.f32 %v1199, %v1235
        %v1268 = vadd.f32 %v1200, %v1236
        %v1269 = vadd.f32 %v1201, %v1237
        %v1270 = vadd.f32 %v1202, %v1238
        %v1271 = vadd.f32 %v1203, %v1239
        %v1272 = vld [vmem:[%s1070 + $0x1] sm:$0xff]
        %v1273 = vld [vmem:[%s1070 + $0x9] sm:$0xff]
        %v1274 = vld [vmem:[%s1070 + $0x19] sm:$0xff]
        %v1275 = vld [vmem:[%s1070 + $0x21] sm:$0xff]
        %v1276 = vld [vmem:[%s1070 + $0x31] sm:$0xff]
        %v1277 = vld [vmem:[%s1070 + $0x39] sm:$0xff]
        %v1278 = vld [vmem:[%s1070 + $0x49] sm:$0xff]
        %v1279 = vld [vmem:[%s1070 + $0x51] sm:$0xff]
        %v1280 = vld [vmem:[%s1070 + $0x61] sm:$0xff]
        %v1281 = vld [vmem:[%s1070 + $0x69] sm:$0xff]
        %v1282 = vld [vmem:[%s1070 + $0x79] sm:$0xff]
        %v1283 = vld [vmem:[%s1070 + $0x81] sm:$0xff]
        %v1284 = vld [vmem:[%s1070 + $0x91] sm:$0xff]
        %v1285 = vld [vmem:[%s1070 + $0x99] sm:$0xff]
        %v1286 = vld [vmem:[%s1070 + $0xa9] sm:$0xff]
        %v1287 = vld [vmem:[%s1070 + $0xb1] sm:$0xff]
        %v1288 = vld [vmem:[%s1070 + $0xc1] sm:$0xff]
        %v1289 = vld [vmem:[%s1070 + $0xc9] sm:$0xff]
        %v1290 = vld [vmem:[%s1070 + $0xd9] sm:$0xff]
        %v1291 = vld [vmem:[%s1070 + $0xe1] sm:$0xff]
        %v1292 = vld [vmem:[%s1070 + $0xf1] sm:$0xff]
        %v1293 = vld [vmem:[%s1070 + $0xf9] sm:$0xff]
        %v1294 = vld [vmem:[%s1070 + $0x109] sm:$0xff]
        %v1295 = vld [vmem:[%s1070 + $0x111] sm:$0xff]
        %v1296 = vld [vmem:[%s1070 + $0x121] sm:$0xff]
        %v1297 = vld [vmem:[%s1070 + $0x129] sm:$0xff]
        %v1298 = vld [vmem:[%s1070 + $0x139] sm:$0xff]
        %v1299 = vld [vmem:[%s1070 + $0x141] sm:$0xff]
        %v1300 = vld [vmem:[%s1070 + $0x151] sm:$0xff]
        %v1301 = vld [vmem:[%s1070 + $0x159] sm:$0xff]
        %v1302 = vld [vmem:[%s1070 + $0x169] sm:$0xff]
        %v1303 = vld [vmem:[%s1070 + $0x171] sm:$0xff]
        %v1304 = vld [vmem:[%s1103 + $0x1] sm:$0xff]
        %v1305 = vld [vmem:[%s1103 + $0x9] sm:$0xff]
        %v1306 = vld [vmem:[%s1103 + $0x19] sm:$0xff]
        %v1307 = vld [vmem:[%s1103 + $0x21] sm:$0xff]
        %v1308 = vld [vmem:[%s1103 + $0x31] sm:$0xff]
        %v1309 = vld [vmem:[%s1103 + $0x39] sm:$0xff]
        %v1310 = vld [vmem:[%s1103 + $0x49] sm:$0xff]
        %v1311 = vld [vmem:[%s1103 + $0x51] sm:$0xff]
        %v1312 = vld [vmem:[%s1103 + $0x61] sm:$0xff]
        %v1313 = vld [vmem:[%s1103 + $0x69] sm:$0xff]
        %v1314 = vld [vmem:[%s1103 + $0x79] sm:$0xff]
        %v1315 = vld [vmem:[%s1103 + $0x81] sm:$0xff]
        %v1316 = vld [vmem:[%s1103 + $0x91] sm:$0xff]
        %v1317 = vld [vmem:[%s1103 + $0x99] sm:$0xff]
        %v1318 = vld [vmem:[%s1103 + $0xa9] sm:$0xff]
        %v1319 = vld [vmem:[%s1103 + $0xb1] sm:$0xff]
        %v1320 = vld [vmem:[%s1103 + $0xc1] sm:$0xff]
        %v1321 = vld [vmem:[%s1103 + $0xc9] sm:$0xff]
        %v1322 = vld [vmem:[%s1103 + $0xd9] sm:$0xff]
        %v1323 = vld [vmem:[%s1103 + $0xe1] sm:$0xff]
        %v1324 = vld [vmem:[%s1103 + $0xf1] sm:$0xff]
        %v1325 = vld [vmem:[%s1103 + $0xf9] sm:$0xff]
        %v1326 = vld [vmem:[%s1103 + $0x109] sm:$0xff]
        %v1327 = vld [vmem:[%s1103 + $0x111] sm:$0xff]
        %v1328 = vld [vmem:[%s1103 + $0x121] sm:$0xff]
        %v1329 = vld [vmem:[%s1103 + $0x129] sm:$0xff]
        %v1330 = vld [vmem:[%s1103 + $0x139] sm:$0xff]
        %v1331 = vld [vmem:[%s1103 + $0x141] sm:$0xff]
        %v1332 = vld [vmem:[%s1103 + $0x151] sm:$0xff]
        %v1333 = vld [vmem:[%s1103 + $0x159] sm:$0xff]
        %v1334 = vld [vmem:[%s1103 + $0x169] sm:$0xff]
        %v1335 = vld [vmem:[%s1103 + $0x171] sm:$0xff]
        %v1336 = vlaneseq
        %v1337 = vshrl.u32 %v1336, 7
        %v1338 = vsub.s32 1, %v1337
        %v1339 = vrot.slane %v1019, %v1338
        %v1340 = vmul.f32 %v1339, %v1272
        %v1341 = vmul.f32 %v1339, %v1273
        %v1342 = vmul.f32 %v1339, %v1274
        %v1343 = vmul.f32 %v1339, %v1275
        %v1344 = vmul.f32 %v1339, %v1276
        %v1345 = vmul.f32 %v1339, %v1277
        %v1346 = vmul.f32 %v1339, %v1278
        %v1347 = vmul.f32 %v1339, %v1279
        %v1348 = vmul.f32 %v1339, %v1280
        %v1349 = vmul.f32 %v1339, %v1281
        %v1350 = vmul.f32 %v1339, %v1282
        %v1351 = vmul.f32 %v1339, %v1283
        %v1352 = vmul.f32 %v1339, %v1284
        %v1353 = vmul.f32 %v1339, %v1285
        %v1354 = vmul.f32 %v1339, %v1286
        %v1355 = vmul.f32 %v1339, %v1287
        %v1356 = vmul.f32 %v1339, %v1288
        %v1357 = vmul.f32 %v1339, %v1289
        %v1358 = vmul.f32 %v1339, %v1290
        %v1359 = vmul.f32 %v1339, %v1291
        %v1360 = vmul.f32 %v1339, %v1292
        %v1361 = vmul.f32 %v1339, %v1293
        %v1362 = vmul.f32 %v1339, %v1294
        %v1363 = vmul.f32 %v1339, %v1295
        %v1364 = vmul.f32 %v1339, %v1296
        %v1365 = vmul.f32 %v1339, %v1297
        %v1366 = vmul.f32 %v1339, %v1298
        %v1367 = vmul.f32 %v1339, %v1299
        %v1368 = vmul.f32 %v1339, %v1300
        %v1369 = vmul.f32 %v1339, %v1301
        %v1370 = vmul.f32 %v1339, %v1302
        %v1371 = vmul.f32 %v1339, %v1303
        %v1372 = vadd.f32 %v1240, %v1340
        %v1373 = vadd.f32 %v1241, %v1341
        %v1374 = vadd.f32 %v1242, %v1342
        %v1375 = vadd.f32 %v1243, %v1343
        %v1376 = vadd.f32 %v1244, %v1344
        %v1377 = vadd.f32 %v1245, %v1345
        %v1378 = vadd.f32 %v1246, %v1346
        %v1379 = vadd.f32 %v1247, %v1347
        %v1380 = vadd.f32 %v1248, %v1348
        %v1381 = vadd.f32 %v1249, %v1349
        %v1382 = vadd.f32 %v1250, %v1350
        %v1383 = vadd.f32 %v1251, %v1351
        %v1384 = vadd.f32 %v1252, %v1352
        %v1385 = vadd.f32 %v1253, %v1353
        %v1386 = vadd.f32 %v1254, %v1354
        %v1387 = vadd.f32 %v1255, %v1355
        %v1388 = vadd.f32 %v1256, %v1356
        %v1389 = vadd.f32 %v1257, %v1357
        %v1390 = vadd.f32 %v1258, %v1358
        %v1391 = vadd.f32 %v1259, %v1359
        %v1392 = vadd.f32 %v1260, %v1360
        %v1393 = vadd.f32 %v1261, %v1361
        %v1394 = vadd.f32 %v1262, %v1362
        %v1395 = vadd.f32 %v1263, %v1363
        %v1396 = vadd.f32 %v1264, %v1364
        %v1397 = vadd.f32 %v1265, %v1365
        %v1398 = vadd.f32 %v1266, %v1366
        %v1399 = vadd.f32 %v1267, %v1367
        %v1400 = vadd.f32 %v1268, %v1368
        %v1401 = vadd.f32 %v1269, %v1369
        %v1402 = vadd.f32 %v1270, %v1370
        %v1403 = vadd.f32 %v1271, %v1371
        %v1404 = vlaneseq
        %v1405 = vshrl.u32 %v1404, 7
        %v1406 = vsub.s32 1, %v1405
        %v1407 = vrot.slane %v1022, %v1406
        %v1408 = vmul.f32 %v1407, %v1304
        %v1409 = vmul.f32 %v1407, %v1305
        %v1410 = vmul.f32 %v1407, %v1306
        %v1411 = vmul.f32 %v1407, %v1307
        %v1412 = vmul.f32 %v1407, %v1308
        %v1413 = vmul.f32 %v1407, %v1309
        %v1414 = vmul.f32 %v1407, %v1310
        %v1415 = vmul.f32 %v1407, %v1311
        %v1416 = vmul.f32 %v1407, %v1312
        %v1417 = vmul.f32 %v1407, %v1313
        %v1418 = vmul.f32 %v1407, %v1314
        %v1419 = vmul.f32 %v1407, %v1315
        %v1420 = vmul.f32 %v1407, %v1316
        %v1421 = vmul.f32 %v1407, %v1317
        %v1422 = vmul.f32 %v1407, %v1318
        %v1423 = vmul.f32 %v1407, %v1319
        %v1424 = vmul.f32 %v1407, %v1320
        %v1425 = vmul.f32 %v1407, %v1321
        %v1426 = vmul.f32 %v1407, %v1322
        %v1427 = vmul.f32 %v1407, %v1323
        %v1428 = vmul.f32 %v1407, %v1324
        %v1429 = vmul.f32 %v1407, %v1325
        %v1430 = vmul.f32 %v1407, %v1326
        %v1431 = vmul.f32 %v1407, %v1327
        %v1432 = vmul.f32 %v1407, %v1328
        %v1433 = vmul.f32 %v1407, %v1329
        %v1434 = vmul.f32 %v1407, %v1330
        %v1435 = vmul.f32 %v1407, %v1331
        %v1436 = vmul.f32 %v1407, %v1332
        %v1437 = vmul.f32 %v1407, %v1333
        %v1438 = vmul.f32 %v1407, %v1334
        %v1439 = vmul.f32 %v1407, %v1335
        %v1440 = vadd.f32 %v1372, %v1408
        %v1441 = vadd.f32 %v1373, %v1409
        %v1442 = vadd.f32 %v1374, %v1410
        %v1443 = vadd.f32 %v1375, %v1411
        %v1444 = vadd.f32 %v1376, %v1412
        %v1445 = vadd.f32 %v1377, %v1413
        %v1446 = vadd.f32 %v1378, %v1414
        %v1447 = vadd.f32 %v1379, %v1415
        %v1448 = vadd.f32 %v1380, %v1416
        %v1449 = vadd.f32 %v1381, %v1417
        %v1450 = vadd.f32 %v1382, %v1418
        %v1451 = vadd.f32 %v1383, %v1419
        %v1452 = vadd.f32 %v1384, %v1420
        %v1453 = vadd.f32 %v1385, %v1421
        %v1454 = vadd.f32 %v1386, %v1422
        %v1455 = vadd.f32 %v1387, %v1423
        %v1456 = vadd.f32 %v1388, %v1424
        %v1457 = vadd.f32 %v1389, %v1425
        %v1458 = vadd.f32 %v1390, %v1426
        %v1459 = vadd.f32 %v1391, %v1427
        %v1460 = vadd.f32 %v1392, %v1428
        %v1461 = vadd.f32 %v1393, %v1429
        %v1462 = vadd.f32 %v1394, %v1430
        %v1463 = vadd.f32 %v1395, %v1431
        %v1464 = vadd.f32 %v1396, %v1432
        %v1465 = vadd.f32 %v1397, %v1433
        %v1466 = vadd.f32 %v1398, %v1434
        %v1467 = vadd.f32 %v1399, %v1435
        %v1468 = vadd.f32 %v1400, %v1436
        %v1469 = vadd.f32 %v1401, %v1437
        %v1470 = vadd.f32 %v1402, %v1438
        %v1471 = vadd.f32 %v1403, %v1439
        %v1472 = vld [vmem:[%s1070 + $0x2] sm:$0xff]
        %v1473 = vld [vmem:[%s1070 + $0xa] sm:$0xff]
        %v1474 = vld [vmem:[%s1070 + $0x1a] sm:$0xff]
        %v1475 = vld [vmem:[%s1070 + $0x22] sm:$0xff]
        %v1476 = vld [vmem:[%s1070 + $0x32] sm:$0xff]
        %v1477 = vld [vmem:[%s1070 + $0x3a] sm:$0xff]
        %v1478 = vld [vmem:[%s1070 + $0x4a] sm:$0xff]
        %v1479 = vld [vmem:[%s1070 + $0x52] sm:$0xff]
        %v1480 = vld [vmem:[%s1070 + $0x62] sm:$0xff]
        %v1481 = vld [vmem:[%s1070 + $0x6a] sm:$0xff]
        %v1482 = vld [vmem:[%s1070 + $0x7a] sm:$0xff]
        %v1483 = vld [vmem:[%s1070 + $0x82] sm:$0xff]
        %v1484 = vld [vmem:[%s1070 + $0x92] sm:$0xff]
        %v1485 = vld [vmem:[%s1070 + $0x9a] sm:$0xff]
        %v1486 = vld [vmem:[%s1070 + $0xaa] sm:$0xff]
        %v1487 = vld [vmem:[%s1070 + $0xb2] sm:$0xff]
        %v1488 = vld [vmem:[%s1070 + $0xc2] sm:$0xff]
        %v1489 = vld [vmem:[%s1070 + $0xca] sm:$0xff]
        %v1490 = vld [vmem:[%s1070 + $0xda] sm:$0xff]
        %v1491 = vld [vmem:[%s1070 + $0xe2] sm:$0xff]
        %v1492 = vld [vmem:[%s1070 + $0xf2] sm:$0xff]
        %v1493 = vld [vmem:[%s1070 + $0xfa] sm:$0xff]
        %v1494 = vld [vmem:[%s1070 + $0x10a] sm:$0xff]
        %v1495 = vld [vmem:[%s1070 + $0x112] sm:$0xff]
        %v1496 = vld [vmem:[%s1070 + $0x122] sm:$0xff]
        %v1497 = vld [vmem:[%s1070 + $0x12a] sm:$0xff]
        %v1498 = vld [vmem:[%s1070 + $0x13a] sm:$0xff]
        %v1499 = vld [vmem:[%s1070 + $0x142] sm:$0xff]
        %v1500 = vld [vmem:[%s1070 + $0x152] sm:$0xff]
        %v1501 = vld [vmem:[%s1070 + $0x15a] sm:$0xff]
        %v1502 = vld [vmem:[%s1070 + $0x16a] sm:$0xff]
        %v1503 = vld [vmem:[%s1070 + $0x172] sm:$0xff]
        %v1504 = vld [vmem:[%s1103 + $0x2] sm:$0xff]
        %v1505 = vld [vmem:[%s1103 + $0xa] sm:$0xff]
        %v1506 = vld [vmem:[%s1103 + $0x1a] sm:$0xff]
        %v1507 = vld [vmem:[%s1103 + $0x22] sm:$0xff]
        %v1508 = vld [vmem:[%s1103 + $0x32] sm:$0xff]
        %v1509 = vld [vmem:[%s1103 + $0x3a] sm:$0xff]
        %v1510 = vld [vmem:[%s1103 + $0x4a] sm:$0xff]
        %v1511 = vld [vmem:[%s1103 + $0x52] sm:$0xff]
        %v1512 = vld [vmem:[%s1103 + $0x62] sm:$0xff]
        %v1513 = vld [vmem:[%s1103 + $0x6a] sm:$0xff]
        %v1514 = vld [vmem:[%s1103 + $0x7a] sm:$0xff]
        %v1515 = vld [vmem:[%s1103 + $0x82] sm:$0xff]
        %v1516 = vld [vmem:[%s1103 + $0x92] sm:$0xff]
        %v1517 = vld [vmem:[%s1103 + $0x9a] sm:$0xff]
        %v1518 = vld [vmem:[%s1103 + $0xaa] sm:$0xff]
        %v1519 = vld [vmem:[%s1103 + $0xb2] sm:$0xff]
        %v1520 = vld [vmem:[%s1103 + $0xc2] sm:$0xff]
        %v1521 = vld [vmem:[%s1103 + $0xca] sm:$0xff]
        %v1522 = vld [vmem:[%s1103 + $0xda] sm:$0xff]
        %v1523 = vld [vmem:[%s1103 + $0xe2] sm:$0xff]
        %v1524 = vld [vmem:[%s1103 + $0xf2] sm:$0xff]
        %v1525 = vld [vmem:[%s1103 + $0xfa] sm:$0xff]
        %v1526 = vld [vmem:[%s1103 + $0x10a] sm:$0xff]
        %v1527 = vld [vmem:[%s1103 + $0x112] sm:$0xff]
        %v1528 = vld [vmem:[%s1103 + $0x122] sm:$0xff]
        %v1529 = vld [vmem:[%s1103 + $0x12a] sm:$0xff]
        %v1530 = vld [vmem:[%s1103 + $0x13a] sm:$0xff]
        %v1531 = vld [vmem:[%s1103 + $0x142] sm:$0xff]
        %v1532 = vld [vmem:[%s1103 + $0x152] sm:$0xff]
        %v1533 = vld [vmem:[%s1103 + $0x15a] sm:$0xff]
        %v1534 = vld [vmem:[%s1103 + $0x16a] sm:$0xff]
        %v1535 = vld [vmem:[%s1103 + $0x172] sm:$0xff]
        %v1536 = vlaneseq
        %v1537 = vshrl.u32 %v1536, 7
        %v1538 = vsub.s32 2, %v1537
        %v1539 = vrot.slane %v1019, %v1538
        %v1540 = vmul.f32 %v1539, %v1472
        %v1541 = vmul.f32 %v1539, %v1473
        %v1542 = vmul.f32 %v1539, %v1474
        %v1543 = vmul.f32 %v1539, %v1475
        %v1544 = vmul.f32 %v1539, %v1476
        %v1545 = vmul.f32 %v1539, %v1477
        %v1546 = vmul.f32 %v1539, %v1478
        %v1547 = vmul.f32 %v1539, %v1479
        %v1548 = vmul.f32 %v1539, %v1480
        %v1549 = vmul.f32 %v1539, %v1481
        %v1550 = vmul.f32 %v1539, %v1482
        %v1551 = vmul.f32 %v1539, %v1483
        %v1552 = vmul.f32 %v1539, %v1484
        %v1553 = vmul.f32 %v1539, %v1485
        %v1554 = vmul.f32 %v1539, %v1486
        %v1555 = vmul.f32 %v1539, %v1487
        %v1556 = vmul.f32 %v1539, %v1488
        %v1557 = vmul.f32 %v1539, %v1489
        %v1558 = vmul.f32 %v1539, %v1490
        %v1559 = vmul.f32 %v1539, %v1491
        %v1560 = vmul.f32 %v1539, %v1492
        %v1561 = vmul.f32 %v1539, %v1493
        %v1562 = vmul.f32 %v1539, %v1494
        %v1563 = vmul.f32 %v1539, %v1495
        %v1564 = vmul.f32 %v1539, %v1496
        %v1565 = vmul.f32 %v1539, %v1497
        %v1566 = vmul.f32 %v1539, %v1498
        %v1567 = vmul.f32 %v1539, %v1499
        %v1568 = vmul.f32 %v1539, %v1500
        %v1569 = vmul.f32 %v1539, %v1501
        %v1570 = vmul.f32 %v1539, %v1502
        %v1571 = vmul.f32 %v1539, %v1503
        %v1572 = vadd.f32 %v1440, %v1540
        %v1573 = vadd.f32 %v1441, %v1541
        %v1574 = vadd.f32 %v1442, %v1542
        %v1575 = vadd.f32 %v1443, %v1543
        %v1576 = vadd.f32 %v1444, %v1544
        %v1577 = vadd.f32 %v1445, %v1545
        %v1578 = vadd.f32 %v1446, %v1546
        %v1579 = vadd.f32 %v1447, %v1547
        %v1580 = vadd.f32 %v1448, %v1548
        %v1581 = vadd.f32 %v1449, %v1549
        %v1582 = vadd.f32 %v1450, %v1550
        %v1583 = vadd.f32 %v1451, %v1551
        %v1584 = vadd.f32 %v1452, %v1552
        %v1585 = vadd.f32 %v1453, %v1553
        %v1586 = vadd.f32 %v1454, %v1554
        %v1587 = vadd.f32 %v1455, %v1555
        %v1588 = vadd.f32 %v1456, %v1556
        %v1589 = vadd.f32 %v1457, %v1557
        %v1590 = vadd.f32 %v1458, %v1558
        %v1591 = vadd.f32 %v1459, %v1559
        %v1592 = vadd.f32 %v1460, %v1560
        %v1593 = vadd.f32 %v1461, %v1561
        %v1594 = vadd.f32 %v1462, %v1562
        %v1595 = vadd.f32 %v1463, %v1563
        %v1596 = vadd.f32 %v1464, %v1564
        %v1597 = vadd.f32 %v1465, %v1565
        %v1598 = vadd.f32 %v1466, %v1566
        %v1599 = vadd.f32 %v1467, %v1567
        %v1600 = vadd.f32 %v1468, %v1568
        %v1601 = vadd.f32 %v1469, %v1569
        %v1602 = vadd.f32 %v1470, %v1570
        %v1603 = vadd.f32 %v1471, %v1571
        %v1604 = vlaneseq
        %v1605 = vshrl.u32 %v1604, 7
        %v1606 = vsub.s32 2, %v1605
        %v1607 = vrot.slane %v1022, %v1606
        %v1608 = vmul.f32 %v1607, %v1504
        %v1609 = vmul.f32 %v1607, %v1505
        %v1610 = vmul.f32 %v1607, %v1506
        %v1611 = vmul.f32 %v1607, %v1507
        %v1612 = vmul.f32 %v1607, %v1508
        %v1613 = vmul.f32 %v1607, %v1509
        %v1614 = vmul.f32 %v1607, %v1510
        %v1615 = vmul.f32 %v1607, %v1511
        %v1616 = vmul.f32 %v1607, %v1512
        %v1617 = vmul.f32 %v1607, %v1513
        %v1618 = vmul.f32 %v1607, %v1514
        %v1619 = vmul.f32 %v1607, %v1515
        %v1620 = vmul.f32 %v1607, %v1516
        %v1621 = vmul.f32 %v1607, %v1517
        %v1622 = vmul.f32 %v1607, %v1518
        %v1623 = vmul.f32 %v1607, %v1519
        %v1624 = vmul.f32 %v1607, %v1520
        %v1625 = vmul.f32 %v1607, %v1521
        %v1626 = vmul.f32 %v1607, %v1522
        %v1627 = vmul.f32 %v1607, %v1523
        %v1628 = vmul.f32 %v1607, %v1524
        %v1629 = vmul.f32 %v1607, %v1525
        %v1630 = vmul.f32 %v1607, %v1526
        %v1631 = vmul.f32 %v1607, %v1527
        %v1632 = vmul.f32 %v1607, %v1528
        %v1633 = vmul.f32 %v1607, %v1529
        %v1634 = vmul.f32 %v1607, %v1530
        %v1635 = vmul.f32 %v1607, %v1531
        %v1636 = vmul.f32 %v1607, %v1532
        %v1637 = vmul.f32 %v1607, %v1533
        %v1638 = vmul.f32 %v1607, %v1534
        %v1639 = vmul.f32 %v1607, %v1535
        %v1640 = vadd.f32 %v1572, %v1608
        %v1641 = vadd.f32 %v1573, %v1609
        %v1642 = vadd.f32 %v1574, %v1610
        %v1643 = vadd.f32 %v1575, %v1611
        %v1644 = vadd.f32 %v1576, %v1612
        %v1645 = vadd.f32 %v1577, %v1613
        %v1646 = vadd.f32 %v1578, %v1614
        %v1647 = vadd.f32 %v1579, %v1615
        %v1648 = vadd.f32 %v1580, %v1616
        %v1649 = vadd.f32 %v1581, %v1617
        %v1650 = vadd.f32 %v1582, %v1618
        %v1651 = vadd.f32 %v1583, %v1619
        %v1652 = vadd.f32 %v1584, %v1620
        %v1653 = vadd.f32 %v1585, %v1621
        %v1654 = vadd.f32 %v1586, %v1622
        %v1655 = vadd.f32 %v1587, %v1623
        %v1656 = vadd.f32 %v1588, %v1624
        %v1657 = vadd.f32 %v1589, %v1625
        %v1658 = vadd.f32 %v1590, %v1626
        %v1659 = vadd.f32 %v1591, %v1627
        %v1660 = vadd.f32 %v1592, %v1628
        %v1661 = vadd.f32 %v1593, %v1629
        %v1662 = vadd.f32 %v1594, %v1630
        %v1663 = vadd.f32 %v1595, %v1631
        %v1664 = vadd.f32 %v1596, %v1632
        %v1665 = vadd.f32 %v1597, %v1633
        %v1666 = vadd.f32 %v1598, %v1634
        %v1667 = vadd.f32 %v1599, %v1635
        %v1668 = vadd.f32 %v1600, %v1636
        %v1669 = vadd.f32 %v1601, %v1637
        %v1670 = vadd.f32 %v1602, %v1638
        %v1671 = vadd.f32 %v1603, %v1639
        %s1672 = sadd.s32 0, 1
        %s1673 = smul.u32 %s1672, 24
        %s1674 = scalar_lea.vmem [#allocation2], %s1673
        %v1675 = vld [vmem:[%s1674] sm:$0xff]
        %v1676 = vld [vmem:[%s1674 + $0x8] sm:$0xff]
        %v1677 = vld [vmem:[%s1674 + $0x18] sm:$0xff]
        %v1678 = vld [vmem:[%s1674 + $0x20] sm:$0xff]
        %v1679 = vld [vmem:[%s1674 + $0x30] sm:$0xff]
        %v1680 = vld [vmem:[%s1674 + $0x38] sm:$0xff]
        %v1681 = vld [vmem:[%s1674 + $0x48] sm:$0xff]
        %v1682 = vld [vmem:[%s1674 + $0x50] sm:$0xff]
        %v1683 = vld [vmem:[%s1674 + $0x60] sm:$0xff]
        %v1684 = vld [vmem:[%s1674 + $0x68] sm:$0xff]
        %v1685 = vld [vmem:[%s1674 + $0x78] sm:$0xff]
        %v1686 = vld [vmem:[%s1674 + $0x80] sm:$0xff]
        %v1687 = vld [vmem:[%s1674 + $0x90] sm:$0xff]
        %v1688 = vld [vmem:[%s1674 + $0x98] sm:$0xff]
        %v1689 = vld [vmem:[%s1674 + $0xa8] sm:$0xff]
        %v1690 = vld [vmem:[%s1674 + $0xb0] sm:$0xff]
        %v1691 = vld [vmem:[%s1674 + $0xc0] sm:$0xff]
        %v1692 = vld [vmem:[%s1674 + $0xc8] sm:$0xff]
        %v1693 = vld [vmem:[%s1674 + $0xd8] sm:$0xff]
        %v1694 = vld [vmem:[%s1674 + $0xe0] sm:$0xff]
        %v1695 = vld [vmem:[%s1674 + $0xf0] sm:$0xff]
        %v1696 = vld [vmem:[%s1674 + $0xf8] sm:$0xff]
        %v1697 = vld [vmem:[%s1674 + $0x108] sm:$0xff]
        %v1698 = vld [vmem:[%s1674 + $0x110] sm:$0xff]
        %v1699 = vld [vmem:[%s1674 + $0x120] sm:$0xff]
        %v1700 = vld [vmem:[%s1674 + $0x128] sm:$0xff]
        %v1701 = vld [vmem:[%s1674 + $0x138] sm:$0xff]
        %v1702 = vld [vmem:[%s1674 + $0x140] sm:$0xff]
        %v1703 = vld [vmem:[%s1674 + $0x150] sm:$0xff]
        %v1704 = vld [vmem:[%s1674 + $0x158] sm:$0xff]
        %v1705 = vld [vmem:[%s1674 + $0x168] sm:$0xff]
        %v1706 = vld [vmem:[%s1674 + $0x170] sm:$0xff]
        %s1707 = scalar_lea.vmem [#allocation3], %s1673
        %v1708 = vld [vmem:[%s1707] sm:$0xff]
        %v1709 = vld [vmem:[%s1707 + $0x8] sm:$0xff]
        %v1710 = vld [vmem:[%s1707 + $0x18] sm:$0xff]
        %v1711 = vld [vmem:[%s1707 + $0x20] sm:$0xff]
        %v1712 = vld [vmem:[%s1707 + $0x30] sm:$0xff]
        %v1713 = vld [vmem:[%s1707 + $0x38] sm:$0xff]
        %v1714 = vld [vmem:[%s1707 + $0x48] sm:$0xff]
        %v1715 = vld [vmem:[%s1707 + $0x50] sm:$0xff]
        %v1716 = vld [vmem:[%s1707 + $0x60] sm:$0xff]
        %v1717 = vld [vmem:[%s1707 + $0x68] sm:$0xff]
        %v1718 = vld [vmem:[%s1707 + $0x78] sm:$0xff]
        %v1719 = vld [vmem:[%s1707 + $0x80] sm:$0xff]
        %v1720 = vld [vmem:[%s1707 + $0x90] sm:$0xff]
        %v1721 = vld [vmem:[%s1707 + $0x98] sm:$0xff]
        %v1722 = vld [vmem:[%s1707 + $0xa8] sm:$0xff]
        %v1723 = vld [vmem:[%s1707 + $0xb0] sm:$0xff]
        %v1724 = vld [vmem:[%s1707 + $0xc0] sm:$0xff]
        %v1725 = vld [vmem:[%s1707 + $0xc8] sm:$0xff]
        %v1726 = vld [vmem:[%s1707 + $0xd8] sm:$0xff]
        %v1727 = vld [vmem:[%s1707 + $0xe0] sm:$0xff]
        %v1728 = vld [vmem:[%s1707 + $0xf0] sm:$0xff]
        %v1729 = vld [vmem:[%s1707 + $0xf8] sm:$0xff]
        %v1730 = vld [vmem:[%s1707 + $0x108] sm:$0xff]
        %v1731 = vld [vmem:[%s1707 + $0x110] sm:$0xff]
        %v1732 = vld [vmem:[%s1707 + $0x120] sm:$0xff]
        %v1733 = vld [vmem:[%s1707 + $0x128] sm:$0xff]
        %v1734 = vld [vmem:[%s1707 + $0x138] sm:$0xff]
        %v1735 = vld [vmem:[%s1707 + $0x140] sm:$0xff]
        %v1736 = vld [vmem:[%s1707 + $0x150] sm:$0xff]
        %v1737 = vld [vmem:[%s1707 + $0x158] sm:$0xff]
        %v1738 = vld [vmem:[%s1707 + $0x168] sm:$0xff]
        %v1739 = vld [vmem:[%s1707 + $0x170] sm:$0xff]
        %v1740 = vlaneseq
        %v1741 = vshrl.u32 %v1740, 7
        %v1742 = vsub.s32 0, %v1741
        %v1743 = vrot.slane %v1020, %v1742
        %v1744 = vmul.f32 %v1743, %v1675
        %v1745 = vmul.f32 %v1743, %v1676
        %v1746 = vmul.f32 %v1743, %v1677
        %v1747 = vmul.f32 %v1743, %v1678
        %v1748 = vmul.f32 %v1743, %v1679
        %v1749 = vmul.f32 %v1743, %v1680
        %v1750 = vmul.f32 %v1743, %v1681
        %v1751 = vmul.f32 %v1743, %v1682
        %v1752 = vmul.f32 %v1743, %v1683
        %v1753 = vmul.f32 %v1743, %v1684
        %v1754 = vmul.f32 %v1743, %v1685
        %v1755 = vmul.f32 %v1743, %v1686
        %v1756 = vmul.f32 %v1743, %v1687
        %v1757 = vmul.f32 %v1743, %v1688
        %v1758 = vmul.f32 %v1743, %v1689
        %v1759 = vmul.f32 %v1743, %v1690
        %v1760 = vmul.f32 %v1743, %v1691
        %v1761 = vmul.f32 %v1743, %v1692
        %v1762 = vmul.f32 %v1743, %v1693
        %v1763 = vmul.f32 %v1743, %v1694
        %v1764 = vmul.f32 %v1743, %v1695
        %v1765 = vmul.f32 %v1743, %v1696
        %v1766 = vmul.f32 %v1743, %v1697
        %v1767 = vmul.f32 %v1743, %v1698
        %v1768 = vmul.f32 %v1743, %v1699
        %v1769 = vmul.f32 %v1743, %v1700
        %v1770 = vmul.f32 %v1743, %v1701
        %v1771 = vmul.f32 %v1743, %v1702
        %v1772 = vmul.f32 %v1743, %v1703
        %v1773 = vmul.f32 %v1743, %v1704
        %v1774 = vmul.f32 %v1743, %v1705
        %v1775 = vmul.f32 %v1743, %v1706
        %v1776 = vadd.f32 %v1640, %v1744
        %v1777 = vadd.f32 %v1641, %v1745
        %v1778 = vadd.f32 %v1642, %v1746
        %v1779 = vadd.f32 %v1643, %v1747
        %v1780 = vadd.f32 %v1644, %v1748
        %v1781 = vadd.f32 %v1645, %v1749
        %v1782 = vadd.f32 %v1646, %v1750
        %v1783 = vadd.f32 %v1647, %v1751
        %v1784 = vadd.f32 %v1648, %v1752
        %v1785 = vadd.f32 %v1649, %v1753
        %v1786 = vadd.f32 %v1650, %v1754
        %v1787 = vadd.f32 %v1651, %v1755
        %v1788 = vadd.f32 %v1652, %v1756
        %v1789 = vadd.f32 %v1653, %v1757
        %v1790 = vadd.f32 %v1654, %v1758
        %v1791 = vadd.f32 %v1655, %v1759
        %v1792 = vadd.f32 %v1656, %v1760
        %v1793 = vadd.f32 %v1657, %v1761
        %v1794 = vadd.f32 %v1658, %v1762
        %v1795 = vadd.f32 %v1659, %v1763
        %v1796 = vadd.f32 %v1660, %v1764
        %v1797 = vadd.f32 %v1661, %v1765
        %v1798 = vadd.f32 %v1662, %v1766
        %v1799 = vadd.f32 %v1663, %v1767
        %v1800 = vadd.f32 %v1664, %v1768
        %v1801 = vadd.f32 %v1665, %v1769
        %v1802 = vadd.f32 %v1666, %v1770
        %v1803 = vadd.f32 %v1667, %v1771
        %v1804 = vadd.f32 %v1668, %v1772
        %v1805 = vadd.f32 %v1669, %v1773
        %v1806 = vadd.f32 %v1670, %v1774
        %v1807 = vadd.f32 %v1671, %v1775
        %v1808 = vlaneseq
        %v1809 = vshrl.u32 %v1808, 7
        %v1810 = vsub.s32 0, %v1809
        %v1811 = vrot.slane %v1023, %v1810
        %v1812 = vmul.f32 %v1811, %v1708
        %v1813 = vmul.f32 %v1811, %v1709
        %v1814 = vmul.f32 %v1811, %v1710
        %v1815 = vmul.f32 %v1811, %v1711
        %v1816 = vmul.f32 %v1811, %v1712
        %v1817 = vmul.f32 %v1811, %v1713
        %v1818 = vmul.f32 %v1811, %v1714
        %v1819 = vmul.f32 %v1811, %v1715
        %v1820 = vmul.f32 %v1811, %v1716
        %v1821 = vmul.f32 %v1811, %v1717
        %v1822 = vmul.f32 %v1811, %v1718
        %v1823 = vmul.f32 %v1811, %v1719
        %v1824 = vmul.f32 %v1811, %v1720
        %v1825 = vmul.f32 %v1811, %v1721
        %v1826 = vmul.f32 %v1811, %v1722
        %v1827 = vmul.f32 %v1811, %v1723
        %v1828 = vmul.f32 %v1811, %v1724
        %v1829 = vmul.f32 %v1811, %v1725
        %v1830 = vmul.f32 %v1811, %v1726
        %v1831 = vmul.f32 %v1811, %v1727
        %v1832 = vmul.f32 %v1811, %v1728
        %v1833 = vmul.f32 %v1811, %v1729
        %v1834 = vmul.f32 %v1811, %v1730
        %v1835 = vmul.f32 %v1811, %v1731
        %v1836 = vmul.f32 %v1811, %v1732
        %v1837 = vmul.f32 %v1811, %v1733
        %v1838 = vmul.f32 %v1811, %v1734
        %v1839 = vmul.f32 %v1811, %v1735
        %v1840 = vmul.f32 %v1811, %v1736
        %v1841 = vmul.f32 %v1811, %v1737
        %v1842 = vmul.f32 %v1811, %v1738
        %v1843 = vmul.f32 %v1811, %v1739
        %v1844 = vadd.f32 %v1776, %v1812
        %v1845 = vadd.f32 %v1777, %v1813
        %v1846 = vadd.f32 %v1778, %v1814
        %v1847 = vadd.f32 %v1779, %v1815
        %v1848 = vadd.f32 %v1780, %v1816
        %v1849 = vadd.f32 %v1781, %v1817
        %v1850 = vadd.f32 %v1782, %v1818
        %v1851 = vadd.f32 %v1783, %v1819
        %v1852 = vadd.f32 %v1784, %v1820
        %v1853 = vadd.f32 %v1785, %v1821
        %v1854 = vadd.f32 %v1786, %v1822
        %v1855 = vadd.f32 %v1787, %v1823
        %v1856 = vadd.f32 %v1788, %v1824
        %v1857 = vadd.f32 %v1789, %v1825
        %v1858 = vadd.f32 %v1790, %v1826
        %v1859 = vadd.f32 %v1791, %v1827
        %v1860 = vadd.f32 %v1792, %v1828
        %v1861 = vadd.f32 %v1793, %v1829
        %v1862 = vadd.f32 %v1794, %v1830
        %v1863 = vadd.f32 %v1795, %v1831
        %v1864 = vadd.f32 %v1796, %v1832
        %v1865 = vadd.f32 %v1797, %v1833
        %v1866 = vadd.f32 %v1798, %v1834
        %v1867 = vadd.f32 %v1799, %v1835
        %v1868 = vadd.f32 %v1800, %v1836
        %v1869 = vadd.f32 %v1801, %v1837
        %v1870 = vadd.f32 %v1802, %v1838
        %v1871 = vadd.f32 %v1803, %v1839
        %v1872 = vadd.f32 %v1804, %v1840
        %v1873 = vadd.f32 %v1805, %v1841
        %v1874 = vadd.f32 %v1806, %v1842
        %v1875 = vadd.f32 %v1807, %v1843
        %v1876 = vld [vmem:[%s1674 + $0x1] sm:$0xff]
        %v1877 = vld [vmem:[%s1674 + $0x9] sm:$0xff]
        %v1878 = vld [vmem:[%s1674 + $0x19] sm:$0xff]
        %v1879 = vld [vmem:[%s1674 + $0x21] sm:$0xff]
        %v1880 = vld [vmem:[%s1674 + $0x31] sm:$0xff]
        %v1881 = vld [vmem:[%s1674 + $0x39] sm:$0xff]
        %v1882 = vld [vmem:[%s1674 + $0x49] sm:$0xff]
        %v1883 = vld [vmem:[%s1674 + $0x51] sm:$0xff]
        %v1884 = vld [vmem:[%s1674 + $0x61] sm:$0xff]
        %v1885 = vld [vmem:[%s1674 + $0x69] sm:$0xff]
        %v1886 = vld [vmem:[%s1674 + $0x79] sm:$0xff]
        %v1887 = vld [vmem:[%s1674 + $0x81] sm:$0xff]
        %v1888 = vld [vmem:[%s1674 + $0x91] sm:$0xff]
        %v1889 = vld [vmem:[%s1674 + $0x99] sm:$0xff]
        %v1890 = vld [vmem:[%s1674 + $0xa9] sm:$0xff]
        %v1891 = vld [vmem:[%s1674 + $0xb1] sm:$0xff]
        %v1892 = vld [vmem:[%s1674 + $0xc1] sm:$0xff]
        %v1893 = vld [vmem:[%s1674 + $0xc9] sm:$0xff]
        %v1894 = vld [vmem:[%s1674 + $0xd9] sm:$0xff]
        %v1895 = vld [vmem:[%s1674 + $0xe1] sm:$0xff]
        %v1896 = vld [vmem:[%s1674 + $0xf1] sm:$0xff]
        %v1897 = vld [vmem:[%s1674 + $0xf9] sm:$0xff]
        %v1898 = vld [vmem:[%s1674 + $0x109] sm:$0xff]
        %v1899 = vld [vmem:[%s1674 + $0x111] sm:$0xff]
        %v1900 = vld [vmem:[%s1674 + $0x121] sm:$0xff]
        %v1901 = vld [vmem:[%s1674 + $0x129] sm:$0xff]
        %v1902 = vld [vmem:[%s1674 + $0x139] sm:$0xff]
        %v1903 = vld [vmem:[%s1674 + $0x141] sm:$0xff]
        %v1904 = vld [vmem:[%s1674 + $0x151] sm:$0xff]
        %v1905 = vld [vmem:[%s1674 + $0x159] sm:$0xff]
        %v1906 = vld [vmem:[%s1674 + $0x169] sm:$0xff]
        %v1907 = vld [vmem:[%s1674 + $0x171] sm:$0xff]
        %v1908 = vld [vmem:[%s1707 + $0x1] sm:$0xff]
        %v1909 = vld [vmem:[%s1707 + $0x9] sm:$0xff]
        %v1910 = vld [vmem:[%s1707 + $0x19] sm:$0xff]
        %v1911 = vld [vmem:[%s1707 + $0x21] sm:$0xff]
        %v1912 = vld [vmem:[%s1707 + $0x31] sm:$0xff]
        %v1913 = vld [vmem:[%s1707 + $0x39] sm:$0xff]
        %v1914 = vld [vmem:[%s1707 + $0x49] sm:$0xff]
        %v1915 = vld [vmem:[%s1707 + $0x51] sm:$0xff]
        %v1916 = vld [vmem:[%s1707 + $0x61] sm:$0xff]
        %v1917 = vld [vmem:[%s1707 + $0x69] sm:$0xff]
        %v1918 = vld [vmem:[%s1707 + $0x79] sm:$0xff]
        %v1919 = vld [vmem:[%s1707 + $0x81] sm:$0xff]
        %v1920 = vld [vmem:[%s1707 + $0x91] sm:$0xff]
        %v1921 = vld [vmem:[%s1707 + $0x99] sm:$0xff]
        %v1922 = vld [vmem:[%s1707 + $0xa9] sm:$0xff]
        %v1923 = vld [vmem:[%s1707 + $0xb1] sm:$0xff]
        %v1924 = vld [vmem:[%s1707 + $0xc1] sm:$0xff]
        %v1925 = vld [vmem:[%s1707 + $0xc9] sm:$0xff]
        %v1926 = vld [vmem:[%s1707 + $0xd9] sm:$0xff]
        %v1927 = vld [vmem:[%s1707 + $0xe1] sm:$0xff]
        %v1928 = vld [vmem:[%s1707 + $0xf1] sm:$0xff]
        %v1929 = vld [vmem:[%s1707 + $0xf9] sm:$0xff]
        %v1930 = vld [vmem:[%s1707 + $0x109] sm:$0xff]
        %v1931 = vld [vmem:[%s1707 + $0x111] sm:$0xff]
        %v1932 = vld [vmem:[%s1707 + $0x121] sm:$0xff]
        %v1933 = vld [vmem:[%s1707 + $0x129] sm:$0xff]
        %v1934 = vld [vmem:[%s1707 + $0x139] sm:$0xff]
        %v1935 = vld [vmem:[%s1707 + $0x141] sm:$0xff]
        %v1936 = vld [vmem:[%s1707 + $0x151] sm:$0xff]
        %v1937 = vld [vmem:[%s1707 + $0x159] sm:$0xff]
        %v1938 = vld [vmem:[%s1707 + $0x169] sm:$0xff]
        %v1939 = vld [vmem:[%s1707 + $0x171] sm:$0xff]
        %v1940 = vlaneseq
        %v1941 = vshrl.u32 %v1940, 7
        %v1942 = vsub.s32 1, %v1941
        %v1943 = vrot.slane %v1020, %v1942
        %v1944 = vmul.f32 %v1943, %v1876
        %v1945 = vmul.f32 %v1943, %v1877
        %v1946 = vmul.f32 %v1943, %v1878
        %v1947 = vmul.f32 %v1943, %v1879
        %v1948 = vmul.f32 %v1943, %v1880
        %v1949 = vmul.f32 %v1943, %v1881
        %v1950 = vmul.f32 %v1943, %v1882
        %v1951 = vmul.f32 %v1943, %v1883
        %v1952 = vmul.f32 %v1943, %v1884
        %v1953 = vmul.f32 %v1943, %v1885
        %v1954 = vmul.f32 %v1943, %v1886
        %v1955 = vmul.f32 %v1943, %v1887
        %v1956 = vmul.f32 %v1943, %v1888
        %v1957 = vmul.f32 %v1943, %v1889
        %v1958 = vmul.f32 %v1943, %v1890
        %v1959 = vmul.f32 %v1943, %v1891
        %v1960 = vmul.f32 %v1943, %v1892
        %v1961 = vmul.f32 %v1943, %v1893
        %v1962 = vmul.f32 %v1943, %v1894
        %v1963 = vmul.f32 %v1943, %v1895
        %v1964 = vmul.f32 %v1943, %v1896
        %v1965 = vmul.f32 %v1943, %v1897
        %v1966 = vmul.f32 %v1943, %v1898
        %v1967 = vmul.f32 %v1943, %v1899
        %v1968 = vmul.f32 %v1943, %v1900
        %v1969 = vmul.f32 %v1943, %v1901
        %v1970 = vmul.f32 %v1943, %v1902
        %v1971 = vmul.f32 %v1943, %v1903
        %v1972 = vmul.f32 %v1943, %v1904
        %v1973 = vmul.f32 %v1943, %v1905
        %v1974 = vmul.f32 %v1943, %v1906
        %v1975 = vmul.f32 %v1943, %v1907
        %v1976 = vadd.f32 %v1844, %v1944
        %v1977 = vadd.f32 %v1845, %v1945
        %v1978 = vadd.f32 %v1846, %v1946
        %v1979 = vadd.f32 %v1847, %v1947
        %v1980 = vadd.f32 %v1848, %v1948
        %v1981 = vadd.f32 %v1849, %v1949
        %v1982 = vadd.f32 %v1850, %v1950
        %v1983 = vadd.f32 %v1851, %v1951
        %v1984 = vadd.f32 %v1852, %v1952
        %v1985 = vadd.f32 %v1853, %v1953
        %v1986 = vadd.f32 %v1854, %v1954
        %v1987 = vadd.f32 %v1855, %v1955
        %v1988 = vadd.f32 %v1856, %v1956
        %v1989 = vadd.f32 %v1857, %v1957
        %v1990 = vadd.f32 %v1858, %v1958
        %v1991 = vadd.f32 %v1859, %v1959
        %v1992 = vadd.f32 %v1860, %v1960
        %v1993 = vadd.f32 %v1861, %v1961
        %v1994 = vadd.f32 %v1862, %v1962
        %v1995 = vadd.f32 %v1863, %v1963
        %v1996 = vadd.f32 %v1864, %v1964
        %v1997 = vadd.f32 %v1865, %v1965
        %v1998 = vadd.f32 %v1866, %v1966
        %v1999 = vadd.f32 %v1867, %v1967
        %v2000 = vadd.f32 %v1868, %v1968
        %v2001 = vadd.f32 %v1869, %v1969
        %v2002 = vadd.f32 %v1870, %v1970
        %v2003 = vadd.f32 %v1871, %v1971
        %v2004 = vadd.f32 %v1872, %v1972
        %v2005 = vadd.f32 %v1873, %v1973
        %v2006 = vadd.f32 %v1874, %v1974
        %v2007 = vadd.f32 %v1875, %v1975
        %v2008 = vlaneseq
        %v2009 = vshrl.u32 %v2008, 7
        %v2010 = vsub.s32 1, %v2009
        %v2011 = vrot.slane %v1023, %v2010
        %v2012 = vmul.f32 %v2011, %v1908
        %v2013 = vmul.f32 %v2011, %v1909
        %v2014 = vmul.f32 %v2011, %v1910
        %v2015 = vmul.f32 %v2011, %v1911
        %v2016 = vmul.f32 %v2011, %v1912
        %v2017 = vmul.f32 %v2011, %v1913
        %v2018 = vmul.f32 %v2011, %v1914
        %v2019 = vmul.f32 %v2011, %v1915
        %v2020 = vmul.f32 %v2011, %v1916
        %v2021 = vmul.f32 %v2011, %v1917
        %v2022 = vmul.f32 %v2011, %v1918
        %v2023 = vmul.f32 %v2011, %v1919
        %v2024 = vmul.f32 %v2011, %v1920
        %v2025 = vmul.f32 %v2011, %v1921
        %v2026 = vmul.f32 %v2011, %v1922
        %v2027 = vmul.f32 %v2011, %v1923
        %v2028 = vmul.f32 %v2011, %v1924
        %v2029 = vmul.f32 %v2011, %v1925
        %v2030 = vmul.f32 %v2011, %v1926
        %v2031 = vmul.f32 %v2011, %v1927
        %v2032 = vmul.f32 %v2011, %v1928
        %v2033 = vmul.f32 %v2011, %v1929
        %v2034 = vmul.f32 %v2011, %v1930
        %v2035 = vmul.f32 %v2011, %v1931
        %v2036 = vmul.f32 %v2011, %v1932
        %v2037 = vmul.f32 %v2011, %v1933
        %v2038 = vmul.f32 %v2011, %v1934
        %v2039 = vmul.f32 %v2011, %v1935
        %v2040 = vmul.f32 %v2011, %v1936
        %v2041 = vmul.f32 %v2011, %v1937
        %v2042 = vmul.f32 %v2011, %v1938
        %v2043 = vmul.f32 %v2011, %v1939
        %v2044 = vadd.f32 %v1976, %v2012
        %v2045 = vadd.f32 %v1977, %v2013
        %v2046 = vadd.f32 %v1978, %v2014
        %v2047 = vadd.f32 %v1979, %v2015
        %v2048 = vadd.f32 %v1980, %v2016
        %v2049 = vadd.f32 %v1981, %v2017
        %v2050 = vadd.f32 %v1982, %v2018
        %v2051 = vadd.f32 %v1983, %v2019
        %v2052 = vadd.f32 %v1984, %v2020
        %v2053 = vadd.f32 %v1985, %v2021
        %v2054 = vadd.f32 %v1986, %v2022
        %v2055 = vadd.f32 %v1987, %v2023
        %v2056 = vadd.f32 %v1988, %v2024
        %v2057 = vadd.f32 %v1989, %v2025
        %v2058 = vadd.f32 %v1990, %v2026
        %v2059 = vadd.f32 %v1991, %v2027
        %v2060 = vadd.f32 %v1992, %v2028
        %v2061 = vadd.f32 %v1993, %v2029
        %v2062 = vadd.f32 %v1994, %v2030
        %v2063 = vadd.f32 %v1995, %v2031
        %v2064 = vadd.f32 %v1996, %v2032
        %v2065 = vadd.f32 %v1997, %v2033
        %v2066 = vadd.f32 %v1998, %v2034
        %v2067 = vadd.f32 %v1999, %v2035
        %v2068 = vadd.f32 %v2000, %v2036
        %v2069 = vadd.f32 %v2001, %v2037
        %v2070 = vadd.f32 %v2002, %v2038
        %v2071 = vadd.f32 %v2003, %v2039
        %v2072 = vadd.f32 %v2004, %v2040
        %v2073 = vadd.f32 %v2005, %v2041
        %v2074 = vadd.f32 %v2006, %v2042
        %v2075 = vadd.f32 %v2007, %v2043
        %v2076 = vld [vmem:[%s1674 + $0x2] sm:$0xff]
        %v2077 = vld [vmem:[%s1674 + $0xa] sm:$0xff]
        %v2078 = vld [vmem:[%s1674 + $0x1a] sm:$0xff]
        %v2079 = vld [vmem:[%s1674 + $0x22] sm:$0xff]
        %v2080 = vld [vmem:[%s1674 + $0x32] sm:$0xff]
        %v2081 = vld [vmem:[%s1674 + $0x3a] sm:$0xff]
        %v2082 = vld [vmem:[%s1674 + $0x4a] sm:$0xff]
        %v2083 = vld [vmem:[%s1674 + $0x52] sm:$0xff]
        %v2084 = vld [vmem:[%s1674 + $0x62] sm:$0xff]
        %v2085 = vld [vmem:[%s1674 + $0x6a] sm:$0xff]
        %v2086 = vld [vmem:[%s1674 + $0x7a] sm:$0xff]
        %v2087 = vld [vmem:[%s1674 + $0x82] sm:$0xff]
        %v2088 = vld [vmem:[%s1674 + $0x92] sm:$0xff]
        %v2089 = vld [vmem:[%s1674 + $0x9a] sm:$0xff]
        %v2090 = vld [vmem:[%s1674 + $0xaa] sm:$0xff]
        %v2091 = vld [vmem:[%s1674 + $0xb2] sm:$0xff]
        %v2092 = vld [vmem:[%s1674 + $0xc2] sm:$0xff]
        %v2093 = vld [vmem:[%s1674 + $0xca] sm:$0xff]
        %v2094 = vld [vmem:[%s1674 + $0xda] sm:$0xff]
        %v2095 = vld [vmem:[%s1674 + $0xe2] sm:$0xff]
        %v2096 = vld [vmem:[%s1674 + $0xf2] sm:$0xff]
        %v2097 = vld [vmem:[%s1674 + $0xfa] sm:$0xff]
        %v2098 = vld [vmem:[%s1674 + $0x10a] sm:$0xff]
        %v2099 = vld [vmem:[%s1674 + $0x112] sm:$0xff]
        %v2100 = vld [vmem:[%s1674 + $0x122] sm:$0xff]
        %v2101 = vld [vmem:[%s1674 + $0x12a] sm:$0xff]
        %v2102 = vld [vmem:[%s1674 + $0x13a] sm:$0xff]
        %v2103 = vld [vmem:[%s1674 + $0x142] sm:$0xff]
        %v2104 = vld [vmem:[%s1674 + $0x152] sm:$0xff]
        %v2105 = vld [vmem:[%s1674 + $0x15a] sm:$0xff]
        %v2106 = vld [vmem:[%s1674 + $0x16a] sm:$0xff]
        %v2107 = vld [vmem:[%s1674 + $0x172] sm:$0xff]
        %v2108 = vld [vmem:[%s1707 + $0x2] sm:$0xff]
        %v2109 = vld [vmem:[%s1707 + $0xa] sm:$0xff]
        %v2110 = vld [vmem:[%s1707 + $0x1a] sm:$0xff]
        %v2111 = vld [vmem:[%s1707 + $0x22] sm:$0xff]
        %v2112 = vld [vmem:[%s1707 + $0x32] sm:$0xff]
        %v2113 = vld [vmem:[%s1707 + $0x3a] sm:$0xff]
        %v2114 = vld [vmem:[%s1707 + $0x4a] sm:$0xff]
        %v2115 = vld [vmem:[%s1707 + $0x52] sm:$0xff]
        %v2116 = vld [vmem:[%s1707 + $0x62] sm:$0xff]
        %v2117 = vld [vmem:[%s1707 + $0x6a] sm:$0xff]
        %v2118 = vld [vmem:[%s1707 + $0x7a] sm:$0xff]
        %v2119 = vld [vmem:[%s1707 + $0x82] sm:$0xff]
        %v2120 = vld [vmem:[%s1707 + $0x92] sm:$0xff]
        %v2121 = vld [vmem:[%s1707 + $0x9a] sm:$0xff]
        %v2122 = vld [vmem:[%s1707 + $0xaa] sm:$0xff]
        %v2123 = vld [vmem:[%s1707 + $0xb2] sm:$0xff]
        %v2124 = vld [vmem:[%s1707 + $0xc2] sm:$0xff]
        %v2125 = vld [vmem:[%s1707 + $0xca] sm:$0xff]
        %v2126 = vld [vmem:[%s1707 + $0xda] sm:$0xff]
        %v2127 = vld [vmem:[%s1707 + $0xe2] sm:$0xff]
        %v2128 = vld [vmem:[%s1707 + $0xf2] sm:$0xff]
        %v2129 = vld [vmem:[%s1707 + $0xfa] sm:$0xff]
        %v2130 = vld [vmem:[%s1707 + $0x10a] sm:$0xff]
        %v2131 = vld [vmem:[%s1707 + $0x112] sm:$0xff]
        %v2132 = vld [vmem:[%s1707 + $0x122] sm:$0xff]
        %v2133 = vld [vmem:[%s1707 + $0x12a] sm:$0xff]
        %v2134 = vld [vmem:[%s1707 + $0x13a] sm:$0xff]
        %v2135 = vld [vmem:[%s1707 + $0x142] sm:$0xff]
        %v2136 = vld [vmem:[%s1707 + $0x152] sm:$0xff]
        %v2137 = vld [vmem:[%s1707 + $0x15a] sm:$0xff]
        %v2138 = vld [vmem:[%s1707 + $0x16a] sm:$0xff]
        %v2139 = vld [vmem:[%s1707 + $0x172] sm:$0xff]
        %v2140 = vlaneseq
        %v2141 = vshrl.u32 %v2140, 7
        %v2142 = vsub.s32 2, %v2141
        %v2143 = vrot.slane %v1020, %v2142
        %v2144 = vmul.f32 %v2143, %v2076
        %v2145 = vmul.f32 %v2143, %v2077
        %v2146 = vmul.f32 %v2143, %v2078
        %v2147 = vmul.f32 %v2143, %v2079
        %v2148 = vmul.f32 %v2143, %v2080
        %v2149 = vmul.f32 %v2143, %v2081
        %v2150 = vmul.f32 %v2143, %v2082
        %v2151 = vmul.f32 %v2143, %v2083
        %v2152 = vmul.f32 %v2143, %v2084
        %v2153 = vmul.f32 %v2143, %v2085
        %v2154 = vmul.f32 %v2143, %v2086
        %v2155 = vmul.f32 %v2143, %v2087
        %v2156 = vmul.f32 %v2143, %v2088
        %v2157 = vmul.f32 %v2143, %v2089
        %v2158 = vmul.f32 %v2143, %v2090
        %v2159 = vmul.f32 %v2143, %v2091
        %v2160 = vmul.f32 %v2143, %v2092
        %v2161 = vmul.f32 %v2143, %v2093
        %v2162 = vmul.f32 %v2143, %v2094
        %v2163 = vmul.f32 %v2143, %v2095
        %v2164 = vmul.f32 %v2143, %v2096
        %v2165 = vmul.f32 %v2143, %v2097
        %v2166 = vmul.f32 %v2143, %v2098
        %v2167 = vmul.f32 %v2143, %v2099
        %v2168 = vmul.f32 %v2143, %v2100
        %v2169 = vmul.f32 %v2143, %v2101
        %v2170 = vmul.f32 %v2143, %v2102
        %v2171 = vmul.f32 %v2143, %v2103
        %v2172 = vmul.f32 %v2143, %v2104
        %v2173 = vmul.f32 %v2143, %v2105
        %v2174 = vmul.f32 %v2143, %v2106
        %v2175 = vmul.f32 %v2143, %v2107
        %v2176 = vadd.f32 %v2044, %v2144
        %v2177 = vadd.f32 %v2045, %v2145
        %v2178 = vadd.f32 %v2046, %v2146
        %v2179 = vadd.f32 %v2047, %v2147
        %v2180 = vadd.f32 %v2048, %v2148
        %v2181 = vadd.f32 %v2049, %v2149
        %v2182 = vadd.f32 %v2050, %v2150
        %v2183 = vadd.f32 %v2051, %v2151
        %v2184 = vadd.f32 %v2052, %v2152
        %v2185 = vadd.f32 %v2053, %v2153
        %v2186 = vadd.f32 %v2054, %v2154
        %v2187 = vadd.f32 %v2055, %v2155
        %v2188 = vadd.f32 %v2056, %v2156
        %v2189 = vadd.f32 %v2057, %v2157
        %v2190 = vadd.f32 %v2058, %v2158
        %v2191 = vadd.f32 %v2059, %v2159
        %v2192 = vadd.f32 %v2060, %v2160
        %v2193 = vadd.f32 %v2061, %v2161
        %v2194 = vadd.f32 %v2062, %v2162
        %v2195 = vadd.f32 %v2063, %v2163
        %v2196 = vadd.f32 %v2064, %v2164
        %v2197 = vadd.f32 %v2065, %v2165
        %v2198 = vadd.f32 %v2066, %v2166
        %v2199 = vadd.f32 %v2067, %v2167
        %v2200 = vadd.f32 %v2068, %v2168
        %v2201 = vadd.f32 %v2069, %v2169
        %v2202 = vadd.f32 %v2070, %v2170
        %v2203 = vadd.f32 %v2071, %v2171
        %v2204 = vadd.f32 %v2072, %v2172
        %v2205 = vadd.f32 %v2073, %v2173
        %v2206 = vadd.f32 %v2074, %v2174
        %v2207 = vadd.f32 %v2075, %v2175
        %v2208 = vlaneseq
        %v2209 = vshrl.u32 %v2208, 7
        %v2210 = vsub.s32 2, %v2209
        %v2211 = vrot.slane %v1023, %v2210
        %v2212 = vmul.f32 %v2211, %v2108
        %v2213 = vmul.f32 %v2211, %v2109
        %v2214 = vmul.f32 %v2211, %v2110
        %v2215 = vmul.f32 %v2211, %v2111
        %v2216 = vmul.f32 %v2211, %v2112
        %v2217 = vmul.f32 %v2211, %v2113
        %v2218 = vmul.f32 %v2211, %v2114
        %v2219 = vmul.f32 %v2211, %v2115
        %v2220 = vmul.f32 %v2211, %v2116
        %v2221 = vmul.f32 %v2211, %v2117
        %v2222 = vmul.f32 %v2211, %v2118
        %v2223 = vmul.f32 %v2211, %v2119
        %v2224 = vmul.f32 %v2211, %v2120
        %v2225 = vmul.f32 %v2211, %v2121
        %v2226 = vmul.f32 %v2211, %v2122
        %v2227 = vmul.f32 %v2211, %v2123
        %v2228 = vmul.f32 %v2211, %v2124
        %v2229 = vmul.f32 %v2211, %v2125
        %v2230 = vmul.f32 %v2211, %v2126
        %v2231 = vmul.f32 %v2211, %v2127
        %v2232 = vmul.f32 %v2211, %v2128
        %v2233 = vmul.f32 %v2211, %v2129
        %v2234 = vmul.f32 %v2211, %v2130
        %v2235 = vmul.f32 %v2211, %v2131
        %v2236 = vmul.f32 %v2211, %v2132
        %v2237 = vmul.f32 %v2211, %v2133
        %v2238 = vmul.f32 %v2211, %v2134
        %v2239 = vmul.f32 %v2211, %v2135
        %v2240 = vmul.f32 %v2211, %v2136
        %v2241 = vmul.f32 %v2211, %v2137
        %v2242 = vmul.f32 %v2211, %v2138
        %v2243 = vmul.f32 %v2211, %v2139
        %v2244 = vadd.f32 %v2176, %v2212
        %v2245 = vadd.f32 %v2177, %v2213
        %v2246 = vadd.f32 %v2178, %v2214
        %v2247 = vadd.f32 %v2179, %v2215
        %v2248 = vadd.f32 %v2180, %v2216
        %v2249 = vadd.f32 %v2181, %v2217
        %v2250 = vadd.f32 %v2182, %v2218
        %v2251 = vadd.f32 %v2183, %v2219
        %v2252 = vadd.f32 %v2184, %v2220
        %v2253 = vadd.f32 %v2185, %v2221
        %v2254 = vadd.f32 %v2186, %v2222
        %v2255 = vadd.f32 %v2187, %v2223
        %v2256 = vadd.f32 %v2188, %v2224
        %v2257 = vadd.f32 %v2189, %v2225
        %v2258 = vadd.f32 %v2190, %v2226
        %v2259 = vadd.f32 %v2191, %v2227
        %v2260 = vadd.f32 %v2192, %v2228
        %v2261 = vadd.f32 %v2193, %v2229
        %v2262 = vadd.f32 %v2194, %v2230
        %v2263 = vadd.f32 %v2195, %v2231
        %v2264 = vadd.f32 %v2196, %v2232
        %v2265 = vadd.f32 %v2197, %v2233
        %v2266 = vadd.f32 %v2198, %v2234
        %v2267 = vadd.f32 %v2199, %v2235
        %v2268 = vadd.f32 %v2200, %v2236
        %v2269 = vadd.f32 %v2201, %v2237
        %v2270 = vadd.f32 %v2202, %v2238
        %v2271 = vadd.f32 %v2203, %v2239
        %v2272 = vadd.f32 %v2204, %v2240
        %v2273 = vadd.f32 %v2205, %v2241
        %v2274 = vadd.f32 %v2206, %v2242
        %v2275 = vadd.f32 %v2207, %v2243
        %s2276 = sadd.s32 0, 2
        %s2277 = smul.u32 %s2276, 24
        %s2278 = scalar_lea.vmem [#allocation2], %s2277
        %v2279 = vld [vmem:[%s2278] sm:$0xff]
        %v2280 = vld [vmem:[%s2278 + $0x8] sm:$0xff]
        %v2281 = vld [vmem:[%s2278 + $0x18] sm:$0xff]
        %v2282 = vld [vmem:[%s2278 + $0x20] sm:$0xff]
        %v2283 = vld [vmem:[%s2278 + $0x30] sm:$0xff]
        %v2284 = vld [vmem:[%s2278 + $0x38] sm:$0xff]
        %v2285 = vld [vmem:[%s2278 + $0x48] sm:$0xff]
        %v2286 = vld [vmem:[%s2278 + $0x50] sm:$0xff]
        %v2287 = vld [vmem:[%s2278 + $0x60] sm:$0xff]
        %v2288 = vld [vmem:[%s2278 + $0x68] sm:$0xff]
        %v2289 = vld [vmem:[%s2278 + $0x78] sm:$0xff]
        %v2290 = vld [vmem:[%s2278 + $0x80] sm:$0xff]
        %v2291 = vld [vmem:[%s2278 + $0x90] sm:$0xff]
        %v2292 = vld [vmem:[%s2278 + $0x98] sm:$0xff]
        %v2293 = vld [vmem:[%s2278 + $0xa8] sm:$0xff]
        %v2294 = vld [vmem:[%s2278 + $0xb0] sm:$0xff]
        %v2295 = vld [vmem:[%s2278 + $0xc0] sm:$0xff]
        %v2296 = vld [vmem:[%s2278 + $0xc8] sm:$0xff]
        %v2297 = vld [vmem:[%s2278 + $0xd8] sm:$0xff]
        %v2298 = vld [vmem:[%s2278 + $0xe0] sm:$0xff]
        %v2299 = vld [vmem:[%s2278 + $0xf0] sm:$0xff]
        %v2300 = vld [vmem:[%s2278 + $0xf8] sm:$0xff]
        %v2301 = vld [vmem:[%s2278 + $0x108] sm:$0xff]
        %v2302 = vld [vmem:[%s2278 + $0x110] sm:$0xff]
        %v2303 = vld [vmem:[%s2278 + $0x120] sm:$0xff]
        %v2304 = vld [vmem:[%s2278 + $0x128] sm:$0xff]
        %v2305 = vld [vmem:[%s2278 + $0x138] sm:$0xff]
        %v2306 = vld [vmem:[%s2278 + $0x140] sm:$0xff]
        %v2307 = vld [vmem:[%s2278 + $0x150] sm:$0xff]
        %v2308 = vld [vmem:[%s2278 + $0x158] sm:$0xff]
        %v2309 = vld [vmem:[%s2278 + $0x168] sm:$0xff]
        %v2310 = vld [vmem:[%s2278 + $0x170] sm:$0xff]
        %s2311 = scalar_lea.vmem [#allocation3], %s2277
        %v2312 = vld [vmem:[%s2311] sm:$0xff]
        %v2313 = vld [vmem:[%s2311 + $0x8] sm:$0xff]
        %v2314 = vld [vmem:[%s2311 + $0x18] sm:$0xff]
        %v2315 = vld [vmem:[%s2311 + $0x20] sm:$0xff]
        %v2316 = vld [vmem:[%s2311 + $0x30] sm:$0xff]
        %v2317 = vld [vmem:[%s2311 + $0x38] sm:$0xff]
        %v2318 = vld [vmem:[%s2311 + $0x48] sm:$0xff]
        %v2319 = vld [vmem:[%s2311 + $0x50] sm:$0xff]
        %v2320 = vld [vmem:[%s2311 + $0x60] sm:$0xff]
        %v2321 = vld [vmem:[%s2311 + $0x68] sm:$0xff]
        %v2322 = vld [vmem:[%s2311 + $0x78] sm:$0xff]
        %v2323 = vld [vmem:[%s2311 + $0x80] sm:$0xff]
        %v2324 = vld [vmem:[%s2311 + $0x90] sm:$0xff]
        %v2325 = vld [vmem:[%s2311 + $0x98] sm:$0xff]
        %v2326 = vld [vmem:[%s2311 + $0xa8] sm:$0xff]
        %v2327 = vld [vmem:[%s2311 + $0xb0] sm:$0xff]
        %v2328 = vld [vmem:[%s2311 + $0xc0] sm:$0xff]
        %v2329 = vld [vmem:[%s2311 + $0xc8] sm:$0xff]
        %v2330 = vld [vmem:[%s2311 + $0xd8] sm:$0xff]
        %v2331 = vld [vmem:[%s2311 + $0xe0] sm:$0xff]
        %v2332 = vld [vmem:[%s2311 + $0xf0] sm:$0xff]
        %v2333 = vld [vmem:[%s2311 + $0xf8] sm:$0xff]
        %v2334 = vld [vmem:[%s2311 + $0x108] sm:$0xff]
        %v2335 = vld [vmem:[%s2311 + $0x110] sm:$0xff]
        %v2336 = vld [vmem:[%s2311 + $0x120] sm:$0xff]
        %v2337 = vld [vmem:[%s2311 + $0x128] sm:$0xff]
        %v2338 = vld [vmem:[%s2311 + $0x138] sm:$0xff]
        %v2339 = vld [vmem:[%s2311 + $0x140] sm:$0xff]
        %v2340 = vld [vmem:[%s2311 + $0x150] sm:$0xff]
        %v2341 = vld [vmem:[%s2311 + $0x158] sm:$0xff]
        %v2342 = vld [vmem:[%s2311 + $0x168] sm:$0xff]
        %v2343 = vld [vmem:[%s2311 + $0x170] sm:$0xff]
        %v2344 = vlaneseq
        %v2345 = vshrl.u32 %v2344, 7
        %v2346 = vsub.s32 0, %v2345
        %v2347 = vrot.slane %v1021, %v2346
        %v2348 = vmul.f32 %v2347, %v2279
        %v2349 = vmul.f32 %v2347, %v2280
        %v2350 = vmul.f32 %v2347, %v2281
        %v2351 = vmul.f32 %v2347, %v2282
        %v2352 = vmul.f32 %v2347, %v2283
        %v2353 = vmul.f32 %v2347, %v2284
        %v2354 = vmul.f32 %v2347, %v2285
        %v2355 = vmul.f32 %v2347, %v2286
        %v2356 = vmul.f32 %v2347, %v2287
        %v2357 = vmul.f32 %v2347, %v2288
        %v2358 = vmul.f32 %v2347, %v2289
        %v2359 = vmul.f32 %v2347, %v2290
        %v2360 = vmul.f32 %v2347, %v2291
        %v2361 = vmul.f32 %v2347, %v2292
        %v2362 = vmul.f32 %v2347, %v2293
        %v2363 = vmul.f32 %v2347, %v2294
        %v2364 = vmul.f32 %v2347, %v2295
        %v2365 = vmul.f32 %v2347, %v2296
        %v2366 = vmul.f32 %v2347, %v2297
        %v2367 = vmul.f32 %v2347, %v2298
        %v2368 = vmul.f32 %v2347, %v2299
        %v2369 = vmul.f32 %v2347, %v2300
        %v2370 = vmul.f32 %v2347, %v2301
        %v2371 = vmul.f32 %v2347, %v2302
        %v2372 = vmul.f32 %v2347, %v2303
        %v2373 = vmul.f32 %v2347, %v2304
        %v2374 = vmul.f32 %v2347, %v2305
        %v2375 = vmul.f32 %v2347, %v2306
        %v2376 = vmul.f32 %v2347, %v2307
        %v2377 = vmul.f32 %v2347, %v2308
        %v2378 = vmul.f32 %v2347, %v2309
        %v2379 = vmul.f32 %v2347, %v2310
        %v2380 = vadd.f32 %v2244, %v2348
        %v2381 = vadd.f32 %v2245, %v2349
        %v2382 = vadd.f32 %v2246, %v2350
        %v2383 = vadd.f32 %v2247, %v2351
        %v2384 = vadd.f32 %v2248, %v2352
        %v2385 = vadd.f32 %v2249, %v2353
        %v2386 = vadd.f32 %v2250, %v2354
        %v2387 = vadd.f32 %v2251, %v2355
        %v2388 = vadd.f32 %v2252, %v2356
        %v2389 = vadd.f32 %v2253, %v2357
        %v2390 = vadd.f32 %v2254, %v2358
        %v2391 = vadd.f32 %v2255, %v2359
        %v2392 = vadd.f32 %v2256, %v2360
        %v2393 = vadd.f32 %v2257, %v2361
        %v2394 = vadd.f32 %v2258, %v2362
        %v2395 = vadd.f32 %v2259, %v2363
        %v2396 = vadd.f32 %v2260, %v2364
        %v2397 = vadd.f32 %v2261, %v2365
        %v2398 = vadd.f32 %v2262, %v2366
        %v2399 = vadd.f32 %v2263, %v2367
        %v2400 = vadd.f32 %v2264, %v2368
        %v2401 = vadd.f32 %v2265, %v2369
        %v2402 = vadd.f32 %v2266, %v2370
        %v2403 = vadd.f32 %v2267, %v2371
        %v2404 = vadd.f32 %v2268, %v2372
        %v2405 = vadd.f32 %v2269, %v2373
        %v2406 = vadd.f32 %v2270, %v2374
        %v2407 = vadd.f32 %v2271, %v2375
        %v2408 = vadd.f32 %v2272, %v2376
        %v2409 = vadd.f32 %v2273, %v2377
        %v2410 = vadd.f32 %v2274, %v2378
        %v2411 = vadd.f32 %v2275, %v2379
        %v2412 = vlaneseq
        %v2413 = vshrl.u32 %v2412, 7
        %v2414 = vsub.s32 0, %v2413
        %v2415 = vrot.slane %v1024, %v2414
        %v2416 = vmul.f32 %v2415, %v2312
        %v2417 = vmul.f32 %v2415, %v2313
        %v2418 = vmul.f32 %v2415, %v2314
        %v2419 = vmul.f32 %v2415, %v2315
        %v2420 = vmul.f32 %v2415, %v2316
        %v2421 = vmul.f32 %v2415, %v2317
        %v2422 = vmul.f32 %v2415, %v2318
        %v2423 = vmul.f32 %v2415, %v2319
        %v2424 = vmul.f32 %v2415, %v2320
        %v2425 = vmul.f32 %v2415, %v2321
        %v2426 = vmul.f32 %v2415, %v2322
        %v2427 = vmul.f32 %v2415, %v2323
        %v2428 = vmul.f32 %v2415, %v2324
        %v2429 = vmul.f32 %v2415, %v2325
        %v2430 = vmul.f32 %v2415, %v2326
        %v2431 = vmul.f32 %v2415, %v2327
        %v2432 = vmul.f32 %v2415, %v2328
        %v2433 = vmul.f32 %v2415, %v2329
        %v2434 = vmul.f32 %v2415, %v2330
        %v2435 = vmul.f32 %v2415, %v2331
        %v2436 = vmul.f32 %v2415, %v2332
        %v2437 = vmul.f32 %v2415, %v2333
        %v2438 = vmul.f32 %v2415, %v2334
        %v2439 = vmul.f32 %v2415, %v2335
        %v2440 = vmul.f32 %v2415, %v2336
        %v2441 = vmul.f32 %v2415, %v2337
        %v2442 = vmul.f32 %v2415, %v2338
        %v2443 = vmul.f32 %v2415, %v2339
        %v2444 = vmul.f32 %v2415, %v2340
        %v2445 = vmul.f32 %v2415, %v2341
        %v2446 = vmul.f32 %v2415, %v2342
        %v2447 = vmul.f32 %v2415, %v2343
        %v2448 = vadd.f32 %v2380, %v2416
        %v2449 = vadd.f32 %v2381, %v2417
        %v2450 = vadd.f32 %v2382, %v2418
        %v2451 = vadd.f32 %v2383, %v2419
        %v2452 = vadd.f32 %v2384, %v2420
        %v2453 = vadd.f32 %v2385, %v2421
        %v2454 = vadd.f32 %v2386, %v2422
        %v2455 = vadd.f32 %v2387, %v2423
        %v2456 = vadd.f32 %v2388, %v2424
        %v2457 = vadd.f32 %v2389, %v2425
        %v2458 = vadd.f32 %v2390, %v2426
        %v2459 = vadd.f32 %v2391, %v2427
        %v2460 = vadd.f32 %v2392, %v2428
        %v2461 = vadd.f32 %v2393, %v2429
        %v2462 = vadd.f32 %v2394, %v2430
        %v2463 = vadd.f32 %v2395, %v2431
        %v2464 = vadd.f32 %v2396, %v2432
        %v2465 = vadd.f32 %v2397, %v2433
        %v2466 = vadd.f32 %v2398, %v2434
        %v2467 = vadd.f32 %v2399, %v2435
        %v2468 = vadd.f32 %v2400, %v2436
        %v2469 = vadd.f32 %v2401, %v2437
        %v2470 = vadd.f32 %v2402, %v2438
        %v2471 = vadd.f32 %v2403, %v2439
        %v2472 = vadd.f32 %v2404, %v2440
        %v2473 = vadd.f32 %v2405, %v2441
        %v2474 = vadd.f32 %v2406, %v2442
        %v2475 = vadd.f32 %v2407, %v2443
        %v2476 = vadd.f32 %v2408, %v2444
        %v2477 = vadd.f32 %v2409, %v2445
        %v2478 = vadd.f32 %v2410, %v2446
        %v2479 = vadd.f32 %v2411, %v2447
        %v2480 = vld [vmem:[%s2278 + $0x1] sm:$0xff]
        %v2481 = vld [vmem:[%s2278 + $0x9] sm:$0xff]
        %v2482 = vld [vmem:[%s2278 + $0x19] sm:$0xff]
        %v2483 = vld [vmem:[%s2278 + $0x21] sm:$0xff]
        %v2484 = vld [vmem:[%s2278 + $0x31] sm:$0xff]
        %v2485 = vld [vmem:[%s2278 + $0x39] sm:$0xff]
        %v2486 = vld [vmem:[%s2278 + $0x49] sm:$0xff]
        %v2487 = vld [vmem:[%s2278 + $0x51] sm:$0xff]
        %v2488 = vld [vmem:[%s2278 + $0x61] sm:$0xff]
        %v2489 = vld [vmem:[%s2278 + $0x69] sm:$0xff]
        %v2490 = vld [vmem:[%s2278 + $0x79] sm:$0xff]
        %v2491 = vld [vmem:[%s2278 + $0x81] sm:$0xff]
        %v2492 = vld [vmem:[%s2278 + $0x91] sm:$0xff]
        %v2493 = vld [vmem:[%s2278 + $0x99] sm:$0xff]
        %v2494 = vld [vmem:[%s2278 + $0xa9] sm:$0xff]
        %v2495 = vld [vmem:[%s2278 + $0xb1] sm:$0xff]
        %v2496 = vld [vmem:[%s2278 + $0xc1] sm:$0xff]
        %v2497 = vld [vmem:[%s2278 + $0xc9] sm:$0xff]
        %v2498 = vld [vmem:[%s2278 + $0xd9] sm:$0xff]
        %v2499 = vld [vmem:[%s2278 + $0xe1] sm:$0xff]
        %v2500 = vld [vmem:[%s2278 + $0xf1] sm:$0xff]
        %v2501 = vld [vmem:[%s2278 + $0xf9] sm:$0xff]
        %v2502 = vld [vmem:[%s2278 + $0x109] sm:$0xff]
        %v2503 = vld [vmem:[%s2278 + $0x111] sm:$0xff]
        %v2504 = vld [vmem:[%s2278 + $0x121] sm:$0xff]
        %v2505 = vld [vmem:[%s2278 + $0x129] sm:$0xff]
        %v2506 = vld [vmem:[%s2278 + $0x139] sm:$0xff]
        %v2507 = vld [vmem:[%s2278 + $0x141] sm:$0xff]
        %v2508 = vld [vmem:[%s2278 + $0x151] sm:$0xff]
        %v2509 = vld [vmem:[%s2278 + $0x159] sm:$0xff]
        %v2510 = vld [vmem:[%s2278 + $0x169] sm:$0xff]
        %v2511 = vld [vmem:[%s2278 + $0x171] sm:$0xff]
        %v2512 = vld [vmem:[%s2311 + $0x1] sm:$0xff]
        %v2513 = vld [vmem:[%s2311 + $0x9] sm:$0xff]
        %v2514 = vld [vmem:[%s2311 + $0x19] sm:$0xff]
        %v2515 = vld [vmem:[%s2311 + $0x21] sm:$0xff]
        %v2516 = vld [vmem:[%s2311 + $0x31] sm:$0xff]
        %v2517 = vld [vmem:[%s2311 + $0x39] sm:$0xff]
        %v2518 = vld [vmem:[%s2311 + $0x49] sm:$0xff]
        %v2519 = vld [vmem:[%s2311 + $0x51] sm:$0xff]
        %v2520 = vld [vmem:[%s2311 + $0x61] sm:$0xff]
        %v2521 = vld [vmem:[%s2311 + $0x69] sm:$0xff]
        %v2522 = vld [vmem:[%s2311 + $0x79] sm:$0xff]
        %v2523 = vld [vmem:[%s2311 + $0x81] sm:$0xff]
        %v2524 = vld [vmem:[%s2311 + $0x91] sm:$0xff]
        %v2525 = vld [vmem:[%s2311 + $0x99] sm:$0xff]
        %v2526 = vld [vmem:[%s2311 + $0xa9] sm:$0xff]
        %v2527 = vld [vmem:[%s2311 + $0xb1] sm:$0xff]
        %v2528 = vld [vmem:[%s2311 + $0xc1] sm:$0xff]
        %v2529 = vld [vmem:[%s2311 + $0xc9] sm:$0xff]
        %v2530 = vld [vmem:[%s2311 + $0xd9] sm:$0xff]
        %v2531 = vld [vmem:[%s2311 + $0xe1] sm:$0xff]
        %v2532 = vld [vmem:[%s2311 + $0xf1] sm:$0xff]
        %v2533 = vld [vmem:[%s2311 + $0xf9] sm:$0xff]
        %v2534 = vld [vmem:[%s2311 + $0x109] sm:$0xff]
        %v2535 = vld [vmem:[%s2311 + $0x111] sm:$0xff]
        %v2536 = vld [vmem:[%s2311 + $0x121] sm:$0xff]
        %v2537 = vld [vmem:[%s2311 + $0x129] sm:$0xff]
        %v2538 = vld [vmem:[%s2311 + $0x139] sm:$0xff]
        %v2539 = vld [vmem:[%s2311 + $0x141] sm:$0xff]
        %v2540 = vld [vmem:[%s2311 + $0x151] sm:$0xff]
        %v2541 = vld [vmem:[%s2311 + $0x159] sm:$0xff]
        %v2542 = vld [vmem:[%s2311 + $0x169] sm:$0xff]
        %v2543 = vld [vmem:[%s2311 + $0x171] sm:$0xff]
        %v2544 = vlaneseq
        %v2545 = vshrl.u32 %v2544, 7
        %v2546 = vsub.s32 1, %v2545
        %v2547 = vrot.slane %v1021, %v2546
        %v2548 = vmul.f32 %v2547, %v2480
        %v2549 = vmul.f32 %v2547, %v2481
        %v2550 = vmul.f32 %v2547, %v2482
        %v2551 = vmul.f32 %v2547, %v2483
        %v2552 = vmul.f32 %v2547, %v2484
        %v2553 = vmul.f32 %v2547, %v2485
        %v2554 = vmul.f32 %v2547, %v2486
        %v2555 = vmul.f32 %v2547, %v2487
        %v2556 = vmul.f32 %v2547, %v2488
        %v2557 = vmul.f32 %v2547, %v2489
        %v2558 = vmul.f32 %v2547, %v2490
        %v2559 = vmul.f32 %v2547, %v2491
        %v2560 = vmul.f32 %v2547, %v2492
        %v2561 = vmul.f32 %v2547, %v2493
        %v2562 = vmul.f32 %v2547, %v2494
        %v2563 = vmul.f32 %v2547, %v2495
        %v2564 = vmul.f32 %v2547, %v2496
        %v2565 = vmul.f32 %v2547, %v2497
        %v2566 = vmul.f32 %v2547, %v2498
        %v2567 = vmul.f32 %v2547, %v2499
        %v2568 = vmul.f32 %v2547, %v2500
        %v2569 = vmul.f32 %v2547, %v2501
        %v2570 = vmul.f32 %v2547, %v2502
        %v2571 = vmul.f32 %v2547, %v2503
        %v2572 = vmul.f32 %v2547, %v2504
        %v2573 = vmul.f32 %v2547, %v2505
        %v2574 = vmul.f32 %v2547, %v2506
        %v2575 = vmul.f32 %v2547, %v2507
        %v2576 = vmul.f32 %v2547, %v2508
        %v2577 = vmul.f32 %v2547, %v2509
        %v2578 = vmul.f32 %v2547, %v2510
        %v2579 = vmul.f32 %v2547, %v2511
        %v2580 = vadd.f32 %v2448, %v2548
        %v2581 = vadd.f32 %v2449, %v2549
        %v2582 = vadd.f32 %v2450, %v2550
        %v2583 = vadd.f32 %v2451, %v2551
        %v2584 = vadd.f32 %v2452, %v2552
        %v2585 = vadd.f32 %v2453, %v2553
        %v2586 = vadd.f32 %v2454, %v2554
        %v2587 = vadd.f32 %v2455, %v2555
        %v2588 = vadd.f32 %v2456, %v2556
        %v2589 = vadd.f32 %v2457, %v2557
        %v2590 = vadd.f32 %v2458, %v2558
        %v2591 = vadd.f32 %v2459, %v2559
        %v2592 = vadd.f32 %v2460, %v2560
        %v2593 = vadd.f32 %v2461, %v2561
        %v2594 = vadd.f32 %v2462, %v2562
        %v2595 = vadd.f32 %v2463, %v2563
        %v2596 = vadd.f32 %v2464, %v2564
        %v2597 = vadd.f32 %v2465, %v2565
        %v2598 = vadd.f32 %v2466, %v2566
        %v2599 = vadd.f32 %v2467, %v2567
        %v2600 = vadd.f32 %v2468, %v2568
        %v2601 = vadd.f32 %v2469, %v2569
        %v2602 = vadd.f32 %v2470, %v2570
        %v2603 = vadd.f32 %v2471, %v2571
        %v2604 = vadd.f32 %v2472, %v2572
        %v2605 = vadd.f32 %v2473, %v2573
        %v2606 = vadd.f32 %v2474, %v2574
        %v2607 = vadd.f32 %v2475, %v2575
        %v2608 = vadd.f32 %v2476, %v2576
        %v2609 = vadd.f32 %v2477, %v2577
        %v2610 = vadd.f32 %v2478, %v2578
        %v2611 = vadd.f32 %v2479, %v2579
        %v2612 = vlaneseq
        %v2613 = vshrl.u32 %v2612, 7
        %v2614 = vsub.s32 1, %v2613
        %v2615 = vrot.slane %v1024, %v2614
        %v2616 = vmul.f32 %v2615, %v2512
        %v2617 = vmul.f32 %v2615, %v2513
        %v2618 = vmul.f32 %v2615, %v2514
        %v2619 = vmul.f32 %v2615, %v2515
        %v2620 = vmul.f32 %v2615, %v2516
        %v2621 = vmul.f32 %v2615, %v2517
        %v2622 = vmul.f32 %v2615, %v2518
        %v2623 = vmul.f32 %v2615, %v2519
        %v2624 = vmul.f32 %v2615, %v2520
        %v2625 = vmul.f32 %v2615, %v2521
        %v2626 = vmul.f32 %v2615, %v2522
        %v2627 = vmul.f32 %v2615, %v2523
        %v2628 = vmul.f32 %v2615, %v2524
        %v2629 = vmul.f32 %v2615, %v2525
        %v2630 = vmul.f32 %v2615, %v2526
        %v2631 = vmul.f32 %v2615, %v2527
        %v2632 = vmul.f32 %v2615, %v2528
        %v2633 = vmul.f32 %v2615, %v2529
        %v2634 = vmul.f32 %v2615, %v2530
        %v2635 = vmul.f32 %v2615, %v2531
        %v2636 = vmul.f32 %v2615, %v2532
        %v2637 = vmul.f32 %v2615, %v2533
        %v2638 = vmul.f32 %v2615, %v2534
        %v2639 = vmul.f32 %v2615, %v2535
        %v2640 = vmul.f32 %v2615, %v2536
        %v2641 = vmul.f32 %v2615, %v2537
        %v2642 = vmul.f32 %v2615, %v2538
        %v2643 = vmul.f32 %v2615, %v2539
        %v2644 = vmul.f32 %v2615, %v2540
        %v2645 = vmul.f32 %v2615, %v2541
        %v2646 = vmul.f32 %v2615, %v2542
        %v2647 = vmul.f32 %v2615, %v2543
        %v2648 = vadd.f32 %v2580, %v2616
        %v2649 = vadd.f32 %v2581, %v2617
        %v2650 = vadd.f32 %v2582, %v2618
        %v2651 = vadd.f32 %v2583, %v2619
        %v2652 = vadd.f32 %v2584, %v2620
        %v2653 = vadd.f32 %v2585, %v2621
        %v2654 = vadd.f32 %v2586, %v2622
        %v2655 = vadd.f32 %v2587, %v2623
        %v2656 = vadd.f32 %v2588, %v2624
        %v2657 = vadd.f32 %v2589, %v2625
        %v2658 = vadd.f32 %v2590, %v2626
        %v2659 = vadd.f32 %v2591, %v2627
        %v2660 = vadd.f32 %v2592, %v2628
        %v2661 = vadd.f32 %v2593, %v2629
        %v2662 = vadd.f32 %v2594, %v2630
        %v2663 = vadd.f32 %v2595, %v2631
        %v2664 = vadd.f32 %v2596, %v2632
        %v2665 = vadd.f32 %v2597, %v2633
        %v2666 = vadd.f32 %v2598, %v2634
        %v2667 = vadd.f32 %v2599, %v2635
        %v2668 = vadd.f32 %v2600, %v2636
        %v2669 = vadd.f32 %v2601, %v2637
        %v2670 = vadd.f32 %v2602, %v2638
        %v2671 = vadd.f32 %v2603, %v2639
        %v2672 = vadd.f32 %v2604, %v2640
        %v2673 = vadd.f32 %v2605, %v2641
        %v2674 = vadd.f32 %v2606, %v2642
        %v2675 = vadd.f32 %v2607, %v2643
        %v2676 = vadd.f32 %v2608, %v2644
        %v2677 = vadd.f32 %v2609, %v2645
        %v2678 = vadd.f32 %v2610, %v2646
        %v2679 = vadd.f32 %v2611, %v2647
        %v2680 = vld [vmem:[%s2278 + $0x2] sm:$0xff]
        %v2681 = vld [vmem:[%s2278 + $0xa] sm:$0xff]
        %v2682 = vld [vmem:[%s2278 + $0x1a] sm:$0xff]
        %v2683 = vld [vmem:[%s2278 + $0x22] sm:$0xff]
        %v2684 = vld [vmem:[%s2278 + $0x32] sm:$0xff]
        %v2685 = vld [vmem:[%s2278 + $0x3a] sm:$0xff]
        %v2686 = vld [vmem:[%s2278 + $0x4a] sm:$0xff]
        %v2687 = vld [vmem:[%s2278 + $0x52] sm:$0xff]
        %v2688 = vld [vmem:[%s2278 + $0x62] sm:$0xff]
        %v2689 = vld [vmem:[%s2278 + $0x6a] sm:$0xff]
        %v2690 = vld [vmem:[%s2278 + $0x7a] sm:$0xff]
        %v2691 = vld [vmem:[%s2278 + $0x82] sm:$0xff]
        %v2692 = vld [vmem:[%s2278 + $0x92] sm:$0xff]
        %v2693 = vld [vmem:[%s2278 + $0x9a] sm:$0xff]
        %v2694 = vld [vmem:[%s2278 + $0xaa] sm:$0xff]
        %v2695 = vld [vmem:[%s2278 + $0xb2] sm:$0xff]
        %v2696 = vld [vmem:[%s2278 + $0xc2] sm:$0xff]
        %v2697 = vld [vmem:[%s2278 + $0xca] sm:$0xff]
        %v2698 = vld [vmem:[%s2278 + $0xda] sm:$0xff]
        %v2699 = vld [vmem:[%s2278 + $0xe2] sm:$0xff]
        %v2700 = vld [vmem:[%s2278 + $0xf2] sm:$0xff]
        %v2701 = vld [vmem:[%s2278 + $0xfa] sm:$0xff]
        %v2702 = vld [vmem:[%s2278 + $0x10a] sm:$0xff]
        %v2703 = vld [vmem:[%s2278 + $0x112] sm:$0xff]
        %v2704 = vld [vmem:[%s2278 + $0x122] sm:$0xff]
        %v2705 = vld [vmem:[%s2278 + $0x12a] sm:$0xff]
        %v2706 = vld [vmem:[%s2278 + $0x13a] sm:$0xff]
        %v2707 = vld [vmem:[%s2278 + $0x142] sm:$0xff]
        %v2708 = vld [vmem:[%s2278 + $0x152] sm:$0xff]
        %v2709 = vld [vmem:[%s2278 + $0x15a] sm:$0xff]
        %v2710 = vld [vmem:[%s2278 + $0x16a] sm:$0xff]
        %v2711 = vld [vmem:[%s2278 + $0x172] sm:$0xff]
        %v2712 = vld [vmem:[%s2311 + $0x2] sm:$0xff]
        %v2713 = vld [vmem:[%s2311 + $0xa] sm:$0xff]
        %v2714 = vld [vmem:[%s2311 + $0x1a] sm:$0xff]
        %v2715 = vld [vmem:[%s2311 + $0x22] sm:$0xff]
        %v2716 = vld [vmem:[%s2311 + $0x32] sm:$0xff]
        %v2717 = vld [vmem:[%s2311 + $0x3a] sm:$0xff]
        %v2718 = vld [vmem:[%s2311 + $0x4a] sm:$0xff]
        %v2719 = vld [vmem:[%s2311 + $0x52] sm:$0xff]
        %v2720 = vld [vmem:[%s2311 + $0x62] sm:$0xff]
        %v2721 = vld [vmem:[%s2311 + $0x6a] sm:$0xff]
        %v2722 = vld [vmem:[%s2311 + $0x7a] sm:$0xff]
        %v2723 = vld [vmem:[%s2311 + $0x82] sm:$0xff]
        %v2724 = vld [vmem:[%s2311 + $0x92] sm:$0xff]
        %v2725 = vld [vmem:[%s2311 + $0x9a] sm:$0xff]
        %v2726 = vld [vmem:[%s2311 + $0xaa] sm:$0xff]
        %v2727 = vld [vmem:[%s2311 + $0xb2] sm:$0xff]
        %v2728 = vld [vmem:[%s2311 + $0xc2] sm:$0xff]
        %v2729 = vld [vmem:[%s2311 + $0xca] sm:$0xff]
        %v2730 = vld [vmem:[%s2311 + $0xda] sm:$0xff]
        %v2731 = vld [vmem:[%s2311 + $0xe2] sm:$0xff]
        %v2732 = vld [vmem:[%s2311 + $0xf2] sm:$0xff]
        %v2733 = vld [vmem:[%s2311 + $0xfa] sm:$0xff]
        %v2734 = vld [vmem:[%s2311 + $0x10a] sm:$0xff]
        %v2735 = vld [vmem:[%s2311 + $0x112] sm:$0xff]
        %v2736 = vld [vmem:[%s2311 + $0x122] sm:$0xff]
        %v2737 = vld [vmem:[%s2311 + $0x12a] sm:$0xff]
        %v2738 = vld [vmem:[%s2311 + $0x13a] sm:$0xff]
        %v2739 = vld [vmem:[%s2311 + $0x142] sm:$0xff]
        %v2740 = vld [vmem:[%s2311 + $0x152] sm:$0xff]
        %v2741 = vld [vmem:[%s2311 + $0x15a] sm:$0xff]
        %v2742 = vld [vmem:[%s2311 + $0x16a] sm:$0xff]
        %v2743 = vld [vmem:[%s2311 + $0x172] sm:$0xff]
        %v2744 = vlaneseq
        %v2745 = vshrl.u32 %v2744, 7
        %v2746 = vsub.s32 2, %v2745
        %v2747 = vrot.slane %v1021, %v2746
        %v2748 = vmul.f32 %v2747, %v2680
        %v2749 = vmul.f32 %v2747, %v2681
        %v2750 = vmul.f32 %v2747, %v2682
        %v2751 = vmul.f32 %v2747, %v2683
        %v2752 = vmul.f32 %v2747, %v2684
        %v2753 = vmul.f32 %v2747, %v2685
        %v2754 = vmul.f32 %v2747, %v2686
        %v2755 = vmul.f32 %v2747, %v2687
        %v2756 = vmul.f32 %v2747, %v2688
        %v2757 = vmul.f32 %v2747, %v2689
        %v2758 = vmul.f32 %v2747, %v2690
        %v2759 = vmul.f32 %v2747, %v2691
        %v2760 = vmul.f32 %v2747, %v2692
        %v2761 = vmul.f32 %v2747, %v2693
        %v2762 = vmul.f32 %v2747, %v2694
        %v2763 = vmul.f32 %v2747, %v2695
        %v2764 = vmul.f32 %v2747, %v2696
        %v2765 = vmul.f32 %v2747, %v2697
        %v2766 = vmul.f32 %v2747, %v2698
        %v2767 = vmul.f32 %v2747, %v2699
        %v2768 = vmul.f32 %v2747, %v2700
        %v2769 = vmul.f32 %v2747, %v2701
        %v2770 = vmul.f32 %v2747, %v2702
        %v2771 = vmul.f32 %v2747, %v2703
        %v2772 = vmul.f32 %v2747, %v2704
        %v2773 = vmul.f32 %v2747, %v2705
        %v2774 = vmul.f32 %v2747, %v2706
        %v2775 = vmul.f32 %v2747, %v2707
        %v2776 = vmul.f32 %v2747, %v2708
        %v2777 = vmul.f32 %v2747, %v2709
        %v2778 = vmul.f32 %v2747, %v2710
        %v2779 = vmul.f32 %v2747, %v2711
        %v2780 = vadd.f32 %v2648, %v2748
        %v2781 = vadd.f32 %v2649, %v2749
        %v2782 = vadd.f32 %v2650, %v2750
        %v2783 = vadd.f32 %v2651, %v2751
        %v2784 = vadd.f32 %v2652, %v2752
        %v2785 = vadd.f32 %v2653, %v2753
        %v2786 = vadd.f32 %v2654, %v2754
        %v2787 = vadd.f32 %v2655, %v2755
        %v2788 = vadd.f32 %v2656, %v2756
        %v2789 = vadd.f32 %v2657, %v2757
        %v2790 = vadd.f32 %v2658, %v2758
        %v2791 = vadd.f32 %v2659, %v2759
        %v2792 = vadd.f32 %v2660, %v2760
        %v2793 = vadd.f32 %v2661, %v2761
        %v2794 = vadd.f32 %v2662, %v2762
        %v2795 = vadd.f32 %v2663, %v2763
        %v2796 = vadd.f32 %v2664, %v2764
        %v2797 = vadd.f32 %v2665, %v2765
        %v2798 = vadd.f32 %v2666, %v2766
        %v2799 = vadd.f32 %v2667, %v2767
        %v2800 = vadd.f32 %v2668, %v2768
        %v2801 = vadd.f32 %v2669, %v2769
        %v2802 = vadd.f32 %v2670, %v2770
        %v2803 = vadd.f32 %v2671, %v2771
        %v2804 = vadd.f32 %v2672, %v2772
        %v2805 = vadd.f32 %v2673, %v2773
        %v2806 = vadd.f32 %v2674, %v2774
        %v2807 = vadd.f32 %v2675, %v2775
        %v2808 = vadd.f32 %v2676, %v2776
        %v2809 = vadd.f32 %v2677, %v2777
        %v2810 = vadd.f32 %v2678, %v2778
        %v2811 = vadd.f32 %v2679, %v2779
        %v2812 = vlaneseq
        %v2813 = vshrl.u32 %v2812, 7
        %v2814 = vsub.s32 2, %v2813
        %v2815 = vrot.slane %v1024, %v2814
        %v2816 = vmul.f32 %v2815, %v2712
        %v2817 = vmul.f32 %v2815, %v2713
        %v2818 = vmul.f32 %v2815, %v2714
        %v2819 = vmul.f32 %v2815, %v2715
        %v2820 = vmul.f32 %v2815, %v2716
        %v2821 = vmul.f32 %v2815, %v2717
        %v2822 = vmul.f32 %v2815, %v2718
        %v2823 = vmul.f32 %v2815, %v2719
        %v2824 = vmul.f32 %v2815, %v2720
        %v2825 = vmul.f32 %v2815, %v2721
        %v2826 = vmul.f32 %v2815, %v2722
        %v2827 = vmul.f32 %v2815, %v2723
        %v2828 = vmul.f32 %v2815, %v2724
        %v2829 = vmul.f32 %v2815, %v2725
        %v2830 = vmul.f32 %v2815, %v2726
        %v2831 = vmul.f32 %v2815, %v2727
        %v2832 = vmul.f32 %v2815, %v2728
        %v2833 = vmul.f32 %v2815, %v2729
        %v2834 = vmul.f32 %v2815, %v2730
        %v2835 = vmul.f32 %v2815, %v2731
        %v2836 = vmul.f32 %v2815, %v2732
        %v2837 = vmul.f32 %v2815, %v2733
        %v2838 = vmul.f32 %v2815, %v2734
        %v2839 = vmul.f32 %v2815, %v2735
        %v2840 = vmul.f32 %v2815, %v2736
        %v2841 = vmul.f32 %v2815, %v2737
        %v2842 = vmul.f32 %v2815, %v2738
        %v2843 = vmul.f32 %v2815, %v2739
        %v2844 = vmul.f32 %v2815, %v2740
        %v2845 = vmul.f32 %v2815, %v2741
        %v2846 = vmul.f32 %v2815, %v2742
        %v2847 = vmul.f32 %v2815, %v2743
        %v2848 = vadd.f32 %v2780, %v2816
        %v2849 = vadd.f32 %v2781, %v2817
        %v2850 = vadd.f32 %v2782, %v2818
        %v2851 = vadd.f32 %v2783, %v2819
        %v2852 = vadd.f32 %v2784, %v2820
        %v2853 = vadd.f32 %v2785, %v2821
        %v2854 = vadd.f32 %v2786, %v2822
        %v2855 = vadd.f32 %v2787, %v2823
        %v2856 = vadd.f32 %v2788, %v2824
        %v2857 = vadd.f32 %v2789, %v2825
        %v2858 = vadd.f32 %v2790, %v2826
        %v2859 = vadd.f32 %v2791, %v2827
        %v2860 = vadd.f32 %v2792, %v2828
        %v2861 = vadd.f32 %v2793, %v2829
        %v2862 = vadd.f32 %v2794, %v2830
        %v2863 = vadd.f32 %v2795, %v2831
        %v2864 = vadd.f32 %v2796, %v2832
        %v2865 = vadd.f32 %v2797, %v2833
        %v2866 = vadd.f32 %v2798, %v2834
        %v2867 = vadd.f32 %v2799, %v2835
        %v2868 = vadd.f32 %v2800, %v2836
        %v2869 = vadd.f32 %v2801, %v2837
        %v2870 = vadd.f32 %v2802, %v2838
        %v2871 = vadd.f32 %v2803, %v2839
        %v2872 = vadd.f32 %v2804, %v2840
        %v2873 = vadd.f32 %v2805, %v2841
        %v2874 = vadd.f32 %v2806, %v2842
        %v2875 = vadd.f32 %v2807, %v2843
        %v2876 = vadd.f32 %v2808, %v2844
        %v2877 = vadd.f32 %v2809, %v2845
        %v2878 = vadd.f32 %v2810, %v2846
        %v2879 = vadd.f32 %v2811, %v2847
        %2880 = vadd.xlane.f32.xlu0 %v2848
        %v2881 = vpop.xlane.xlu0 %2880
        %2882 = vadd.xlane.f32.xlu0 %v2849
        %v2883 = vpop.xlane.xlu0 %2882
        %2884 = vadd.xlane.f32.xlu0 %v2850
        %v2885 = vpop.xlane.xlu0 %2884
        %2886 = vadd.xlane.f32.xlu0 %v2851
        %v2887 = vpop.xlane.xlu0 %2886
        %2888 = vadd.xlane.f32.xlu0 %v2852
        %v2889 = vpop.xlane.xlu0 %2888
        %2890 = vadd.xlane.f32.xlu0 %v2853
        %v2891 = vpop.xlane.xlu0 %2890
        %2892 = vadd.xlane.f32.xlu0 %v2854
        %v2893 = vpop.xlane.xlu0 %2892
        %2894 = vadd.xlane.f32.xlu0 %v2855
        %v2895 = vpop.xlane.xlu0 %2894
        %2896 = vadd.xlane.f32.xlu0 %v2856
        %v2897 = vpop.xlane.xlu0 %2896
        %2898 = vadd.xlane.f32.xlu0 %v2857
        %v2899 = vpop.xlane.xlu0 %2898
        %2900 = vadd.xlane.f32.xlu0 %v2858
        %v2901 = vpop.xlane.xlu0 %2900
        %2902 = vadd.xlane.f32.xlu0 %v2859
        %v2903 = vpop.xlane.xlu0 %2902
        %2904 = vadd.xlane.f32.xlu0 %v2860
        %v2905 = vpop.xlane.xlu0 %2904
        %2906 = vadd.xlane.f32.xlu0 %v2861
        %v2907 = vpop.xlane.xlu0 %2906
        %2908 = vadd.xlane.f32.xlu0 %v2862
        %v2909 = vpop.xlane.xlu0 %2908
        %2910 = vadd.xlane.f32.xlu0 %v2863
        %v2911 = vpop.xlane.xlu0 %2910
        %2912 = vadd.xlane.f32.xlu0 %v2864
        %v2913 = vpop.xlane.xlu0 %2912
        %2914 = vadd.xlane.f32.xlu0 %v2865
        %v2915 = vpop.xlane.xlu0 %2914
        %2916 = vadd.xlane.f32.xlu0 %v2866
        %v2917 = vpop.xlane.xlu0 %2916
        %2918 = vadd.xlane.f32.xlu0 %v2867
        %v2919 = vpop.xlane.xlu0 %2918
        %2920 = vadd.xlane.f32.xlu0 %v2868
        %v2921 = vpop.xlane.xlu0 %2920
        %2922 = vadd.xlane.f32.xlu0 %v2869
        %v2923 = vpop.xlane.xlu0 %2922
        %2924 = vadd.xlane.f32.xlu0 %v2870
        %v2925 = vpop.xlane.xlu0 %2924
        %2926 = vadd.xlane.f32.xlu0 %v2871
        %v2927 = vpop.xlane.xlu0 %2926
        %2928 = vadd.xlane.f32.xlu0 %v2872
        %v2929 = vpop.xlane.xlu0 %2928
        %2930 = vadd.xlane.f32.xlu0 %v2873
        %v2931 = vpop.xlane.xlu0 %2930
        %2932 = vadd.xlane.f32.xlu0 %v2874
        %v2933 = vpop.xlane.xlu0 %2932
        %2934 = vadd.xlane.f32.xlu0 %v2875
        %v2935 = vpop.xlane.xlu0 %2934
        %2936 = vadd.xlane.f32.xlu0 %v2876
        %v2937 = vpop.xlane.xlu0 %2936
        %2938 = vadd.xlane.f32.xlu0 %v2877
        %v2939 = vpop.xlane.xlu0 %2938
        %2940 = vadd.xlane.f32.xlu0 %v2878
        %v2941 = vpop.xlane.xlu0 %2940
        %2942 = vadd.xlane.f32.xlu0 %v2879
        %v2943 = vpop.xlane.xlu0 %2942
        %v2944 = vmul.f32 %v2881, 0.25
        %v2945 = vmul.f32 %v2883, 0.25
        %v2946 = vmul.f32 %v2885, 0.25
        %v2947 = vmul.f32 %v2887, 0.25
        %v2948 = vmul.f32 %v2889, 0.25
        %v2949 = vmul.f32 %v2891, 0.25
        %v2950 = vmul.f32 %v2893, 0.25
        %v2951 = vmul.f32 %v2895, 0.25
        %v2952 = vmul.f32 %v2897, 0.25
        %v2953 = vmul.f32 %v2899, 0.25
        %v2954 = vmul.f32 %v2901, 0.25
        %v2955 = vmul.f32 %v2903, 0.25
        %v2956 = vmul.f32 %v2905, 0.25
        %v2957 = vmul.f32 %v2907, 0.25
        %v2958 = vmul.f32 %v2909, 0.25
        %v2959 = vmul.f32 %v2911, 0.25
        %v2960 = vmul.f32 %v2913, 0.25
        %v2961 = vmul.f32 %v2915, 0.25
        %v2962 = vmul.f32 %v2917, 0.25
        %v2963 = vmul.f32 %v2919, 0.25
        %v2964 = vmul.f32 %v2921, 0.25
        %v2965 = vmul.f32 %v2923, 0.25
        %v2966 = vmul.f32 %v2925, 0.25
        %v2967 = vmul.f32 %v2927, 0.25
        %v2968 = vmul.f32 %v2929, 0.25
        %v2969 = vmul.f32 %v2931, 0.25
        %v2970 = vmul.f32 %v2933, 0.25
        %v2971 = vmul.f32 %v2935, 0.25
        %v2972 = vmul.f32 %v2937, 0.25
        %v2973 = vmul.f32 %v2939, 0.25
        %v2974 = vmul.f32 %v2941, 0.25
        %v2975 = vmul.f32 %v2943, 0.25
        %v2976 = vsub.f32 %v2848, %v2944
        %v2977 = vsub.f32 %v2849, %v2945
        %v2978 = vsub.f32 %v2850, %v2946
        %v2979 = vsub.f32 %v2851, %v2947
        %v2980 = vsub.f32 %v2852, %v2948
        %v2981 = vsub.f32 %v2853, %v2949
        %v2982 = vsub.f32 %v2854, %v2950
        %v2983 = vsub.f32 %v2855, %v2951
        %v2984 = vsub.f32 %v2856, %v2952
        %v2985 = vsub.f32 %v2857, %v2953
        %v2986 = vsub.f32 %v2858, %v2954
        %v2987 = vsub.f32 %v2859, %v2955
        %v2988 = vsub.f32 %v2860, %v2956
        %v2989 = vsub.f32 %v2861, %v2957
        %v2990 = vsub.f32 %v2862, %v2958
        %v2991 = vsub.f32 %v2863, %v2959
        %v2992 = vsub.f32 %v2864, %v2960
        %v2993 = vsub.f32 %v2865, %v2961
        %v2994 = vsub.f32 %v2866, %v2962
        %v2995 = vsub.f32 %v2867, %v2963
        %v2996 = vsub.f32 %v2868, %v2964
        %v2997 = vsub.f32 %v2869, %v2965
        %v2998 = vsub.f32 %v2870, %v2966
        %v2999 = vsub.f32 %v2871, %v2967
        %v3000 = vsub.f32 %v2872, %v2968
        %v3001 = vsub.f32 %v2873, %v2969
        %v3002 = vsub.f32 %v2874, %v2970
        %v3003 = vsub.f32 %v2875, %v2971
        %v3004 = vsub.f32 %v2876, %v2972
        %v3005 = vsub.f32 %v2877, %v2973
        %v3006 = vsub.f32 %v2878, %v2974
        %v3007 = vsub.f32 %v2879, %v2975
        %v3008 = vsel %vm654, 1, 0
        %vm3009 = vcmp.eq.s32.totalorder %v3008, 1
        %v3010 = vsel %vm3009, %v2976, 0.0
        %v3011 = vsel %vm3009, %v2977, 0.0
        %v3012 = vsel %vm3009, %v2978, 0.0
        %v3013 = vsel %vm3009, %v2979, 0.0
        %v3014 = vsel %vm3009, %v2980, 0.0
        %v3015 = vsel %vm3009, %v2981, 0.0
        %v3016 = vsel %vm3009, %v2982, 0.0
        %v3017 = vsel %vm3009, %v2983, 0.0
        %v3018 = vsel %vm3009, %v2984, 0.0
        %v3019 = vsel %vm3009, %v2985, 0.0
        %v3020 = vsel %vm3009, %v2986, 0.0
        %v3021 = vsel %vm3009, %v2987, 0.0
        %v3022 = vsel %vm3009, %v2988, 0.0
        %v3023 = vsel %vm3009, %v2989, 0.0
        %v3024 = vsel %vm3009, %v2990, 0.0
        %v3025 = vsel %vm3009, %v2991, 0.0
        %v3026 = vsel %vm3009, %v2992, 0.0
        %v3027 = vsel %vm3009, %v2993, 0.0
        %v3028 = vsel %vm3009, %v2994, 0.0
        %v3029 = vsel %vm3009, %v2995, 0.0
        %v3030 = vsel %vm3009, %v2996, 0.0
        %v3031 = vsel %vm3009, %v2997, 0.0
        %v3032 = vsel %vm3009, %v2998, 0.0
        %v3033 = vsel %vm3009, %v2999, 0.0
        %v3034 = vsel %vm3009, %v3000, 0.0
        %v3035 = vsel %vm3009, %v3001, 0.0
        %v3036 = vsel %vm3009, %v3002, 0.0
        %v3037 = vsel %vm3009, %v3003, 0.0
        %v3038 = vsel %vm3009, %v3004, 0.0
        %v3039 = vsel %vm3009, %v3005, 0.0
        %v3040 = vsel %vm3009, %v3006, 0.0
        %v3041 = vsel %vm3009, %v3007, 0.0
        %v3042 = vmul.f32 %v3010, %v3010
        %v3043 = vmul.f32 %v3011, %v3011
        %v3044 = vmul.f32 %v3012, %v3012
        %v3045 = vmul.f32 %v3013, %v3013
        %v3046 = vmul.f32 %v3014, %v3014
        %v3047 = vmul.f32 %v3015, %v3015
        %v3048 = vmul.f32 %v3016, %v3016
        %v3049 = vmul.f32 %v3017, %v3017
        %v3050 = vmul.f32 %v3018, %v3018
        %v3051 = vmul.f32 %v3019, %v3019
        %v3052 = vmul.f32 %v3020, %v3020
        %v3053 = vmul.f32 %v3021, %v3021
        %v3054 = vmul.f32 %v3022, %v3022
        %v3055 = vmul.f32 %v3023, %v3023
        %v3056 = vmul.f32 %v3024, %v3024
        %v3057 = vmul.f32 %v3025, %v3025
        %v3058 = vmul.f32 %v3026, %v3026
        %v3059 = vmul.f32 %v3027, %v3027
        %v3060 = vmul.f32 %v3028, %v3028
        %v3061 = vmul.f32 %v3029, %v3029
        %v3062 = vmul.f32 %v3030, %v3030
        %v3063 = vmul.f32 %v3031, %v3031
        %v3064 = vmul.f32 %v3032, %v3032
        %v3065 = vmul.f32 %v3033, %v3033
        %v3066 = vmul.f32 %v3034, %v3034
        %v3067 = vmul.f32 %v3035, %v3035
        %v3068 = vmul.f32 %v3036, %v3036
        %v3069 = vmul.f32 %v3037, %v3037
        %v3070 = vmul.f32 %v3038, %v3038
        %v3071 = vmul.f32 %v3039, %v3039
        %v3072 = vmul.f32 %v3040, %v3040
        %v3073 = vmul.f32 %v3041, %v3041
        %3074 = vadd.xlane.f32.xlu0 %v3042
        %v3075 = vpop.xlane.xlu0 %3074
        %3076 = vadd.xlane.f32.xlu0 %v3043
        %v3077 = vpop.xlane.xlu0 %3076
        %3078 = vadd.xlane.f32.xlu0 %v3044
        %v3079 = vpop.xlane.xlu0 %3078
        %3080 = vadd.xlane.f32.xlu0 %v3045
        %v3081 = vpop.xlane.xlu0 %3080
        %3082 = vadd.xlane.f32.xlu0 %v3046
        %v3083 = vpop.xlane.xlu0 %3082
        %3084 = vadd.xlane.f32.xlu0 %v3047
        %v3085 = vpop.xlane.xlu0 %3084
        %3086 = vadd.xlane.f32.xlu0 %v3048
        %v3087 = vpop.xlane.xlu0 %3086
        %3088 = vadd.xlane.f32.xlu0 %v3049
        %v3089 = vpop.xlane.xlu0 %3088
        %3090 = vadd.xlane.f32.xlu0 %v3050
        %v3091 = vpop.xlane.xlu0 %3090
        %3092 = vadd.xlane.f32.xlu0 %v3051
        %v3093 = vpop.xlane.xlu0 %3092
        %3094 = vadd.xlane.f32.xlu0 %v3052
        %v3095 = vpop.xlane.xlu0 %3094
        %3096 = vadd.xlane.f32.xlu0 %v3053
        %v3097 = vpop.xlane.xlu0 %3096
        %3098 = vadd.xlane.f32.xlu0 %v3054
        %v3099 = vpop.xlane.xlu0 %3098
        %3100 = vadd.xlane.f32.xlu0 %v3055
        %v3101 = vpop.xlane.xlu0 %3100
        %3102 = vadd.xlane.f32.xlu0 %v3056
        %v3103 = vpop.xlane.xlu0 %3102
        %3104 = vadd.xlane.f32.xlu0 %v3057
        %v3105 = vpop.xlane.xlu0 %3104
        %3106 = vadd.xlane.f32.xlu0 %v3058
        %v3107 = vpop.xlane.xlu0 %3106
        %3108 = vadd.xlane.f32.xlu0 %v3059
        %v3109 = vpop.xlane.xlu0 %3108
        %3110 = vadd.xlane.f32.xlu0 %v3060
        %v3111 = vpop.xlane.xlu0 %3110
        %3112 = vadd.xlane.f32.xlu0 %v3061
        %v3113 = vpop.xlane.xlu0 %3112
        %3114 = vadd.xlane.f32.xlu0 %v3062
        %v3115 = vpop.xlane.xlu0 %3114
        %3116 = vadd.xlane.f32.xlu0 %v3063
        %v3117 = vpop.xlane.xlu0 %3116
        %3118 = vadd.xlane.f32.xlu0 %v3064
        %v3119 = vpop.xlane.xlu0 %3118
        %3120 = vadd.xlane.f32.xlu0 %v3065
        %v3121 = vpop.xlane.xlu0 %3120
        %3122 = vadd.xlane.f32.xlu0 %v3066
        %v3123 = vpop.xlane.xlu0 %3122
        %3124 = vadd.xlane.f32.xlu0 %v3067
        %v3125 = vpop.xlane.xlu0 %3124
        %3126 = vadd.xlane.f32.xlu0 %v3068
        %v3127 = vpop.xlane.xlu0 %3126
        %3128 = vadd.xlane.f32.xlu0 %v3069
        %v3129 = vpop.xlane.xlu0 %3128
        %3130 = vadd.xlane.f32.xlu0 %v3070
        %v3131 = vpop.xlane.xlu0 %3130
        %3132 = vadd.xlane.f32.xlu0 %v3071
        %v3133 = vpop.xlane.xlu0 %3132
        %3134 = vadd.xlane.f32.xlu0 %v3072
        %v3135 = vpop.xlane.xlu0 %3134
        %3136 = vadd.xlane.f32.xlu0 %v3073
        %v3137 = vpop.xlane.xlu0 %3136
        %v3138 = vmul.f32 %v3075, 0.25
        %v3139 = vmul.f32 %v3077, 0.25
        %v3140 = vmul.f32 %v3079, 0.25
        %v3141 = vmul.f32 %v3081, 0.25
        %v3142 = vmul.f32 %v3083, 0.25
        %v3143 = vmul.f32 %v3085, 0.25
        %v3144 = vmul.f32 %v3087, 0.25
        %v3145 = vmul.f32 %v3089, 0.25
        %v3146 = vmul.f32 %v3091, 0.25
        %v3147 = vmul.f32 %v3093, 0.25
        %v3148 = vmul.f32 %v3095, 0.25
        %v3149 = vmul.f32 %v3097, 0.25
        %v3150 = vmul.f32 %v3099, 0.25
        %v3151 = vmul.f32 %v3101, 0.25
        %v3152 = vmul.f32 %v3103, 0.25
        %v3153 = vmul.f32 %v3105, 0.25
        %v3154 = vmul.f32 %v3107, 0.25
        %v3155 = vmul.f32 %v3109, 0.25
        %v3156 = vmul.f32 %v3111, 0.25
        %v3157 = vmul.f32 %v3113, 0.25
        %v3158 = vmul.f32 %v3115, 0.25
        %v3159 = vmul.f32 %v3117, 0.25
        %v3160 = vmul.f32 %v3119, 0.25
        %v3161 = vmul.f32 %v3121, 0.25
        %v3162 = vmul.f32 %v3123, 0.25
        %v3163 = vmul.f32 %v3125, 0.25
        %v3164 = vmul.f32 %v3127, 0.25
        %v3165 = vmul.f32 %v3129, 0.25
        %v3166 = vmul.f32 %v3131, 0.25
        %v3167 = vmul.f32 %v3133, 0.25
        %v3168 = vmul.f32 %v3135, 0.25
        %v3169 = vmul.f32 %v3137, 0.25
        %v3170 = vadd.f32 %v3138, 1e-06
        %v3171 = vadd.f32 %v3139, 1e-06
        %v3172 = vadd.f32 %v3140, 1e-06
        %v3173 = vadd.f32 %v3141, 1e-06
        %v3174 = vadd.f32 %v3142, 1e-06
        %v3175 = vadd.f32 %v3143, 1e-06
        %v3176 = vadd.f32 %v3144, 1e-06
        %v3177 = vadd.f32 %v3145, 1e-06
        %v3178 = vadd.f32 %v3146, 1e-06
        %v3179 = vadd.f32 %v3147, 1e-06
        %v3180 = vadd.f32 %v3148, 1e-06
        %v3181 = vadd.f32 %v3149, 1e-06
        %v3182 = vadd.f32 %v3150, 1e-06
        %v3183 = vadd.f32 %v3151, 1e-06
        %v3184 = vadd.f32 %v3152, 1e-06
        %v3185 = vadd.f32 %v3153, 1e-06
        %v3186 = vadd.f32 %v3154, 1e-06
        %v3187 = vadd.f32 %v3155, 1e-06
        %v3188 = vadd.f32 %v3156, 1e-06
        %v3189 = vadd.f32 %v3157, 1e-06
        %v3190 = vadd.f32 %v3158, 1e-06
        %v3191 = vadd.f32 %v3159, 1e-06
        %v3192 = vadd.f32 %v3160, 1e-06
        %v3193 = vadd.f32 %v3161, 1e-06
        %v3194 = vadd.f32 %v3162, 1e-06
        %v3195 = vadd.f32 %v3163, 1e-06
        %v3196 = vadd.f32 %v3164, 1e-06
        %v3197 = vadd.f32 %v3165, 1e-06
        %v3198 = vadd.f32 %v3166, 1e-06
        %v3199 = vadd.f32 %v3167, 1e-06
        %v3200 = vadd.f32 %v3168, 1e-06
        %v3201 = vadd.f32 %v3169, 1e-06
        %v3202 = vrsqrt.pop %v3170
        %v3203 = vrsqrt.pop %v3171
        %v3204 = vrsqrt.pop %v3172
        %v3205 = vrsqrt.pop %v3173
        %v3206 = vrsqrt.pop %v3174
        %v3207 = vrsqrt.pop %v3175
        %v3208 = vrsqrt.pop %v3176
        %v3209 = vrsqrt.pop %v3177
        %v3210 = vrsqrt.pop %v3178
        %v3211 = vrsqrt.pop %v3179
        %v3212 = vrsqrt.pop %v3180
        %v3213 = vrsqrt.pop %v3181
        %v3214 = vrsqrt.pop %v3182
        %v3215 = vrsqrt.pop %v3183
        %v3216 = vrsqrt.pop %v3184
        %v3217 = vrsqrt.pop %v3185
        %v3218 = vrsqrt.pop %v3186
        %v3219 = vrsqrt.pop %v3187
        %v3220 = vrsqrt.pop %v3188
        %v3221 = vrsqrt.pop %v3189
        %v3222 = vrsqrt.pop %v3190
        %v3223 = vrsqrt.pop %v3191
        %v3224 = vrsqrt.pop %v3192
        %v3225 = vrsqrt.pop %v3193
        %v3226 = vrsqrt.pop %v3194
        %v3227 = vrsqrt.pop %v3195
        %v3228 = vrsqrt.pop %v3196
        %v3229 = vrsqrt.pop %v3197
        %v3230 = vrsqrt.pop %v3198
        %v3231 = vrsqrt.pop %v3199
        %v3232 = vrsqrt.pop %v3200
        %v3233 = vrsqrt.pop %v3201
        %v3234 = vmul.f32 %v3010, %v3202
        %v3235 = vmul.f32 %v3011, %v3203
        %v3236 = vmul.f32 %v3012, %v3204
        %v3237 = vmul.f32 %v3013, %v3205
        %v3238 = vmul.f32 %v3014, %v3206
        %v3239 = vmul.f32 %v3015, %v3207
        %v3240 = vmul.f32 %v3016, %v3208
        %v3241 = vmul.f32 %v3017, %v3209
        %v3242 = vmul.f32 %v3018, %v3210
        %v3243 = vmul.f32 %v3019, %v3211
        %v3244 = vmul.f32 %v3020, %v3212
        %v3245 = vmul.f32 %v3021, %v3213
        %v3246 = vmul.f32 %v3022, %v3214
        %v3247 = vmul.f32 %v3023, %v3215
        %v3248 = vmul.f32 %v3024, %v3216
        %v3249 = vmul.f32 %v3025, %v3217
        %v3250 = vmul.f32 %v3026, %v3218
        %v3251 = vmul.f32 %v3027, %v3219
        %v3252 = vmul.f32 %v3028, %v3220
        %v3253 = vmul.f32 %v3029, %v3221
        %v3254 = vmul.f32 %v3030, %v3222
        %v3255 = vmul.f32 %v3031, %v3223
        %v3256 = vmul.f32 %v3032, %v3224
        %v3257 = vmul.f32 %v3033, %v3225
        %v3258 = vmul.f32 %v3034, %v3226
        %v3259 = vmul.f32 %v3035, %v3227
        %v3260 = vmul.f32 %v3036, %v3228
        %v3261 = vmul.f32 %v3037, %v3229
        %v3262 = vmul.f32 %v3038, %v3230
        %v3263 = vmul.f32 %v3039, %v3231
        %v3264 = vmul.f32 %v3040, %v3232
        %v3265 = vmul.f32 %v3041, %v3233
        %v3266 = vpack.c.bf16 %v3235, %v3234
        %v3267 = vpack.c.bf16 %v3237, %v3236
        %v3268 = vpack.c.bf16 %v3239, %v3238
        %v3269 = vpack.c.bf16 %v3241, %v3240
        %v3270 = vpack.c.bf16 %v3243, %v3242
        %v3271 = vpack.c.bf16 %v3245, %v3244
        %v3272 = vpack.c.bf16 %v3247, %v3246
        %v3273 = vpack.c.bf16 %v3249, %v3248
        %v3274 = vpack.c.bf16 %v3251, %v3250
        %v3275 = vpack.c.bf16 %v3253, %v3252
        %v3276 = vpack.c.bf16 %v3255, %v3254
        %v3277 = vpack.c.bf16 %v3257, %v3256
        %v3278 = vpack.c.bf16 %v3259, %v3258
        %v3279 = vpack.c.bf16 %v3261, %v3260
        %v3280 = vpack.c.bf16 %v3263, %v3262
        %v3281 = vpack.c.bf16 %v3265, %v3264
        %v3283 = vlaneseq
        %v3284 = vshrl.u32 %v3283, 7
        %v3285 = vsub.s32 0, %v3284
        %v3286 = vrot.slane %v1044, %v3285
        %v3304 = vunpack.c.l.b16 %v1028
        %v3305 = vunpack.c.l.b16 %v1029
        %v3306 = vunpack.c.l.b16 %v1030
        %v3307 = vunpack.c.l.b16 %v1031
        %v3308 = vunpack.c.l.b16 %v1032
        %v3309 = vunpack.c.l.b16 %v1033
        %v3310 = vunpack.c.l.b16 %v1034
        %v3311 = vunpack.c.l.b16 %v1035
        %v3312 = vunpack.c.l.b16 %v1036
        %v3313 = vunpack.c.l.b16 %v1037
        %v3314 = vunpack.c.l.b16 %v1038
        %v3315 = vunpack.c.l.b16 %v1039
        %v3316 = vunpack.c.l.b16 %v1040
        %v3317 = vunpack.c.l.b16 %v1041
        %v3318 = vunpack.c.l.b16 %v1042
        %v3319 = vunpack.c.l.b16 %v1043
        %v3320 = vpack.c.b16 %v3305, %v3304
        %v3321 = vpack.c.b16 %v3307, %v3306
        %v3322 = vpack.c.b16 %v3309, %v3308
        %v3323 = vpack.c.b16 %v3311, %v3310
        %v3324 = vpack.c.b16 %v3313, %v3312
        %v3325 = vpack.c.b16 %v3315, %v3314
        %v3326 = vpack.c.b16 %v3317, %v3316
        %v3327 = vpack.c.b16 %v3319, %v3318
        %3336 = vmatprep.subr.bf16.mxu0 0
        %3337 = vmatpush1.bf16.msra.mxu0 %v3320
        %3338 = vmatprep.subr.bf16.mxu0 0
        %3339 = vmatpush1.bf16.msra.mxu0 %v3321
        %3340 = vmatprep.subr.bf16.mxu0 0
        %3341 = vmatpush1.bf16.msra.mxu0 %v3322
        %3342 = vmatprep.subr.bf16.mxu0 0
        %3343 = vmatpush1.bf16.msra.mxu0 %v3323
        %3344 = vmatprep.subr.bf16.mxu0 0
        %3345 = vmatpush1.bf16.msra.mxu0 %v3324
        %3346 = vmatprep.subr.bf16.mxu0 0
        %3347 = vmatpush1.bf16.msra.mxu0 %v3325
        %3348 = vmatprep.subr.bf16.mxu0 0
        %3349 = vmatpush1.bf16.msra.mxu0 %v3326
        %3350 = vmatprep.subr.bf16.mxu0 0
        %3351 = vmatpush1.bf16.msra.mxu0 %v3327
        %3352 = vmatprep.subr.bf16.mxu0 0
        %3353 = vmatpush1.bf16.msra.mxu0 0
        %3354 = vmatprep.subr.bf16.mxu0 0
        %3355 = vmatpush1.bf16.msra.mxu0 0
        %3356 = vmatprep.subr.bf16.mxu0 0
        %3357 = vmatpush1.bf16.msra.mxu0 0
        %3358 = vmatprep.subr.bf16.mxu0 0
        %3359 = vmatpush1.bf16.msra.mxu0 0
        %3360 = vmatprep.subr.bf16.mxu0 0
        %3361 = vmatpush1.bf16.msra.mxu0 0
        %3362 = vmatprep.subr.bf16.mxu0 0
        %3363 = vmatpush1.bf16.msra.mxu0 0
        %3364 = vmatprep.subr.bf16.mxu0 0
        %3365 = vmatpush1.bf16.msra.mxu0 0
        %3366 = vmatprep.subr.bf16.mxu0 0
        %3367 = vmatpush1.bf16.msra.mxu0 0
        %3368 = vmatprep.mubr.bf16.mxu0 0
        %3369 = vmatmul.mubr.bf16.gmra.mrb[0].mxu0 %v3266
        %v3370 = vpop.f32.mrb[0].mxu0
        %v3371 = vadd.f32 %v3286, %v3370
        %v3372 = vpop.f32.mrb[0].mxu0
        %v3373 = vpop.f32.mrb[0].mxu0
        %v3374 = vadd.f32 %v3286, %v3373
        %v3375 = vpop.f32.mrb[0].mxu0
        %3376 = vmatprep.mubr.bf16.mxu0 0
        %3377 = vmatmul.mubr.bf16.gmra.mrb[0].mxu0 %v3267
        %v3378 = vpop.f32.mrb[0].mxu0
        %v3379 = vadd.f32 %v3286, %v3378
        %v3380 = vpop.f32.mrb[0].mxu0
        %v3381 = vpop.f32.mrb[0].mxu0
        %v3382 = vadd.f32 %v3286, %v3381
        %v3383 = vpop.f32.mrb[0].mxu0
        %3384 = vmatprep.mubr.bf16.mxu0 0
        %3385 = vmatmul.mubr.bf16.gmra.mrb[0].mxu0 %v3268
        %v3386 = vpop.f32.mrb[0].mxu0
        %v3387 = vadd.f32 %v3286, %v3386
        %v3388 = vpop.f32.mrb[0].mxu0
        %v3389 = vpop.f32.mrb[0].mxu0
        %v3390 = vadd.f32 %v3286, %v3389
        %v3391 = vpop.f32.mrb[0].mxu0
        %3392 = vmatprep.mubr.bf16.mxu0 0
        %3393 = vmatmul.mubr.bf16.gmra.mrb[0].mxu0 %v3269
        %v3394 = vpop.f32.mrb[0].mxu0
        %v3395 = vadd.f32 %v3286, %v3394
        %v3396 = vpop.f32.mrb[0].mxu0
        %v3397 = vpop.f32.mrb[0].mxu0
        %v3398 = vadd.f32 %v3286, %v3397
        %v3399 = vpop.f32.mrb[0].mxu0
        %3400 = vmatprep.mubr.bf16.mxu0 0
        %3401 = vmatmul.mubr.bf16.gmra.mrb[0].mxu0 %v3270
        %v3402 = vpop.f32.mrb[0].mxu0
        %v3403 = vadd.f32 %v3286, %v3402
        %v3404 = vpop.f32.mrb[0].mxu0
        %v3405 = vpop.f32.mrb[0].mxu0
        %v3406 = vadd.f32 %v3286, %v3405
        %v3407 = vpop.f32.mrb[0].mxu0
        %3408 = vmatprep.mubr.bf16.mxu0 0
        %3409 = vmatmul.mubr.bf16.gmra.mrb[0].mxu0 %v3271
        %v3410 = vpop.f32.mrb[0].mxu0
        %v3411 = vadd.f32 %v3286, %v3410
        %v3412 = vpop.f32.mrb[0].mxu0
        %v3413 = vpop.f32.mrb[0].mxu0
        %v3414 = vadd.f32 %v3286, %v3413
        %v3415 = vpop.f32.mrb[0].mxu0
        %3416 = vmatprep.mubr.bf16.mxu0 0
        %3417 = vmatmul.mubr.bf16.gmra.mrb[0].mxu0 %v3272
        %v3418 = vpop.f32.mrb[0].mxu0
        %v3419 = vadd.f32 %v3286, %v3418
        %v3420 = vpop.f32.mrb[0].mxu0
        %v3421 = vpop.f32.mrb[0].mxu0
        %v3422 = vadd.f32 %v3286, %v3421
        %v3423 = vpop.f32.mrb[0].mxu0
        %3424 = vmatprep.mubr.bf16.mxu0 0
        %3425 = vmatmul.mubr.bf16.gmra.mrb[0].mxu0 %v3273
        %v3426 = vpop.f32.mrb[0].mxu0
        %v3427 = vadd.f32 %v3286, %v3426
        %v3428 = vpop.f32.mrb[0].mxu0
        %v3429 = vpop.f32.mrb[0].mxu0
        %v3430 = vadd.f32 %v3286, %v3429
        %v3431 = vpop.f32.mrb[0].mxu0
        %3432 = vmatprep.mubr.bf16.mxu0 0
        %3433 = vmatmul.mubr.bf16.gmra.mrb[0].mxu0 %v3274
        %v3434 = vpop.f32.mrb[0].mxu0
        %v3435 = vadd.f32 %v3286, %v3434
        %v3436 = vpop.f32.mrb[0].mxu0
        %v3437 = vpop.f32.mrb[0].mxu0
        %v3438 = vadd.f32 %v3286, %v3437
        %v3439 = vpop.f32.mrb[0].mxu0
        %3440 = vmatprep.mubr.bf16.mxu0 0
        %3441 = vmatmul.mubr.bf16.gmra.mrb[0].mxu0 %v3275
        %v3442 = vpop.f32.mrb[0].mxu0
        %v3443 = vadd.f32 %v3286, %v3442
        %v3444 = vpop.f32.mrb[0].mxu0
        %v3445 = vpop.f32.mrb[0].mxu0
        %v3446 = vadd.f32 %v3286, %v3445
        %v3447 = vpop.f32.mrb[0].mxu0
        %3448 = vmatprep.mubr.bf16.mxu0 0
        %3449 = vmatmul.mubr.bf16.gmra.mrb[0].mxu0 %v3276
        %v3450 = vpop.f32.mrb[0].mxu0
        %v3451 = vadd.f32 %v3286, %v3450
        %v3452 = vpop.f32.mrb[0].mxu0
        %v3453 = vpop.f32.mrb[0].mxu0
        %v3454 = vadd.f32 %v3286, %v3453
        %v3455 = vpop.f32.mrb[0].mxu0
        %3456 = vmatprep.mubr.bf16.mxu0 0
        %3457 = vmatmul.mubr.bf16.gmra.mrb[0].mxu0 %v3277
        %v3458 = vpop.f32.mrb[0].mxu0
        %v3459 = vadd.f32 %v3286, %v3458
        %v3460 = vpop.f32.mrb[0].mxu0
        %v3461 = vpop.f32.mrb[0].mxu0
        %v3462 = vadd.f32 %v3286, %v3461
        %v3463 = vpop.f32.mrb[0].mxu0
        %3464 = vmatprep.mubr.bf16.mxu0 0
        %3465 = vmatmul.mubr.bf16.gmra.mrb[0].mxu0 %v3278
        %v3466 = vpop.f32.mrb[0].mxu0
        %v3467 = vadd.f32 %v3286, %v3466
        %v3468 = vpop.f32.mrb[0].mxu0
        %v3469 = vpop.f32.mrb[0].mxu0
        %v3470 = vadd.f32 %v3286, %v3469
        %v3471 = vpop.f32.mrb[0].mxu0
        %3472 = vmatprep.mubr.bf16.mxu0 0
        %3473 = vmatmul.mubr.bf16.gmra.mrb[0].mxu0 %v3279
        %v3474 = vpop.f32.mrb[0].mxu0
        %v3475 = vadd.f32 %v3286, %v3474
        %v3476 = vpop.f32.mrb[0].mxu0
        %v3477 = vpop.f32.mrb[0].mxu0
        %v3478 = vadd.f32 %v3286, %v3477
        %v3479 = vpop.f32.mrb[0].mxu0
        %3480 = vmatprep.mubr.bf16.mxu0 0
        %3481 = vmatmul.mubr.bf16.gmra.mrb[0].mxu0 %v3280
        %v3482 = vpop.f32.mrb[0].mxu0
        %v3483 = vadd.f32 %v3286, %v3482
        %v3484 = vpop.f32.mrb[0].mxu0
        %v3485 = vpop.f32.mrb[0].mxu0
        %v3486 = vadd.f32 %v3286, %v3485
        %v3487 = vpop.f32.mrb[0].mxu0
        %3488 = vmatprep.mubr.bf16.mxu0 0
        %3489 = vmatmul.mubr.bf16.gmra.mrb[0].mxu0 %v3281
        %v3490 = vpop.f32.mrb[0].mxu0
        %v3491 = vadd.f32 %v3286, %v3490
        %v3492 = vpop.f32.mrb[0].mxu0
        %v3493 = vpop.f32.mrb[0].mxu0
        %v3494 = vadd.f32 %v3286, %v3493
        %v3495 = vpop.f32.mrb[0].mxu0
        %3496 = vdwg.mxu0
        %v3497 = vmul.f32 %v3371, 0.5
        %v3498 = vmul.f32 %v3374, 0.5
        %v3499 = vmul.f32 %v3379, 0.5
        %v3500 = vmul.f32 %v3382, 0.5
        %v3501 = vmul.f32 %v3387, 0.5
        %v3502 = vmul.f32 %v3390, 0.5
        %v3503 = vmul.f32 %v3395, 0.5
        %v3504 = vmul.f32 %v3398, 0.5
        %v3505 = vmul.f32 %v3403, 0.5
        %v3506 = vmul.f32 %v3406, 0.5
        %v3507 = vmul.f32 %v3411, 0.5
        %v3508 = vmul.f32 %v3414, 0.5
        %v3509 = vmul.f32 %v3419, 0.5
        %v3510 = vmul.f32 %v3422, 0.5
        %v3511 = vmul.f32 %v3427, 0.5
        %v3512 = vmul.f32 %v3430, 0.5
        %v3513 = vmul.f32 %v3435, 0.5
        %v3514 = vmul.f32 %v3438, 0.5
        %v3515 = vmul.f32 %v3443, 0.5
        %v3516 = vmul.f32 %v3446, 0.5
        %v3517 = vmul.f32 %v3451, 0.5
        %v3518 = vmul.f32 %v3454, 0.5
        %v3519 = vmul.f32 %v3459, 0.5
        %v3520 = vmul.f32 %v3462, 0.5
        %v3521 = vmul.f32 %v3467, 0.5
        %v3522 = vmul.f32 %v3470, 0.5
        %v3523 = vmul.f32 %v3475, 0.5
        %v3524 = vmul.f32 %v3478, 0.5
        %v3525 = vmul.f32 %v3483, 0.5
        %v3526 = vmul.f32 %v3486, 0.5
        %v3527 = vmul.f32 %v3491, 0.5
        %v3528 = vmul.f32 %v3494, 0.5
        %v3529 = vmul.f32 %v3371, 0.70710677
        %v3530 = vmul.f32 %v3374, 0.70710677
        %v3531 = vmul.f32 %v3379, 0.70710677
        %v3532 = vmul.f32 %v3382, 0.70710677
        %v3533 = vmul.f32 %v3387, 0.70710677
        %v3534 = vmul.f32 %v3390, 0.70710677
        %v3535 = vmul.f32 %v3395, 0.70710677
        %v3536 = vmul.f32 %v3398, 0.70710677
        %v3537 = vmul.f32 %v3403, 0.70710677
        %v3538 = vmul.f32 %v3406, 0.70710677
        %v3539 = vmul.f32 %v3411, 0.70710677
        %v3540 = vmul.f32 %v3414, 0.70710677
        %v3541 = vmul.f32 %v3419, 0.70710677
        %v3542 = vmul.f32 %v3422, 0.70710677
        %v3543 = vmul.f32 %v3427, 0.70710677
        %v3544 = vmul.f32 %v3430, 0.70710677
        %v3545 = vmul.f32 %v3435, 0.70710677
        %v3546 = vmul.f32 %v3438, 0.70710677
        %v3547 = vmul.f32 %v3443, 0.70710677
        %v3548 = vmul.f32 %v3446, 0.70710677
        %v3549 = vmul.f32 %v3451, 0.70710677
        %v3550 = vmul.f32 %v3454, 0.70710677
        %v3551 = vmul.f32 %v3459, 0.70710677
        %v3552 = vmul.f32 %v3462, 0.70710677
        %v3553 = vmul.f32 %v3467, 0.70710677
        %v3554 = vmul.f32 %v3470, 0.70710677
        %v3555 = vmul.f32 %v3475, 0.70710677
        %v3556 = vmul.f32 %v3478, 0.70710677
        %v3557 = vmul.f32 %v3483, 0.70710677
        %v3558 = vmul.f32 %v3486, 0.70710677
        %v3559 = vmul.f32 %v3491, 0.70710677
        %v3560 = vmul.f32 %v3494, 0.70710677
        %v3561 = vand.u32 2147483647, %v3529
        %v3562 = vand.u32 2147483647, %v3530
        %v3563 = vand.u32 2147483647, %v3531
        %v3564 = vand.u32 2147483647, %v3532
        %v3565 = vand.u32 2147483647, %v3533
        %v3566 = vand.u32 2147483647, %v3534
        %v3567 = vand.u32 2147483647, %v3535
        %v3568 = vand.u32 2147483647, %v3536
        %v3569 = vand.u32 2147483647, %v3537
        %v3570 = vand.u32 2147483647, %v3538
        %v3571 = vand.u32 2147483647, %v3539
        %v3572 = vand.u32 2147483647, %v3540
        %v3573 = vand.u32 2147483647, %v3541
        %v3574 = vand.u32 2147483647, %v3542
        %v3575 = vand.u32 2147483647, %v3543
        %v3576 = vand.u32 2147483647, %v3544
        %v3577 = vand.u32 2147483647, %v3545
        %v3578 = vand.u32 2147483647, %v3546
        %v3579 = vand.u32 2147483647, %v3547
        %v3580 = vand.u32 2147483647, %v3548
        %v3581 = vand.u32 2147483647, %v3549
        %v3582 = vand.u32 2147483647, %v3550
        %v3583 = vand.u32 2147483647, %v3551
        %v3584 = vand.u32 2147483647, %v3552
        %v3585 = vand.u32 2147483647, %v3553
        %v3586 = vand.u32 2147483647, %v3554
        %v3587 = vand.u32 2147483647, %v3555
        %v3588 = vand.u32 2147483647, %v3556
        %v3589 = vand.u32 2147483647, %v3557
        %v3590 = vand.u32 2147483647, %v3558
        %v3591 = vand.u32 2147483647, %v3559
        %v3592 = vand.u32 2147483647, %v3560
        %v3593 = vmul.f32 %v3561, 0.3275911
        %v3594 = vmul.f32 %v3562, 0.3275911
        %v3595 = vmul.f32 %v3563, 0.3275911
        %v3596 = vmul.f32 %v3564, 0.3275911
        %v3597 = vmul.f32 %v3565, 0.3275911
        %v3598 = vmul.f32 %v3566, 0.3275911
        %v3599 = vmul.f32 %v3567, 0.3275911
        %v3600 = vmul.f32 %v3568, 0.3275911
        %v3601 = vmul.f32 %v3569, 0.3275911
        %v3602 = vmul.f32 %v3570, 0.3275911
        %v3603 = vmul.f32 %v3571, 0.3275911
        %v3604 = vmul.f32 %v3572, 0.3275911
        %v3605 = vmul.f32 %v3573, 0.3275911
        %v3606 = vmul.f32 %v3574, 0.3275911
        %v3607 = vmul.f32 %v3575, 0.3275911
        %v3608 = vmul.f32 %v3576, 0.3275911
        %v3609 = vmul.f32 %v3577, 0.3275911
        %v3610 = vmul.f32 %v3578, 0.3275911
        %v3611 = vmul.f32 %v3579, 0.3275911
        %v3612 = vmul.f32 %v3580, 0.3275911
        %v3613 = vmul.f32 %v3581, 0.3275911
        %v3614 = vmul.f32 %v3582, 0.3275911
        %v3615 = vmul.f32 %v3583, 0.3275911
        %v3616 = vmul.f32 %v3584, 0.3275911
        %v3617 = vmul.f32 %v3585, 0.3275911
        %v3618 = vmul.f32 %v3586, 0.3275911
        %v3619 = vmul.f32 %v3587, 0.3275911
        %v3620 = vmul.f32 %v3588, 0.3275911
        %v3621 = vmul.f32 %v3589, 0.3275911
        %v3622 = vmul.f32 %v3590, 0.3275911
        %v3623 = vmul.f32 %v3591, 0.3275911
        %v3624 = vmul.f32 %v3592, 0.3275911
        %v3625 = vadd.f32 %v3593, 1.0
        %v3626 = vadd.f32 %v3594, 1.0
        %v3627 = vadd.f32 %v3595, 1.0
        %v3628 = vadd.f32 %v3596, 1.0
        %v3629 = vadd.f32 %v3597, 1.0
        %v3630 = vadd.f32 %v3598, 1.0
        %v3631 = vadd.f32 %v3599, 1.0
        %v3632 = vadd.f32 %v3600, 1.0
        %v3633 = vadd.f32 %v3601, 1.0
        %v3634 = vadd.f32 %v3602, 1.0
        %v3635 = vadd.f32 %v3603, 1.0
        %v3636 = vadd.f32 %v3604, 1.0
        %v3637 = vadd.f32 %v3605, 1.0
        %v3638 = vadd.f32 %v3606, 1.0
        %v3639 = vadd.f32 %v3607, 1.0
        %v3640 = vadd.f32 %v3608, 1.0
        %v3641 = vadd.f32 %v3609, 1.0
        %v3642 = vadd.f32 %v3610, 1.0
        %v3643 = vadd.f32 %v3611, 1.0
        %v3644 = vadd.f32 %v3612, 1.0
        %v3645 = vadd.f32 %v3613, 1.0
        %v3646 = vadd.f32 %v3614, 1.0
        %v3647 = vadd.f32 %v3615, 1.0
        %v3648 = vadd.f32 %v3616, 1.0
        %v3649 = vadd.f32 %v3617, 1.0
        %v3650 = vadd.f32 %v3618, 1.0
        %v3651 = vadd.f32 %v3619, 1.0
        %v3652 = vadd.f32 %v3620, 1.0
        %v3653 = vadd.f32 %v3621, 1.0
        %v3654 = vadd.f32 %v3622, 1.0
        %v3655 = vadd.f32 %v3623, 1.0
        %v3656 = vadd.f32 %v3624, 1.0
        %v3657 = vrcp.pop %v3625
        %v3658 = vmul.f32 1.0, %v3657
        %v3659 = vrcp.pop %v3626
        %v3660 = vmul.f32 1.0, %v3659
        %v3661 = vrcp.pop %v3627
        %v3662 = vmul.f32 1.0, %v3661
        %v3663 = vrcp.pop %v3628
        %v3664 = vmul.f32 1.0, %v3663
        %v3665 = vrcp.pop %v3629
        %v3666 = vmul.f32 1.0, %v3665
        %v3667 = vrcp.pop %v3630
        %v3668 = vmul.f32 1.0, %v3667
        %v3669 = vrcp.pop %v3631
        %v3670 = vmul.f32 1.0, %v3669
        %v3671 = vrcp.pop %v3632
        %v3672 = vmul.f32 1.0, %v3671
        %v3673 = vrcp.pop %v3633
        %v3674 = vmul.f32 1.0, %v3673
        %v3675 = vrcp.pop %v3634
        %v3676 = vmul.f32 1.0, %v3675
        %v3677 = vrcp.pop %v3635
        %v3678 = vmul.f32 1.0, %v3677
        %v3679 = vrcp.pop %v3636
        %v3680 = vmul.f32 1.0, %v3679
        %v3681 = vrcp.pop %v3637
        %v3682 = vmul.f32 1.0, %v3681
        %v3683 = vrcp.pop %v3638
        %v3684 = vmul.f32 1.0, %v3683
        %v3685 = vrcp.pop %v3639
        %v3686 = vmul.f32 1.0, %v3685
        %v3687 = vrcp.pop %v3640
        %v3688 = vmul.f32 1.0, %v3687
        %v3689 = vrcp.pop %v3641
        %v3690 = vmul.f32 1.0, %v3689
        %v3691 = vrcp.pop %v3642
        %v3692 = vmul.f32 1.0, %v3691
        %v3693 = vrcp.pop %v3643
        %v3694 = vmul.f32 1.0, %v3693
        %v3695 = vrcp.pop %v3644
        %v3696 = vmul.f32 1.0, %v3695
        %v3697 = vrcp.pop %v3645
        %v3698 = vmul.f32 1.0, %v3697
        %v3699 = vrcp.pop %v3646
        %v3700 = vmul.f32 1.0, %v3699
        %v3701 = vrcp.pop %v3647
        %v3702 = vmul.f32 1.0, %v3701
        %v3703 = vrcp.pop %v3648
        %v3704 = vmul.f32 1.0, %v3703
        %v3705 = vrcp.pop %v3649
        %v3706 = vmul.f32 1.0, %v3705
        %v3707 = vrcp.pop %v3650
        %v3708 = vmul.f32 1.0, %v3707
        %v3709 = vrcp.pop %v3651
        %v3710 = vmul.f32 1.0, %v3709
        %v3711 = vrcp.pop %v3652
        %v3712 = vmul.f32 1.0, %v3711
        %v3713 = vrcp.pop %v3653
        %v3714 = vmul.f32 1.0, %v3713
        %v3715 = vrcp.pop %v3654
        %v3716 = vmul.f32 1.0, %v3715
        %v3717 = vrcp.pop %v3655
        %v3718 = vmul.f32 1.0, %v3717
        %v3719 = vrcp.pop %v3656
        %v3720 = vmul.f32 1.0, %v3719
        %v3721 = vmul.f32 %v3658, 1.0614054
        %v3722 = vmul.f32 %v3660, 1.0614054
        %v3723 = vmul.f32 %v3662, 1.0614054
        %v3724 = vmul.f32 %v3664, 1.0614054
        %v3725 = vmul.f32 %v3666, 1.0614054
        %v3726 = vmul.f32 %v3668, 1.0614054
        %v3727 = vmul.f32 %v3670, 1.0614054
        %v3728 = vmul.f32 %v3672, 1.0614054
        %v3729 = vmul.f32 %v3674, 1.0614054
        %v3730 = vmul.f32 %v3676, 1.0614054
        %v3731 = vmul.f32 %v3678, 1.0614054
        %v3732 = vmul.f32 %v3680, 1.0614054
        %v3733 = vmul.f32 %v3682, 1.0614054
        %v3734 = vmul.f32 %v3684, 1.0614054
        %v3735 = vmul.f32 %v3686, 1.0614054
        %v3736 = vmul.f32 %v3688, 1.0614054
        %v3737 = vmul.f32 %v3690, 1.0614054
        %v3738 = vmul.f32 %v3692, 1.0614054
        %v3739 = vmul.f32 %v3694, 1.0614054
        %v3740 = vmul.f32 %v3696, 1.0614054
        %v3741 = vmul.f32 %v3698, 1.0614054
        %v3742 = vmul.f32 %v3700, 1.0614054
        %v3743 = vmul.f32 %v3702, 1.0614054
        %v3744 = vmul.f32 %v3704, 1.0614054
        %v3745 = vmul.f32 %v3706, 1.0614054
        %v3746 = vmul.f32 %v3708, 1.0614054
        %v3747 = vmul.f32 %v3710, 1.0614054
        %v3748 = vmul.f32 %v3712, 1.0614054
        %v3749 = vmul.f32 %v3714, 1.0614054
        %v3750 = vmul.f32 %v3716, 1.0614054
        %v3751 = vmul.f32 %v3718, 1.0614054
        %v3752 = vmul.f32 %v3720, 1.0614054
        %v3753 = vadd.f32 %v3721, -1.4531521
        %v3754 = vadd.f32 %v3722, -1.4531521
        %v3755 = vadd.f32 %v3723, -1.4531521
        %v3756 = vadd.f32 %v3724, -1.4531521
        %v3757 = vadd.f32 %v3725, -1.4531521
        %v3758 = vadd.f32 %v3726, -1.4531521
        %v3759 = vadd.f32 %v3727, -1.4531521
        %v3760 = vadd.f32 %v3728, -1.4531521
        %v3761 = vadd.f32 %v3729, -1.4531521
        %v3762 = vadd.f32 %v3730, -1.4531521
        %v3763 = vadd.f32 %v3731, -1.4531521
        %v3764 = vadd.f32 %v3732, -1.4531521
        %v3765 = vadd.f32 %v3733, -1.4531521
        %v3766 = vadd.f32 %v3734, -1.4531521
        %v3767 = vadd.f32 %v3735, -1.4531521
        %v3768 = vadd.f32 %v3736, -1.4531521
        %v3769 = vadd.f32 %v3737, -1.4531521
        %v3770 = vadd.f32 %v3738, -1.4531521
        %v3771 = vadd.f32 %v3739, -1.4531521
        %v3772 = vadd.f32 %v3740, -1.4531521
        %v3773 = vadd.f32 %v3741, -1.4531521
        %v3774 = vadd.f32 %v3742, -1.4531521
        %v3775 = vadd.f32 %v3743, -1.4531521
        %v3776 = vadd.f32 %v3744, -1.4531521
        %v3777 = vadd.f32 %v3745, -1.4531521
        %v3778 = vadd.f32 %v3746, -1.4531521
        %v3779 = vadd.f32 %v3747, -1.4531521
        %v3780 = vadd.f32 %v3748, -1.4531521
        %v3781 = vadd.f32 %v3749, -1.4531521
        %v3782 = vadd.f32 %v3750, -1.4531521
        %v3783 = vadd.f32 %v3751, -1.4531521
        %v3784 = vadd.f32 %v3752, -1.4531521
        %v3785 = vmul.f32 %v3753, %v3658
        %v3786 = vmul.f32 %v3754, %v3660
        %v3787 = vmul.f32 %v3755, %v3662
        %v3788 = vmul.f32 %v3756, %v3664
        %v3789 = vmul.f32 %v3757, %v3666
        %v3790 = vmul.f32 %v3758, %v3668
        %v3791 = vmul.f32 %v3759, %v3670
        %v3792 = vmul.f32 %v3760, %v3672
        %v3793 = vmul.f32 %v3761, %v3674
        %v3794 = vmul.f32 %v3762, %v3676
        %v3795 = vmul.f32 %v3763, %v3678
        %v3796 = vmul.f32 %v3764, %v3680
        %v3797 = vmul.f32 %v3765, %v3682
        %v3798 = vmul.f32 %v3766, %v3684
        %v3799 = vmul.f32 %v3767, %v3686
        %v3800 = vmul.f32 %v3768, %v3688
        %v3801 = vmul.f32 %v3769, %v3690
        %v3802 = vmul.f32 %v3770, %v3692
        %v3803 = vmul.f32 %v3771, %v3694
        %v3804 = vmul.f32 %v3772, %v3696
        %v3805 = vmul.f32 %v3773, %v3698
        %v3806 = vmul.f32 %v3774, %v3700
        %v3807 = vmul.f32 %v3775, %v3702
        %v3808 = vmul.f32 %v3776, %v3704
        %v3809 = vmul.f32 %v3777, %v3706
        %v3810 = vmul.f32 %v3778, %v3708
        %v3811 = vmul.f32 %v3779, %v3710
        %v3812 = vmul.f32 %v3780, %v3712
        %v3813 = vmul.f32 %v3781, %v3714
        %v3814 = vmul.f32 %v3782, %v3716
        %v3815 = vmul.f32 %v3783, %v3718
        %v3816 = vmul.f32 %v3784, %v3720
        %v3817 = vadd.f32 %v3785, 1.4214138
        %v3818 = vadd.f32 %v3786, 1.4214138
        %v3819 = vadd.f32 %v3787, 1.4214138
        %v3820 = vadd.f32 %v3788, 1.4214138
        %v3821 = vadd.f32 %v3789, 1.4214138
        %v3822 = vadd.f32 %v3790, 1.4214138
        %v3823 = vadd.f32 %v3791, 1.4214138
        %v3824 = vadd.f32 %v3792, 1.4214138
        %v3825 = vadd.f32 %v3793, 1.4214138
        %v3826 = vadd.f32 %v3794, 1.4214138
        %v3827 = vadd.f32 %v3795, 1.4214138
        %v3828 = vadd.f32 %v3796, 1.4214138
        %v3829 = vadd.f32 %v3797, 1.4214138
        %v3830 = vadd.f32 %v3798, 1.4214138
        %v3831 = vadd.f32 %v3799, 1.4214138
        %v3832 = vadd.f32 %v3800, 1.4214138
        %v3833 = vadd.f32 %v3801, 1.4214138
        %v3834 = vadd.f32 %v3802, 1.4214138
        %v3835 = vadd.f32 %v3803, 1.4214138
        %v3836 = vadd.f32 %v3804, 1.4214138
        %v3837 = vadd.f32 %v3805, 1.4214138
        %v3838 = vadd.f32 %v3806, 1.4214138
        %v3839 = vadd.f32 %v3807, 1.4214138
        %v3840 = vadd.f32 %v3808, 1.4214138
        %v3841 = vadd.f32 %v3809, 1.4214138
        %v3842 = vadd.f32 %v3810, 1.4214138
        %v3843 = vadd.f32 %v3811, 1.4214138
        %v3844 = vadd.f32 %v3812, 1.4214138
        %v3845 = vadd.f32 %v3813, 1.4214138
        %v3846 = vadd.f32 %v3814, 1.4214138
        %v3847 = vadd.f32 %v3815, 1.4214138
        %v3848 = vadd.f32 %v3816, 1.4214138
        %v3849 = vmul.f32 %v3817, %v3658
        %v3850 = vmul.f32 %v3818, %v3660
        %v3851 = vmul.f32 %v3819, %v3662
        %v3852 = vmul.f32 %v3820, %v3664
        %v3853 = vmul.f32 %v3821, %v3666
        %v3854 = vmul.f32 %v3822, %v3668
        %v3855 = vmul.f32 %v3823, %v3670
        %v3856 = vmul.f32 %v3824, %v3672
        %v3857 = vmul.f32 %v3825, %v3674
        %v3858 = vmul.f32 %v3826, %v3676
        %v3859 = vmul.f32 %v3827, %v3678
        %v3860 = vmul.f32 %v3828, %v3680
        %v3861 = vmul.f32 %v3829, %v3682
        %v3862 = vmul.f32 %v3830, %v3684
        %v3863 = vmul.f32 %v3831, %v3686
        %v3864 = vmul.f32 %v3832, %v3688
        %v3865 = vmul.f32 %v3833, %v3690
        %v3866 = vmul.f32 %v3834, %v3692
        %v3867 = vmul.f32 %v3835, %v3694
        %v3868 = vmul.f32 %v3836, %v3696
        %v3869 = vmul.f32 %v3837, %v3698
        %v3870 = vmul.f32 %v3838, %v3700
        %v3871 = vmul.f32 %v3839, %v3702
        %v3872 = vmul.f32 %v3840, %v3704
        %v3873 = vmul.f32 %v3841, %v3706
        %v3874 = vmul.f32 %v3842, %v3708
        %v3875 = vmul.f32 %v3843, %v3710
        %v3876 = vmul.f32 %v3844, %v3712
        %v3877 = vmul.f32 %v3845, %v3714
        %v3878 = vmul.f32 %v3846, %v3716
        %v3879 = vmul.f32 %v3847, %v3718
        %v3880 = vmul.f32 %v3848, %v3720
        %v3881 = vadd.f32 %v3849, -0.28449672
        %v3882 = vadd.f32 %v3850, -0.28449672
        %v3883 = vadd.f32 %v3851, -0.28449672
        %v3884 = vadd.f32 %v3852, -0.28449672
        %v3885 = vadd.f32 %v3853, -0.28449672
        %v3886 = vadd.f32 %v3854, -0.28449672
        %v3887 = vadd.f32 %v3855, -0.28449672
        %v3888 = vadd.f32 %v3856, -0.28449672
        %v3889 = vadd.f32 %v3857, -0.28449672
        %v3890 = vadd.f32 %v3858, -0.28449672
        %v3891 = vadd.f32 %v3859, -0.28449672
        %v3892 = vadd.f32 %v3860, -0.28449672
        %v3893 = vadd.f32 %v3861, -0.28449672
        %v3894 = vadd.f32 %v3862, -0.28449672
        %v3895 = vadd.f32 %v3863, -0.28449672
        %v3896 = vadd.f32 %v3864, -0.28449672
        %v3897 = vadd.f32 %v3865, -0.28449672
        %v3898 = vadd.f32 %v3866, -0.28449672
        %v3899 = vadd.f32 %v3867, -0.28449672
        %v3900 = vadd.f32 %v3868, -0.28449672
        %v3901 = vadd.f32 %v3869, -0.28449672
        %v3902 = vadd.f32 %v3870, -0.28449672
        %v3903 = vadd.f32 %v3871, -0.28449672
        %v3904 = vadd.f32 %v3872, -0.28449672
        %v3905 = vadd.f32 %v3873, -0.28449672
        %v3906 = vadd.f32 %v3874, -0.28449672
        %v3907 = vadd.f32 %v3875, -0.28449672
        %v3908 = vadd.f32 %v3876, -0.28449672
        %v3909 = vadd.f32 %v3877, -0.28449672
        %v3910 = vadd.f32 %v3878, -0.28449672
        %v3911 = vadd.f32 %v3879, -0.28449672
        %v3912 = vadd.f32 %v3880, -0.28449672
        %v3913 = vmul.f32 %v3881, %v3658
        %v3914 = vmul.f32 %v3882, %v3660
        %v3915 = vmul.f32 %v3883, %v3662
        %v3916 = vmul.f32 %v3884, %v3664
        %v3917 = vmul.f32 %v3885, %v3666
        %v3918 = vmul.f32 %v3886, %v3668
        %v3919 = vmul.f32 %v3887, %v3670
        %v3920 = vmul.f32 %v3888, %v3672
        %v3921 = vmul.f32 %v3889, %v3674
        %v3922 = vmul.f32 %v3890, %v3676
        %v3923 = vmul.f32 %v3891, %v3678
        %v3924 = vmul.f32 %v3892, %v3680
        %v3925 = vmul.f32 %v3893, %v3682
        %v3926 = vmul.f32 %v3894, %v3684
        %v3927 = vmul.f32 %v3895, %v3686
        %v3928 = vmul.f32 %v3896, %v3688
        %v3929 = vmul.f32 %v3897, %v3690
        %v3930 = vmul.f32 %v3898, %v3692
        %v3931 = vmul.f32 %v3899, %v3694
        %v3932 = vmul.f32 %v3900, %v3696
        %v3933 = vmul.f32 %v3901, %v3698
        %v3934 = vmul.f32 %v3902, %v3700
        %v3935 = vmul.f32 %v3903, %v3702
        %v3936 = vmul.f32 %v3904, %v3704
        %v3937 = vmul.f32 %v3905, %v3706
        %v3938 = vmul.f32 %v3906, %v3708
        %v3939 = vmul.f32 %v3907, %v3710
        %v3940 = vmul.f32 %v3908, %v3712
        %v3941 = vmul.f32 %v3909, %v3714
        %v3942 = vmul.f32 %v3910, %v3716
        %v3943 = vmul.f32 %v3911, %v3718
        %v3944 = vmul.f32 %v3912, %v3720
        %v3945 = vadd.f32 %v3913, 0.2548296
        %v3946 = vadd.f32 %v3914, 0.2548296
        %v3947 = vadd.f32 %v3915, 0.2548296
        %v3948 = vadd.f32 %v3916, 0.2548296
        %v3949 = vadd.f32 %v3917, 0.2548296
        %v3950 = vadd.f32 %v3918, 0.2548296
        %v3951 = vadd.f32 %v3919, 0.2548296
        %v3952 = vadd.f32 %v3920, 0.2548296
        %v3953 = vadd.f32 %v3921, 0.2548296
        %v3954 = vadd.f32 %v3922, 0.2548296
        %v3955 = vadd.f32 %v3923, 0.2548296
        %v3956 = vadd.f32 %v3924, 0.2548296
        %v3957 = vadd.f32 %v3925, 0.2548296
        %v3958 = vadd.f32 %v3926, 0.2548296
        %v3959 = vadd.f32 %v3927, 0.2548296
        %v3960 = vadd.f32 %v3928, 0.2548296
        %v3961 = vadd.f32 %v3929, 0.2548296
        %v3962 = vadd.f32 %v3930, 0.2548296
        %v3963 = vadd.f32 %v3931, 0.2548296
        %v3964 = vadd.f32 %v3932, 0.2548296
        %v3965 = vadd.f32 %v3933, 0.2548296
        %v3966 = vadd.f32 %v3934, 0.2548296
        %v3967 = vadd.f32 %v3935, 0.2548296
        %v3968 = vadd.f32 %v3936, 0.2548296
        %v3969 = vadd.f32 %v3937, 0.2548296
        %v3970 = vadd.f32 %v3938, 0.2548296
        %v3971 = vadd.f32 %v3939, 0.2548296
        %v3972 = vadd.f32 %v3940, 0.2548296
        %v3973 = vadd.f32 %v3941, 0.2548296
        %v3974 = vadd.f32 %v3942, 0.2548296
        %v3975 = vadd.f32 %v3943, 0.2548296
        %v3976 = vadd.f32 %v3944, 0.2548296
        %v3977 = vmul.f32 %v3945, %v3658
        %v3978 = vmul.f32 %v3946, %v3660
        %v3979 = vmul.f32 %v3947, %v3662
        %v3980 = vmul.f32 %v3948, %v3664
        %v3981 = vmul.f32 %v3949, %v3666
        %v3982 = vmul.f32 %v3950, %v3668
        %v3983 = vmul.f32 %v3951, %v3670
        %v3984 = vmul.f32 %v3952, %v3672
        %v3985 = vmul.f32 %v3953, %v3674
        %v3986 = vmul.f32 %v3954, %v3676
        %v3987 = vmul.f32 %v3955, %v3678
        %v3988 = vmul.f32 %v3956, %v3680
        %v3989 = vmul.f32 %v3957, %v3682
        %v3990 = vmul.f32 %v3958, %v3684
        %v3991 = vmul.f32 %v3959, %v3686
        %v3992 = vmul.f32 %v3960, %v3688
        %v3993 = vmul.f32 %v3961, %v3690
        %v3994 = vmul.f32 %v3962, %v3692
        %v3995 = vmul.f32 %v3963, %v3694
        %v3996 = vmul.f32 %v3964, %v3696
        %v3997 = vmul.f32 %v3965, %v3698
        %v3998 = vmul.f32 %v3966, %v3700
        %v3999 = vmul.f32 %v3967, %v3702
        %v4000 = vmul.f32 %v3968, %v3704
        %v4001 = vmul.f32 %v3969, %v3706
        %v4002 = vmul.f32 %v3970, %v3708
        %v4003 = vmul.f32 %v3971, %v3710
        %v4004 = vmul.f32 %v3972, %v3712
        %v4005 = vmul.f32 %v3973, %v3714
        %v4006 = vmul.f32 %v3974, %v3716
        %v4007 = vmul.f32 %v3975, %v3718
        %v4008 = vmul.f32 %v3976, %v3720
        %v4009 = vsub.f32 0.0, %v3561
        %v4010 = vsub.f32 0.0, %v3562
        %v4011 = vsub.f32 0.0, %v3563
        %v4012 = vsub.f32 0.0, %v3564
        %v4013 = vsub.f32 0.0, %v3565
        %v4014 = vsub.f32 0.0, %v3566
        %v4015 = vsub.f32 0.0, %v3567
        %v4016 = vsub.f32 0.0, %v3568
        %v4017 = vsub.f32 0.0, %v3569
        %v4018 = vsub.f32 0.0, %v3570
        %v4019 = vsub.f32 0.0, %v3571
        %v4020 = vsub.f32 0.0, %v3572
        %v4021 = vsub.f32 0.0, %v3573
        %v4022 = vsub.f32 0.0, %v3574
        %v4023 = vsub.f32 0.0, %v3575
        %v4024 = vsub.f32 0.0, %v3576
        %v4025 = vsub.f32 0.0, %v3577
        %v4026 = vsub.f32 0.0, %v3578
        %v4027 = vsub.f32 0.0, %v3579
        %v4028 = vsub.f32 0.0, %v3580
        %v4029 = vsub.f32 0.0, %v3581
        %v4030 = vsub.f32 0.0, %v3582
        %v4031 = vsub.f32 0.0, %v3583
        %v4032 = vsub.f32 0.0, %v3584
        %v4033 = vsub.f32 0.0, %v3585
        %v4034 = vsub.f32 0.0, %v3586
        %v4035 = vsub.f32 0.0, %v3587
        %v4036 = vsub.f32 0.0, %v3588
        %v4037 = vsub.f32 0.0, %v3589
        %v4038 = vsub.f32 0.0, %v3590
        %v4039 = vsub.f32 0.0, %v3591
        %v4040 = vsub.f32 0.0, %v3592
        %v4041 = vmul.f32 %v4009, %v3561
        %v4042 = vmul.f32 %v4010, %v3562
        %v4043 = vmul.f32 %v4011, %v3563
        %v4044 = vmul.f32 %v4012, %v3564
        %v4045 = vmul.f32 %v4013, %v3565
        %v4046 = vmul.f32 %v4014, %v3566
        %v4047 = vmul.f32 %v4015, %v3567
        %v4048 = vmul.f32 %v4016, %v3568
        %v4049 = vmul.f32 %v4017, %v3569
        %v4050 = vmul.f32 %v4018, %v3570
        %v4051 = vmul.f32 %v4019, %v3571
        %v4052 = vmul.f32 %v4020, %v3572
        %v4053 = vmul.f32 %v4021, %v3573
        %v4054 = vmul.f32 %v4022, %v3574
        %v4055 = vmul.f32 %v4023, %v3575
        %v4056 = vmul.f32 %v4024, %v3576
        %v4057 = vmul.f32 %v4025, %v3577
        %v4058 = vmul.f32 %v4026, %v3578
        %v4059 = vmul.f32 %v4027, %v3579
        %v4060 = vmul.f32 %v4028, %v3580
        %v4061 = vmul.f32 %v4029, %v3581
        %v4062 = vmul.f32 %v4030, %v3582
        %v4063 = vmul.f32 %v4031, %v3583
        %v4064 = vmul.f32 %v4032, %v3584
        %v4065 = vmul.f32 %v4033, %v3585
        %v4066 = vmul.f32 %v4034, %v3586
        %v4067 = vmul.f32 %v4035, %v3587
        %v4068 = vmul.f32 %v4036, %v3588
        %v4069 = vmul.f32 %v4037, %v3589
        %v4070 = vmul.f32 %v4038, %v3590
        %v4071 = vmul.f32 %v4039, %v3591
        %v4072 = vmul.f32 %v4040, %v3592
        %v4073 = vmul.f32 %v4041, 1.442695
        %v4074 = vpow.pop %v4073
        %v4075 = vmul.f32 %v4042, 1.442695
        %v4076 = vpow.pop %v4075
        %v4077 = vmul.f32 %v4043, 1.442695
        %v4078 = vpow.pop %v4077
        %v4079 = vmul.f32 %v4044, 1.442695
        %v4080 = vpow.pop %v4079
        %v4081 = vmul.f32 %v4045, 1.442695
        %v4082 = vpow.pop %v4081
        %v4083 = vmul.f32 %v4046, 1.442695
        %v4084 = vpow.pop %v4083
        %v4085 = vmul.f32 %v4047, 1.442695
        %v4086 = vpow.pop %v4085
        %v4087 = vmul.f32 %v4048, 1.442695
        %v4088 = vpow.pop %v4087
        %v4089 = vmul.f32 %v4049, 1.442695
        %v4090 = vpow.pop %v4089
        %v4091 = vmul.f32 %v4050, 1.442695
        %v4092 = vpow.pop %v4091
        %v4093 = vmul.f32 %v4051, 1.442695
        %v4094 = vpow.pop %v4093
        %v4095 = vmul.f32 %v4052, 1.442695
        %v4096 = vpow.pop %v4095
        %v4097 = vmul.f32 %v4053, 1.442695
        %v4098 = vpow.pop %v4097
        %v4099 = vmul.f32 %v4054, 1.442695
        %v4100 = vpow.pop %v4099
        %v4101 = vmul.f32 %v4055, 1.442695
        %v4102 = vpow.pop %v4101
        %v4103 = vmul.f32 %v4056, 1.442695
        %v4104 = vpow.pop %v4103
        %v4105 = vmul.f32 %v4057, 1.442695
        %v4106 = vpow.pop %v4105
        %v4107 = vmul.f32 %v4058, 1.442695
        %v4108 = vpow.pop %v4107
        %v4109 = vmul.f32 %v4059, 1.442695
        %v4110 = vpow.pop %v4109
        %v4111 = vmul.f32 %v4060, 1.442695
        %v4112 = vpow.pop %v4111
        %v4113 = vmul.f32 %v4061, 1.442695
        %v4114 = vpow.pop %v4113
        %v4115 = vmul.f32 %v4062, 1.442695
        %v4116 = vpow.pop %v4115
        %v4117 = vmul.f32 %v4063, 1.442695
        %v4118 = vpow.pop %v4117
        %v4119 = vmul.f32 %v4064, 1.442695
        %v4120 = vpow.pop %v4119
        %v4121 = vmul.f32 %v4065, 1.442695
        %v4122 = vpow.pop %v4121
        %v4123 = vmul.f32 %v4066, 1.442695
        %v4124 = vpow.pop %v4123
        %v4125 = vmul.f32 %v4067, 1.442695
        %v4126 = vpow.pop %v4125
        %v4127 = vmul.f32 %v4068, 1.442695
        %v4128 = vpow.pop %v4127
        %v4129 = vmul.f32 %v4069, 1.442695
        %v4130 = vpow.pop %v4129
        %v4131 = vmul.f32 %v4070, 1.442695
        %v4132 = vpow.pop %v4131
        %v4133 = vmul.f32 %v4071, 1.442695
        %v4134 = vpow.pop %v4133
        %v4135 = vmul.f32 %v4072, 1.442695
        %v4136 = vpow.pop %v4135
        %v4137 = vmul.f32 %v3977, %v4074
        %v4138 = vmul.f32 %v3978, %v4076
        %v4139 = vmul.f32 %v3979, %v4078
        %v4140 = vmul.f32 %v3980, %v4080
        %v4141 = vmul.f32 %v3981, %v4082
        %v4142 = vmul.f32 %v3982, %v4084
        %v4143 = vmul.f32 %v3983, %v4086
        %v4144 = vmul.f32 %v3984, %v4088
        %v4145 = vmul.f32 %v3985, %v4090
        %v4146 = vmul.f32 %v3986, %v4092
        %v4147 = vmul.f32 %v3987, %v4094
        %v4148 = vmul.f32 %v3988, %v4096
        %v4149 = vmul.f32 %v3989, %v4098
        %v4150 = vmul.f32 %v3990, %v4100
        %v4151 = vmul.f32 %v3991, %v4102
        %v4152 = vmul.f32 %v3992, %v4104
        %v4153 = vmul.f32 %v3993, %v4106
        %v4154 = vmul.f32 %v3994, %v4108
        %v4155 = vmul.f32 %v3995, %v4110
        %v4156 = vmul.f32 %v3996, %v4112
        %v4157 = vmul.f32 %v3997, %v4114
        %v4158 = vmul.f32 %v3998, %v4116
        %v4159 = vmul.f32 %v3999, %v4118
        %v4160 = vmul.f32 %v4000, %v4120
        %v4161 = vmul.f32 %v4001, %v4122
        %v4162 = vmul.f32 %v4002, %v4124
        %v4163 = vmul.f32 %v4003, %v4126
        %v4164 = vmul.f32 %v4004, %v4128
        %v4165 = vmul.f32 %v4005, %v4130
        %v4166 = vmul.f32 %v4006, %v4132
        %v4167 = vmul.f32 %v4007, %v4134
        %v4168 = vmul.f32 %v4008, %v4136
        %v4169 = vsub.f32 1.0, %v4137
        %v4170 = vsub.f32 1.0, %v4138
        %v4171 = vsub.f32 1.0, %v4139
        %v4172 = vsub.f32 1.0, %v4140
        %v4173 = vsub.f32 1.0, %v4141
        %v4174 = vsub.f32 1.0, %v4142
        %v4175 = vsub.f32 1.0, %v4143
        %v4176 = vsub.f32 1.0, %v4144
        %v4177 = vsub.f32 1.0, %v4145
        %v4178 = vsub.f32 1.0, %v4146
        %v4179 = vsub.f32 1.0, %v4147
        %v4180 = vsub.f32 1.0, %v4148
        %v4181 = vsub.f32 1.0, %v4149
        %v4182 = vsub.f32 1.0, %v4150
        %v4183 = vsub.f32 1.0, %v4151
        %v4184 = vsub.f32 1.0, %v4152
        %v4185 = vsub.f32 1.0, %v4153
        %v4186 = vsub.f32 1.0, %v4154
        %v4187 = vsub.f32 1.0, %v4155
        %v4188 = vsub.f32 1.0, %v4156
        %v4189 = vsub.f32 1.0, %v4157
        %v4190 = vsub.f32 1.0, %v4158
        %v4191 = vsub.f32 1.0, %v4159
        %v4192 = vsub.f32 1.0, %v4160
        %v4193 = vsub.f32 1.0, %v4161
        %v4194 = vsub.f32 1.0, %v4162
        %v4195 = vsub.f32 1.0, %v4163
        %v4196 = vsub.f32 1.0, %v4164
        %v4197 = vsub.f32 1.0, %v4165
        %v4198 = vsub.f32 1.0, %v4166
        %v4199 = vsub.f32 1.0, %v4167
        %v4200 = vsub.f32 1.0, %v4168
        %vm4201 = vcmp.ge.f32.partialorder %v3529, 0.0
        %vm4202 = vcmp.ge.f32.partialorder %v3530, 0.0
        %vm4203 = vcmp.ge.f32.partialorder %v3531, 0.0
        %vm4204 = vcmp.ge.f32.partialorder %v3532, 0.0
        %vm4205 = vcmp.ge.f32.partialorder %v3533, 0.0
        %vm4206 = vcmp.ge.f32.partialorder %v3534, 0.0
        %vm4207 = vcmp.ge.f32.partialorder %v3535, 0.0
        %vm4208 = vcmp.ge.f32.partialorder %v3536, 0.0
        %vm4209 = vcmp.ge.f32.partialorder %v3537, 0.0
        %vm4210 = vcmp.ge.f32.partialorder %v3538, 0.0
        %vm4211 = vcmp.ge.f32.partialorder %v3539, 0.0
        %vm4212 = vcmp.ge.f32.partialorder %v3540, 0.0
        %vm4213 = vcmp.ge.f32.partialorder %v3541, 0.0
        %vm4214 = vcmp.ge.f32.partialorder %v3542, 0.0
        %vm4215 = vcmp.ge.f32.partialorder %v3543, 0.0
        %vm4216 = vcmp.ge.f32.partialorder %v3544, 0.0
        %vm4217 = vcmp.ge.f32.partialorder %v3545, 0.0
        %vm4218 = vcmp.ge.f32.partialorder %v3546, 0.0
        %vm4219 = vcmp.ge.f32.partialorder %v3547, 0.0
        %vm4220 = vcmp.ge.f32.partialorder %v3548, 0.0
        %vm4221 = vcmp.ge.f32.partialorder %v3549, 0.0
        %vm4222 = vcmp.ge.f32.partialorder %v3550, 0.0
        %vm4223 = vcmp.ge.f32.partialorder %v3551, 0.0
        %vm4224 = vcmp.ge.f32.partialorder %v3552, 0.0
        %vm4225 = vcmp.ge.f32.partialorder %v3553, 0.0
        %vm4226 = vcmp.ge.f32.partialorder %v3554, 0.0
        %vm4227 = vcmp.ge.f32.partialorder %v3555, 0.0
        %vm4228 = vcmp.ge.f32.partialorder %v3556, 0.0
        %vm4229 = vcmp.ge.f32.partialorder %v3557, 0.0
        %vm4230 = vcmp.ge.f32.partialorder %v3558, 0.0
        %vm4231 = vcmp.ge.f32.partialorder %v3559, 0.0
        %vm4232 = vcmp.ge.f32.partialorder %v3560, 0.0
        %v4233 = vsub.f32 0.0, %v4169
        %v4234 = vsub.f32 0.0, %v4170
        %v4235 = vsub.f32 0.0, %v4171
        %v4236 = vsub.f32 0.0, %v4172
        %v4237 = vsub.f32 0.0, %v4173
        %v4238 = vsub.f32 0.0, %v4174
        %v4239 = vsub.f32 0.0, %v4175
        %v4240 = vsub.f32 0.0, %v4176
        %v4241 = vsub.f32 0.0, %v4177
        %v4242 = vsub.f32 0.0, %v4178
        %v4243 = vsub.f32 0.0, %v4179
        %v4244 = vsub.f32 0.0, %v4180
        %v4245 = vsub.f32 0.0, %v4181
        %v4246 = vsub.f32 0.0, %v4182
        %v4247 = vsub.f32 0.0, %v4183
        %v4248 = vsub.f32 0.0, %v4184
        %v4249 = vsub.f32 0.0, %v4185
        %v4250 = vsub.f32 0.0, %v4186
        %v4251 = vsub.f32 0.0, %v4187
        %v4252 = vsub.f32 0.0, %v4188
        %v4253 = vsub.f32 0.0, %v4189
        %v4254 = vsub.f32 0.0, %v4190
        %v4255 = vsub.f32 0.0, %v4191
        %v4256 = vsub.f32 0.0, %v4192
        %v4257 = vsub.f32 0.0, %v4193
        %v4258 = vsub.f32 0.0, %v4194
        %v4259 = vsub.f32 0.0, %v4195
        %v4260 = vsub.f32 0.0, %v4196
        %v4261 = vsub.f32 0.0, %v4197
        %v4262 = vsub.f32 0.0, %v4198
        %v4263 = vsub.f32 0.0, %v4199
        %v4264 = vsub.f32 0.0, %v4200
        %v4265 = vsel %vm4201, %v4169, %v4233
        %v4266 = vsel %vm4202, %v4170, %v4234
        %v4267 = vsel %vm4203, %v4171, %v4235
        %v4268 = vsel %vm4204, %v4172, %v4236
        %v4269 = vsel %vm4205, %v4173, %v4237
        %v4270 = vsel %vm4206, %v4174, %v4238
        %v4271 = vsel %vm4207, %v4175, %v4239
        %v4272 = vsel %vm4208, %v4176, %v4240
        %v4273 = vsel %vm4209, %v4177, %v4241
        %v4274 = vsel %vm4210, %v4178, %v4242
        %v4275 = vsel %vm4211, %v4179, %v4243
        %v4276 = vsel %vm4212, %v4180, %v4244
        %v4277 = vsel %vm4213, %v4181, %v4245
        %v4278 = vsel %vm4214, %v4182, %v4246
        %v4279 = vsel %vm4215, %v4183, %v4247
        %v4280 = vsel %vm4216, %v4184, %v4248
        %v4281 = vsel %vm4217, %v4185, %v4249
        %v4282 = vsel %vm4218, %v4186, %v4250
        %v4283 = vsel %vm4219, %v4187, %v4251
        %v4284 = vsel %vm4220, %v4188, %v4252
        %v4285 = vsel %vm4221, %v4189, %v4253
        %v4286 = vsel %vm4222, %v4190, %v4254
        %v4287 = vsel %vm4223, %v4191, %v4255
        %v4288 = vsel %vm4224, %v4192, %v4256
        %v4289 = vsel %vm4225, %v4193, %v4257
        %v4290 = vsel %vm4226, %v4194, %v4258
        %v4291 = vsel %vm4227, %v4195, %v4259
        %v4292 = vsel %vm4228, %v4196, %v4260
        %v4293 = vsel %vm4229, %v4197, %v4261
        %v4294 = vsel %vm4230, %v4198, %v4262
        %v4295 = vsel %vm4231, %v4199, %v4263
        %v4296 = vsel %vm4232, %v4200, %v4264
        %v4297 = vadd.f32 %v4265, 1.0
        %v4298 = vadd.f32 %v4266, 1.0
        %v4299 = vadd.f32 %v4267, 1.0
        %v4300 = vadd.f32 %v4268, 1.0
        %v4301 = vadd.f32 %v4269, 1.0
        %v4302 = vadd.f32 %v4270, 1.0
        %v4303 = vadd.f32 %v4271, 1.0
        %v4304 = vadd.f32 %v4272, 1.0
        %v4305 = vadd.f32 %v4273, 1.0
        %v4306 = vadd.f32 %v4274, 1.0
        %v4307 = vadd.f32 %v4275, 1.0
        %v4308 = vadd.f32 %v4276, 1.0
        %v4309 = vadd.f32 %v4277, 1.0
        %v4310 = vadd.f32 %v4278, 1.0
        %v4311 = vadd.f32 %v4279, 1.0
        %v4312 = vadd.f32 %v4280, 1.0
        %v4313 = vadd.f32 %v4281, 1.0
        %v4314 = vadd.f32 %v4282, 1.0
        %v4315 = vadd.f32 %v4283, 1.0
        %v4316 = vadd.f32 %v4284, 1.0
        %v4317 = vadd.f32 %v4285, 1.0
        %v4318 = vadd.f32 %v4286, 1.0
        %v4319 = vadd.f32 %v4287, 1.0
        %v4320 = vadd.f32 %v4288, 1.0
        %v4321 = vadd.f32 %v4289, 1.0
        %v4322 = vadd.f32 %v4290, 1.0
        %v4323 = vadd.f32 %v4291, 1.0
        %v4324 = vadd.f32 %v4292, 1.0
        %v4325 = vadd.f32 %v4293, 1.0
        %v4326 = vadd.f32 %v4294, 1.0
        %v4327 = vadd.f32 %v4295, 1.0
        %v4328 = vadd.f32 %v4296, 1.0
        %v4329 = vmul.f32 %v3497, %v4297
        %v4330 = vmul.f32 %v3498, %v4298
        %v4331 = vmul.f32 %v3499, %v4299
        %v4332 = vmul.f32 %v3500, %v4300
        %v4333 = vmul.f32 %v3501, %v4301
        %v4334 = vmul.f32 %v3502, %v4302
        %v4335 = vmul.f32 %v3503, %v4303
        %v4336 = vmul.f32 %v3504, %v4304
        %v4337 = vmul.f32 %v3505, %v4305
        %v4338 = vmul.f32 %v3506, %v4306
        %v4339 = vmul.f32 %v3507, %v4307
        %v4340 = vmul.f32 %v3508, %v4308
        %v4341 = vmul.f32 %v3509, %v4309
        %v4342 = vmul.f32 %v3510, %v4310
        %v4343 = vmul.f32 %v3511, %v4311
        %v4344 = vmul.f32 %v3512, %v4312
        %v4345 = vmul.f32 %v3513, %v4313
        %v4346 = vmul.f32 %v3514, %v4314
        %v4347 = vmul.f32 %v3515, %v4315
        %v4348 = vmul.f32 %v3516, %v4316
        %v4349 = vmul.f32 %v3517, %v4317
        %v4350 = vmul.f32 %v3518, %v4318
        %v4351 = vmul.f32 %v3519, %v4319
        %v4352 = vmul.f32 %v3520, %v4320
        %v4353 = vmul.f32 %v3521, %v4321
        %v4354 = vmul.f32 %v3522, %v4322
        %v4355 = vmul.f32 %v3523, %v4323
        %v4356 = vmul.f32 %v3524, %v4324
        %v4357 = vmul.f32 %v3525, %v4325
        %v4358 = vmul.f32 %v3526, %v4326
        %v4359 = vmul.f32 %v3527, %v4327
        %v4360 = vmul.f32 %v3528, %v4328
        %v4361 = vpack.c.bf16 %v4330, %v4329
        %v4362 = vpack.c.bf16 %v4332, %v4331
        %v4363 = vpack.c.bf16 %v4334, %v4333
        %v4364 = vpack.c.bf16 %v4336, %v4335
        %v4365 = vpack.c.bf16 %v4338, %v4337
        %v4366 = vpack.c.bf16 %v4340, %v4339
        %v4367 = vpack.c.bf16 %v4342, %v4341
        %v4368 = vpack.c.bf16 %v4344, %v4343
        %v4369 = vpack.c.bf16 %v4346, %v4345
        %v4370 = vpack.c.bf16 %v4348, %v4347
        %v4371 = vpack.c.bf16 %v4350, %v4349
        %v4372 = vpack.c.bf16 %v4352, %v4351
        %v4373 = vpack.c.bf16 %v4354, %v4353
        %v4374 = vpack.c.bf16 %v4356, %v4355
        %v4375 = vpack.c.bf16 %v4358, %v4357
        %v4376 = vpack.c.bf16 %v4360, %v4359
        %v4378 = vlaneseq
        %v4379 = vshrl.u32 %v4378, 7
        %v4380 = vsub.s32 0, %v4379
        %v4381 = vrot.slane %v1061, %v4380
        %v4399 = vunpack.c.l.b16 %v1045
        %v4400 = vunpack.c.l.b16 %v1046
        %v4401 = vunpack.c.l.b16 %v1047
        %v4402 = vunpack.c.l.b16 %v1048
        %v4403 = vunpack.c.l.b16 %v1049
        %v4404 = vunpack.c.l.b16 %v1050
        %v4405 = vunpack.c.l.b16 %v1051
        %v4406 = vunpack.c.l.b16 %v1052
        %v4407 = vunpack.c.l.b16 %v1053
        %v4408 = vunpack.c.l.b16 %v1054
        %v4409 = vunpack.c.l.b16 %v1055
        %v4410 = vunpack.c.l.b16 %v1056
        %v4411 = vunpack.c.l.b16 %v1057
        %v4412 = vunpack.c.l.b16 %v1058
        %v4413 = vunpack.c.l.b16 %v1059
        %v4414 = vunpack.c.l.b16 %v1060
        %v4415 = vpack.c.b16 %v4400, %v4399
        %v4416 = vpack.c.b16 %v4402, %v4401
        %v4417 = vpack.c.b16 %v4404, %v4403
        %v4418 = vpack.c.b16 %v4406, %v4405
        %v4419 = vpack.c.b16 %v4408, %v4407
        %v4420 = vpack.c.b16 %v4410, %v4409
        %v4421 = vpack.c.b16 %v4412, %v4411
        %v4422 = vpack.c.b16 %v4414, %v4413
        %4431 = vmatprep.subr.bf16.mxu0 0
        %4432 = vmatpush1.bf16.msra.mxu0 %v4415
        %4433 = vmatprep.subr.bf16.mxu0 0
        %4434 = vmatpush1.bf16.msra.mxu0 %v4416
        %4435 = vmatprep.subr.bf16.mxu0 0
        %4436 = vmatpush1.bf16.msra.mxu0 %v4417
        %4437 = vmatprep.subr.bf16.mxu0 0
        %4438 = vmatpush1.bf16.msra.mxu0 %v4418
        %4439 = vmatprep.subr.bf16.mxu0 0
        %4440 = vmatpush1.bf16.msra.mxu0 %v4419
        %4441 = vmatprep.subr.bf16.mxu0 0
        %4442 = vmatpush1.bf16.msra.mxu0 %v4420
        %4443 = vmatprep.subr.bf16.mxu0 0
        %4444 = vmatpush1.bf16.msra.mxu0 %v4421
        %4445 = vmatprep.subr.bf16.mxu0 0
        %4446 = vmatpush1.bf16.msra.mxu0 %v4422
        %4447 = vmatprep.subr.bf16.mxu0 0
        %4448 = vmatpush1.bf16.msra.mxu0 0
        %4449 = vmatprep.subr.bf16.mxu0 0
        %4450 = vmatpush1.bf16.msra.mxu0 0
        %4451 = vmatprep.subr.bf16.mxu0 0
        %4452 = vmatpush1.bf16.msra.mxu0 0
        %4453 = vmatprep.subr.bf16.mxu0 0
        %4454 = vmatpush1.bf16.msra.mxu0 0
        %4455 = vmatprep.subr.bf16.mxu0 0
        %4456 = vmatpush1.bf16.msra.mxu0 0
        %4457 = vmatprep.subr.bf16.mxu0 0
        %4458 = vmatpush1.bf16.msra.mxu0 0
        %4459 = vmatprep.subr.bf16.mxu0 0
        %4460 = vmatpush1.bf16.msra.mxu0 0
        %4461 = vmatprep.subr.bf16.mxu0 0
        %4462 = vmatpush1.bf16.msra.mxu0 0
        %4463 = vmatprep.mubr.bf16.mxu0 0
        %4464 = vmatmul.mubr.bf16.gmra.mrb[0].mxu0 %v4361
        %v4465 = vpop.f32.mrb[0].mxu0
        %v4466 = vadd.f32 %v4381, %v4465
        %v4467 = vpop.f32.mrb[0].mxu0
        %v4468 = vpop.f32.mrb[0].mxu0
        %v4469 = vadd.f32 %v4381, %v4468
        %v4470 = vpop.f32.mrb[0].mxu0
        %4471 = vmatprep.mubr.bf16.mxu0 0
        %4472 = vmatmul.mubr.bf16.gmra.mrb[0].mxu0 %v4362
        %v4473 = vpop.f32.mrb[0].mxu0
        %v4474 = vadd.f32 %v4381, %v4473
        %v4475 = vpop.f32.mrb[0].mxu0
        %v4476 = vpop.f32.mrb[0].mxu0
        %v4477 = vadd.f32 %v4381, %v4476
        %v4478 = vpop.f32.mrb[0].mxu0
        %4479 = vmatprep.mubr.bf16.mxu0 0
        %4480 = vmatmul.mubr.bf16.gmra.mrb[0].mxu0 %v4363
        %v4481 = vpop.f32.mrb[0].mxu0
        %v4482 = vadd.f32 %v4381, %v4481
        %v4483 = vpop.f32.mrb[0].mxu0
        %v4484 = vpop.f32.mrb[0].mxu0
        %v4485 = vadd.f32 %v4381, %v4484
        %v4486 = vpop.f32.mrb[0].mxu0
        %4487 = vmatprep.mubr.bf16.mxu0 0
        %4488 = vmatmul.mubr.bf16.gmra.mrb[0].mxu0 %v4364
        %v4489 = vpop.f32.mrb[0].mxu0
        %v4490 = vadd.f32 %v4381, %v4489
        %v4491 = vpop.f32.mrb[0].mxu0
        %v4492 = vpop.f32.mrb[0].mxu0
        %v4493 = vadd.f32 %v4381, %v4492
        %v4494 = vpop.f32.mrb[0].mxu0
        %4495 = vmatprep.mubr.bf16.mxu0 0
        %4496 = vmatmul.mubr.bf16.gmra.mrb[0].mxu0 %v4365
        %v4497 = vpop.f32.mrb[0].mxu0
        %v4498 = vadd.f32 %v4381, %v4497
        %v4499 = vpop.f32.mrb[0].mxu0
        %v4500 = vpop.f32.mrb[0].mxu0
        %v4501 = vadd.f32 %v4381, %v4500
        %v4502 = vpop.f32.mrb[0].mxu0
        %4503 = vmatprep.mubr.bf16.mxu0 0
        %4504 = vmatmul.mubr.bf16.gmra.mrb[0].mxu0 %v4366
        %v4505 = vpop.f32.mrb[0].mxu0
        %v4506 = vadd.f32 %v4381, %v4505
        %v4507 = vpop.f32.mrb[0].mxu0
        %v4508 = vpop.f32.mrb[0].mxu0
        %v4509 = vadd.f32 %v4381, %v4508
        %v4510 = vpop.f32.mrb[0].mxu0
        %4511 = vmatprep.mubr.bf16.mxu0 0
        %4512 = vmatmul.mubr.bf16.gmra.mrb[0].mxu0 %v4367
        %v4513 = vpop.f32.mrb[0].mxu0
        %v4514 = vadd.f32 %v4381, %v4513
        %v4515 = vpop.f32.mrb[0].mxu0
        %v4516 = vpop.f32.mrb[0].mxu0
        %v4517 = vadd.f32 %v4381, %v4516
        %v4518 = vpop.f32.mrb[0].mxu0
        %4519 = vmatprep.mubr.bf16.mxu0 0
        %4520 = vmatmul.mubr.bf16.gmra.mrb[0].mxu0 %v4368
        %v4521 = vpop.f32.mrb[0].mxu0
        %v4522 = vadd.f32 %v4381, %v4521
        %v4523 = vpop.f32.mrb[0].mxu0
        %v4524 = vpop.f32.mrb[0].mxu0
        %v4525 = vadd.f32 %v4381, %v4524
        %v4526 = vpop.f32.mrb[0].mxu0
        %4527 = vmatprep.mubr.bf16.mxu0 0
        %4528 = vmatmul.mubr.bf16.gmra.mrb[0].mxu0 %v4369
        %v4529 = vpop.f32.mrb[0].mxu0
        %v4530 = vadd.f32 %v4381, %v4529
        %v4531 = vpop.f32.mrb[0].mxu0
        %v4532 = vpop.f32.mrb[0].mxu0
        %v4533 = vadd.f32 %v4381, %v4532
        %v4534 = vpop.f32.mrb[0].mxu0
        %4535 = vmatprep.mubr.bf16.mxu0 0
        %4536 = vmatmul.mubr.bf16.gmra.mrb[0].mxu0 %v4370
        %v4537 = vpop.f32.mrb[0].mxu0
        %v4538 = vadd.f32 %v4381, %v4537
        %v4539 = vpop.f32.mrb[0].mxu0
        %v4540 = vpop.f32.mrb[0].mxu0
        %v4541 = vadd.f32 %v4381, %v4540
        %v4542 = vpop.f32.mrb[0].mxu0
        %4543 = vmatprep.mubr.bf16.mxu0 0
        %4544 = vmatmul.mubr.bf16.gmra.mrb[0].mxu0 %v4371
        %v4545 = vpop.f32.mrb[0].mxu0
        %v4546 = vadd.f32 %v4381, %v4545
        %v4547 = vpop.f32.mrb[0].mxu0
        %v4548 = vpop.f32.mrb[0].mxu0
        %v4549 = vadd.f32 %v4381, %v4548
        %v4550 = vpop.f32.mrb[0].mxu0
        %4551 = vmatprep.mubr.bf16.mxu0 0
        %4552 = vmatmul.mubr.bf16.gmra.mrb[0].mxu0 %v4372
        %v4553 = vpop.f32.mrb[0].mxu0
        %v4554 = vadd.f32 %v4381, %v4553
        %v4555 = vpop.f32.mrb[0].mxu0
        %v4556 = vpop.f32.mrb[0].mxu0
        %v4557 = vadd.f32 %v4381, %v4556
        %v4558 = vpop.f32.mrb[0].mxu0
        %4559 = vmatprep.mubr.bf16.mxu0 0
        %4560 = vmatmul.mubr.bf16.gmra.mrb[0].mxu0 %v4373
        %v4561 = vpop.f32.mrb[0].mxu0
        %v4562 = vadd.f32 %v4381, %v4561
        %v4563 = vpop.f32.mrb[0].mxu0
        %v4564 = vpop.f32.mrb[0].mxu0
        %v4565 = vadd.f32 %v4381, %v4564
        %v4566 = vpop.f32.mrb[0].mxu0
        %4567 = vmatprep.mubr.bf16.mxu0 0
        %4568 = vmatmul.mubr.bf16.gmra.mrb[0].mxu0 %v4374
        %v4569 = vpop.f32.mrb[0].mxu0
        %v4570 = vadd.f32 %v4381, %v4569
        %v4571 = vpop.f32.mrb[0].mxu0
        %v4572 = vpop.f32.mrb[0].mxu0
        %v4573 = vadd.f32 %v4381, %v4572
        %v4574 = vpop.f32.mrb[0].mxu0
        %4575 = vmatprep.mubr.bf16.mxu0 0
        %4576 = vmatmul.mubr.bf16.gmra.mrb[0].mxu0 %v4375
        %v4577 = vpop.f32.mrb[0].mxu0
        %v4578 = vadd.f32 %v4381, %v4577
        %v4579 = vpop.f32.mrb[0].mxu0
        %v4580 = vpop.f32.mrb[0].mxu0
        %v4581 = vadd.f32 %v4381, %v4580
        %v4582 = vpop.f32.mrb[0].mxu0
        %4583 = vmatprep.mubr.bf16.mxu0 0
        %4584 = vmatmul.mubr.bf16.gmra.mrb[0].mxu0 %v4376
        %v4585 = vpop.f32.mrb[0].mxu0
        %v4586 = vadd.f32 %v4381, %v4585
        %v4587 = vpop.f32.mrb[0].mxu0
        %v4588 = vpop.f32.mrb[0].mxu0
        %v4589 = vadd.f32 %v4381, %v4588
        %v4590 = vpop.f32.mrb[0].mxu0
        %4591 = vdwg.mxu0
        %v4593 = vlaneseq
        %v4594 = vshrl.u32 %v4593, 7
        %v4595 = vsub.s32 0, %v4594
        %v4596 = vrot.slane %v1062, %v4595
        %v4598 = vmul.f32 %v4466, %v4596
        %v4599 = vmul.f32 %v4469, %v4596
        %v4600 = vmul.f32 %v4474, %v4596
        %v4601 = vmul.f32 %v4477, %v4596
        %v4602 = vmul.f32 %v4482, %v4596
        %v4603 = vmul.f32 %v4485, %v4596
        %v4604 = vmul.f32 %v4490, %v4596
        %v4605 = vmul.f32 %v4493, %v4596
        %v4606 = vmul.f32 %v4498, %v4596
        %v4607 = vmul.f32 %v4501, %v4596
        %v4608 = vmul.f32 %v4506, %v4596
        %v4609 = vmul.f32 %v4509, %v4596
        %v4610 = vmul.f32 %v4514, %v4596
        %v4611 = vmul.f32 %v4517, %v4596
        %v4612 = vmul.f32 %v4522, %v4596
        %v4613 = vmul.f32 %v4525, %v4596
        %v4614 = vmul.f32 %v4530, %v4596
        %v4615 = vmul.f32 %v4533, %v4596
        %v4616 = vmul.f32 %v4538, %v4596
        %v4617 = vmul.f32 %v4541, %v4596
        %v4618 = vmul.f32 %v4546, %v4596
        %v4619 = vmul.f32 %v4549, %v4596
        %v4620 = vmul.f32 %v4554, %v4596
        %v4621 = vmul.f32 %v4557, %v4596
        %v4622 = vmul.f32 %v4562, %v4596
        %v4623 = vmul.f32 %v4565, %v4596
        %v4624 = vmul.f32 %v4570, %v4596
        %v4625 = vmul.f32 %v4573, %v4596
        %v4626 = vmul.f32 %v4578, %v4596
        %v4627 = vmul.f32 %v4581, %v4596
        %v4628 = vmul.f32 %v4586, %v4596
        %v4629 = vmul.f32 %v4589, %v4596
        %s4630 = smul.u32 0, 16
        %s4631 = scalar_lea.vmem %s383, %s4630 [#allocation4]
        %v4632 = vld [vmem:[%s4631] sm:$0xff]
        %v4633 = vld [vmem:[%s4631 + $0x8] sm:$0xff]
        %v4634 = vld [vmem:[%s4631 + $0x10] sm:$0xff]
        %v4635 = vld [vmem:[%s4631 + $0x18] sm:$0xff]
        %v4636 = vld [vmem:[%s4631 + $0x20] sm:$0xff]
        %v4637 = vld [vmem:[%s4631 + $0x28] sm:$0xff]
        %v4638 = vld [vmem:[%s4631 + $0x30] sm:$0xff]
        %v4639 = vld [vmem:[%s4631 + $0x38] sm:$0xff]
        %v4640 = vld [vmem:[%s4631 + $0x40] sm:$0xff]
        %v4641 = vld [vmem:[%s4631 + $0x48] sm:$0xff]
        %v4642 = vld [vmem:[%s4631 + $0x50] sm:$0xff]
        %v4643 = vld [vmem:[%s4631 + $0x58] sm:$0xff]
        %v4644 = vld [vmem:[%s4631 + $0x60] sm:$0xff]
        %v4645 = vld [vmem:[%s4631 + $0x68] sm:$0xff]
        %v4646 = vld [vmem:[%s4631 + $0x70] sm:$0xff]
        %v4647 = vld [vmem:[%s4631 + $0x78] sm:$0xff]
        %v4648 = vld [vmem:[%s4631 + $0x80] sm:$0xff]
        %v4649 = vld [vmem:[%s4631 + $0x88] sm:$0xff]
        %v4650 = vld [vmem:[%s4631 + $0x90] sm:$0xff]
        %v4651 = vld [vmem:[%s4631 + $0x98] sm:$0xff]
        %v4652 = vld [vmem:[%s4631 + $0xa0] sm:$0xff]
        %v4653 = vld [vmem:[%s4631 + $0xa8] sm:$0xff]
        %v4654 = vld [vmem:[%s4631 + $0xb0] sm:$0xff]
        %v4655 = vld [vmem:[%s4631 + $0xb8] sm:$0xff]
        %v4656 = vld [vmem:[%s4631 + $0xc0] sm:$0xff]
        %v4657 = vld [vmem:[%s4631 + $0xc8] sm:$0xff]
        %v4658 = vld [vmem:[%s4631 + $0xd0] sm:$0xff]
        %v4659 = vld [vmem:[%s4631 + $0xd8] sm:$0xff]
        %v4660 = vld [vmem:[%s4631 + $0xe0] sm:$0xff]
        %v4661 = vld [vmem:[%s4631 + $0xe8] sm:$0xff]
        %v4662 = vld [vmem:[%s4631 + $0xf0] sm:$0xff]
        %v4663 = vld [vmem:[%s4631 + $0xf8] sm:$0xff]
        %v4664 = vadd.f32 %v4632, %v4598
        %v4665 = vadd.f32 %v4633, %v4599
        %v4666 = vadd.f32 %v4634, %v4600
        %v4667 = vadd.f32 %v4635, %v4601
        %v4668 = vadd.f32 %v4636, %v4602
        %v4669 = vadd.f32 %v4637, %v4603
        %v4670 = vadd.f32 %v4638, %v4604
        %v4671 = vadd.f32 %v4639, %v4605
        %v4672 = vadd.f32 %v4640, %v4606
        %v4673 = vadd.f32 %v4641, %v4607
        %v4674 = vadd.f32 %v4642, %v4608
        %v4675 = vadd.f32 %v4643, %v4609
        %v4676 = vadd.f32 %v4644, %v4610
        %v4677 = vadd.f32 %v4645, %v4611
        %v4678 = vadd.f32 %v4646, %v4612
        %v4679 = vadd.f32 %v4647, %v4613
        %v4680 = vadd.f32 %v4648, %v4614
        %v4681 = vadd.f32 %v4649, %v4615
        %v4682 = vadd.f32 %v4650, %v4616
        %v4683 = vadd.f32 %v4651, %v4617
        %v4684 = vadd.f32 %v4652, %v4618
        %v4685 = vadd.f32 %v4653, %v4619
        %v4686 = vadd.f32 %v4654, %v4620
        %v4687 = vadd.f32 %v4655, %v4621
        %v4688 = vadd.f32 %v4656, %v4622
        %v4689 = vadd.f32 %v4657, %v4623
        %v4690 = vadd.f32 %v4658, %v4624
        %v4691 = vadd.f32 %v4659, %v4625
        %v4692 = vadd.f32 %v4660, %v4626
        %v4693 = vadd.f32 %v4661, %v4627
        %v4694 = vadd.f32 %v4662, %v4628
        %v4695 = vadd.f32 %v4663, %v4629
        %s4696 = scalar_lea.vmem %s435, %s4630 [#allocation13]
        %4697 = vst [vmem:[%s4696] sm:$0xff] %v4664
        %4698 = vst [vmem:[%s4696 + $0x8] sm:$0xff] %v4665
        %4699 = vst [vmem:[%s4696 + $0x10] sm:$0xff] %v4666
        %4700 = vst [vmem:[%s4696 + $0x18] sm:$0xff] %v4667
        %4701 = vst [vmem:[%s4696 + $0x20] sm:$0xff] %v4668
        %4702 = vst [vmem:[%s4696 + $0x28] sm:$0xff] %v4669
        %4703 = vst [vmem:[%s4696 + $0x30] sm:$0xff] %v4670
        %4704 = vst [vmem:[%s4696 + $0x38] sm:$0xff] %v4671
        %4705 = vst [vmem:[%s4696 + $0x40] sm:$0xff] %v4672
        %4706 = vst [vmem:[%s4696 + $0x48] sm:$0xff] %v4673
        %4707 = vst [vmem:[%s4696 + $0x50] sm:$0xff] %v4674
        %4708 = vst [vmem:[%s4696 + $0x58] sm:$0xff] %v4675
        %4709 = vst [vmem:[%s4696 + $0x60] sm:$0xff] %v4676
        %4710 = vst [vmem:[%s4696 + $0x68] sm:$0xff] %v4677
        %4711 = vst [vmem:[%s4696 + $0x70] sm:$0xff] %v4678
        %4712 = vst [vmem:[%s4696 + $0x78] sm:$0xff] %v4679
        %4713 = vst [vmem:[%s4696 + $0x80] sm:$0xff] %v4680
        %4714 = vst [vmem:[%s4696 + $0x88] sm:$0xff] %v4681
        %4715 = vst [vmem:[%s4696 + $0x90] sm:$0xff] %v4682
        %4716 = vst [vmem:[%s4696 + $0x98] sm:$0xff] %v4683
        %4717 = vst [vmem:[%s4696 + $0xa0] sm:$0xff] %v4684
        %4718 = vst [vmem:[%s4696 + $0xa8] sm:$0xff] %v4685
        %4719 = vst [vmem:[%s4696 + $0xb0] sm:$0xff] %v4686
        %4720 = vst [vmem:[%s4696 + $0xb8] sm:$0xff] %v4687
        %4721 = vst [vmem:[%s4696 + $0xc0] sm:$0xff] %v4688
        %4722 = vst [vmem:[%s4696 + $0xc8] sm:$0xff] %v4689
        %4723 = vst [vmem:[%s4696 + $0xd0] sm:$0xff] %v4690
        %4724 = vst [vmem:[%s4696 + $0xd8] sm:$0xff] %v4691
        %4725 = vst [vmem:[%s4696 + $0xe0] sm:$0xff] %v4692
        %4726 = vst [vmem:[%s4696 + $0xe8] sm:$0xff] %v4693
        %4727 = vst [vmem:[%s4696 + $0xf0] sm:$0xff] %v4694
        %4728 = vst [vmem:[%s4696 + $0xf8] sm:$0xff] %v4695
        %s4729 = sand.u32 %s252, 1
        %s4730 = scalar_lea.sflag [#allocation6], %s4729
        %s4731 = sand.u32 %s252, 1
        %s4732 = smul.addr %s4731, 256
        %s4733 = scalar_lea.vmem [#allocation13], %s4732
        // Predicated region
        $region81: #{tpu_custom_call.1} parent=59 // pred_check
          %p4734 = pneg %p262
        $region82: #{tpu_custom_call.1} parent=59 // pred_check_branch
          %4736 = sbr.rel (%p4734) target = $region84
        $region83: #{tpu_custom_call.1} parent=59 // pred_region
          %s4738 = ssub.s32 4096, 4096
          %4739 = vsyncadd %s4730, %s4738
          %s4740 = smul.addr %s29, 32
          %s4741 = smul.addr %s4740, 128
          %s4742 = scalar_lea.hbm %s10, %s4741
          %s4743 = sshll.u32 %s4733, 4
          %s4744 = int_to_ptr.vmem [resolvable:$true] %s4743
          %4749 = dma.vmem_to_hbm [thread:$0]  %s4744, 4096, %s4742, %s4730, 128, 128, 8
        $region84: #{tpu_custom_call.1} parent=59 // pred_fallthru
          _
      $region60: #{tpu_custom_call.1} parent=5 // pred_fallthru
        _
      %p4750 = scmp.le.s32.totalorder 2, %s24
      // Predicated region
      $region85: #{tpu_custom_call.1} parent=5 // pred_check
        %p4751 = pneg %p4750
      $region86: #{tpu_custom_call.1} parent=5 // pred_check_branch
        %4753 = sbr.rel (%p4751) target = $region88
      $region87: #{tpu_custom_call.1} parent=5 // pred_region
        %s4754 = ssub.s32 %s24, 2
        // Predicated region
        $region89: #{tpu_custom_call.1} parent=87 // pred_check
          %p4755 = pneg %p268
        $region90: #{tpu_custom_call.1} parent=87 // pred_check_branch
          %4757 = sbr.rel (%p4755) target = $region92
        $region91: #{tpu_custom_call.1} parent=87 // pred_region
          %s4758 = sand.u32 %s253, 1
          %s4759 = scalar_lea.sflag [#allocation6], %s4758
          %s4760 = sand.u32 %s253, 1
          %s4761 = smul.addr %s4760, 256
          %s4762 = scalar_lea.vmem [#allocation13], %s4761
          %4763 = dma.done %s4759, 4096
        $region92: #{tpu_custom_call.1} parent=87 // pred_fallthru
          _
      $region88: #{tpu_custom_call.1} parent=5 // pred_fallthru
        _
    $region6: #{tpu_custom_call.1} parent=1 // loop_footer
      %s28 = sadd.s32 1, %s24
    $region7: #{tpu_custom_call.1} parent=1 // loop_footer_branch
      %23 = sbr.rel target = $region3
    $region8: #{tpu_custom_call.1} parent=1 // loop_exit
      _
    %4764 = vsyncpa [#allocation5], 1
    %s4765 = scalar_lea.sflag [#allocation5], 1
    %4766 = vsyncpa %s4765, 1
    %4767 = vsyncpa [#allocation8], 1
    %4768 = vsyncpa [#allocation11], 1
    %4769 = vsyncpa [#allocation6], 1
    %s4770 = scalar_lea.sflag [#allocation6], 1
    %4771 = vsyncpa %s4770, 1

</llo_original>
